<compile_context>
chip_gen: v6e
topology: v6e:2x2x1
jax: 0.10.0
libtpu: 0.0.40
codegen_flags: <defaults>
</compile_context>

<pallas_src>
import functools

import jax
import jax.numpy as jnp
from jax import lax
from jax.experimental import pallas as pl
from jax.experimental.pallas import tpu as pltpu


def _round_up(x, m):
    return (x + m - 1) // m * m


def _cdiv(a, b):
    return -(-a // b)


# ----------------------------------------------------------------------------
# Pallas kernel: one (batch image, row tile) block of a 4x4/s2/p1 conv.
#
#   p_ref : (Hb, Kc)        bf16  folded input rows for this tile (+ halo)
#   w_ref : (4, Kc, Cout_p) bf16  per-(dh,dw) weight slabs, VMEM resident
#   b_ref : (1, Cout_p)     f32   bias, VMEM resident
#   o_ref : (Mb, Cout_p)    out   Mb = TR*IW flattened (row, col) outputs
#
#   out[i] = act( bias + sum_{t<4} p[i + off_t] @ w[t] ),  off = {0,1,IW,IW+1}
#
# Column IW-1 of every output row is a wrap artifact; the wrapper slices it off
# (together with any padded rows / channels).
# ----------------------------------------------------------------------------
def _conv4x4_s2_kernel(p_ref, w_ref, b_ref, o_ref, *, iw, mb, apply_leaky_relu):
    acc = None
    for t, s in enumerate((0, 1, iw, iw + 1)):
        tap = p_ref[pl.ds(s, mb), :]                          # (Mb, Kc) bf16
        part = jnp.dot(tap, w_ref[t], preferred_element_type=jnp.float32)
        acc = part if acc is None else acc + part
    out = acc + b_ref[...]                                    # f32 epilogue
    if apply_leaky_relu:
        out = jnp.where(out > 0, out, 0.2 * out)              # LeakyReLU(0.2)
    o_ref[...] = out.astype(o_ref.dtype)


# ----------------------------------------------------------------------------
# Glue (plain JAX, fused by XLA): fold + tile the input, repack the weights.
# ----------------------------------------------------------------------------
def _pick_row_tile(oh, iw, kc, cout_p, out_bytes, budget=4 * 1024 * 1024):
    """Output-row tile TR (multiple of 8 unless the whole image fits)."""
    per_row = iw * max(kc * 2, cout_p * out_bytes)
    tr = max(8, (budget // per_row) // 8 * 8)
    if tr >= oh:
        return oh, 1
    return tr, _cdiv(oh, tr)


def _fold_input(x, cin_p, tr, n_rt):
    """Pad + 2x2 space-to-depth + row-tile (with halo) the NHWC input.

    Returns (N, n_rt, Hb, 4*cin_p) bf16 where row r of tile t is row
    t*TR*IW + r of the flattened (IH*IW, 4*cin_p) folded image, and
    channel index = (2*row_parity + col_parity)*cin_p + c.
    """
    N, H, W, C = x.shape
    OH, OW = H // 2, W // 2
    IH, IW = OH + 1, OW + 1
    kc = 4 * cin_p
    xp = jnp.pad(x, ((0, 0), (1, 1), (1, 1), (0, cin_p - C)))
    p = xp.reshape(N, IH, 2, IW, 2, cin_p).transpose(0, 1, 3, 2, 4, 5)
    p = p.reshape(N, IH * IW, kc)
    hb = (tr + 1) * IW + 1
    rows_needed = n_rt * tr * IW + IW + 1
    p = jnp.pad(p, ((0, 0), (0, rows_needed - IH * IW), (0, 0)))
    idx = jnp.arange(n_rt)[:, None] * (tr * IW) + jnp.arange(hb)[None, :]
    return p[:, idx, :]                                       # (N, n_rt, Hb, kc)


def _fold_weight(w_torch, cin_p, cout_p):
    """(Cout, Cin, 4, 4) -> (4, 4*cin_p, cout_p) bf16; tap index = 2*dh + dw,
    K index = (2*p + q)*cin_p + c, matching _fold_input's channel layout."""
    cout, cin, _, _ = w_torch.shape
    w = jnp.transpose(w_torch, (2, 3, 1, 0))                  # (KH, KW, Cin, Cout)
    w = jnp.pad(w, ((0, 0), (0, 0), (0, cin_p - cin), (0, cout_p - cout)))
    w = w.reshape(2, 2, 2, 2, cin_p, cout_p)                  # (dh, p, dw, q, c, co)
    w = jnp.transpose(w, (0, 2, 1, 3, 4, 5))                  # (dh, dw, p, q, c, co)
    return w.reshape(4, 4 * cin_p, cout_p).astype(jnp.bfloat16)


def _conv_layer(x_nhwc, w_torch, b, *, apply_leaky_relu, out_dtype):
    N, H, W, Cin = x_nhwc.shape
    assert H % 2 == 0 and W % 2 == 0, "even spatial sizes only"
    Cout = w_torch.shape[0]
    OH, OW = H // 2, W // 2
    IW = OW + 1

    cin_p = _round_up(Cin, 32)             # Kc = 4*cin_p -> multiple of 128
    kc = 4 * cin_p
    cout_p = _round_up(Cout, 128)          # lane-dense output stores
    out_bytes = jnp.dtype(out_dtype).itemsize

    tr, n_rt = _pick_row_tile(OH, IW, kc, cout_p, out_bytes)
    mb = tr * IW                           # flattened outputs per tile
    hb = (tr + 1) * IW + 1                 # folded-input rows per tile (halo)

    p_tiled = _fold_input(x_nhwc.astype(jnp.bfloat16), cin_p, tr, n_rt)
    w4 = _fold_weight(w_torch, cin_p, cout_p)
    bias = jnp.pad(b.astype(jnp.float32), (0, cout_p - Cout)).reshape(1, cout_p)

    cost = pl.CostEstimate(
        flops=int(2 * N * n_rt * mb * (4 * kc) * cout_p),
        transcendentals=0,
        bytes_accessed=int(
            N * n_rt * hb * kc * 2            # folded input, read once
            + 4 * kc * cout_p * 2             # resident weights, read once
            + cout_p * 4                      # bias
            + N * n_rt * mb * cout_p * out_bytes
        ),
    )

    out = pl.pallas_call(
        functools.partial(
            _conv4x4_s2_kernel, iw=IW, mb=mb, apply_leaky_relu=apply_leaky_relu
        ),
        out_shape=jax.ShapeDtypeStruct((N, n_rt, mb, cout_p), out_dtype),
        grid_spec=pltpu.PrefetchScalarGridSpec(
            num_scalar_prefetch=0,
            grid=(N, n_rt),
            in_specs=[
                # folded input tile: new block every grid step
                pl.BlockSpec((None, None, hb, kc), lambda n, t: (n, t, 0, 0)),
                # weights / bias: constant index map -> DMA'd once, resident
                pl.BlockSpec((4, kc, cout_p), lambda n, t: (0, 0, 0)),
                pl.BlockSpec((1, cout_p), lambda n, t: (0, 0)),
            ],
            out_specs=pl.BlockSpec(
                (None, None, mb, cout_p), lambda n, t: (n, t, 0, 0)
            ),
        ),
        compiler_params=pltpu.CompilerParams(
            dimension_semantics=("parallel", "parallel"),
            vmem_limit_bytes=48 * 1024 * 1024,
        ),
        cost_estimate=cost,
    )(p_tiled, w4, bias)

    # (N, n_rt, TR*IW, Cout_p) -> (N, n_rt*TR, IW, Cout_p); drop wrap column,
    # padded rows and padded output channels.
    out = out.reshape(N, n_rt * tr, IW, cout_p)
    return out[:, :OH, :OW, :Cout]


# ----------------------------------------------------------------------------
# FCDiscriminator forward
# ----------------------------------------------------------------------------
def fc_discriminator_forward(x_nchw, params):
    # NCHW -> NHWC; activations flow in bf16 (f32 accumulation in-kernel).
    x = jnp.transpose(x_nchw, (0, 2, 3, 1)).astype(jnp.bfloat16)
    x = _conv_layer(x, params["w1"], params["b1"], apply_leaky_relu=True,
                    out_dtype=jnp.bfloat16)
    x = _conv_layer(x, params["w2"], params["b2"], apply_leaky_relu=True,
                    out_dtype=jnp.bfloat16)
    x = _conv_layer(x, params["w3"], params["b3"], apply_leaky_relu=True,
                    out_dtype=jnp.bfloat16)
    x = _conv_layer(x, params["w4"], params["b4"], apply_leaky_relu=True,
                    out_dtype=jnp.bfloat16)
    x = _conv_layer(x, params["w5"], params["b5"], apply_leaky_relu=False,
                    out_dtype=jnp.float32)
    return jnp.transpose(x, (0, 3, 1, 2))  # NHWC -> NCHW


def init_params(key, num_classes, ndf):
    shapes = [
        (ndf, num_classes, 4, 4),
        (ndf * 2, ndf, 4, 4),
        (ndf * 4, ndf * 2, 4, 4),
        (ndf * 8, ndf * 4, 4, 4),
        (1, ndf * 8, 4, 4),
    ]
    params = {}
    for idx, shp in enumerate(shapes, start=1):
        key, kw, kb = jax.random.split(key, 3)
        fan_in = shp[1] * shp[2] * shp[3]
        scale = 1.0 / jnp.sqrt(fan_in)
        params[f"w{idx}"] = jax.random.uniform(
            kw, shp, jnp.float32, minval=-scale, maxval=scale
        )
        params[f"b{idx}"] = jax.random.uniform(
            kb, (shp[0],), jnp.float32, minval=-scale, maxval=scale
        )
    return params


# Pure-JAX reference with matching bf16-input / f32-accumulation precision.
def _reference_forward(x_nchw, params):
    def conv(x, w, b):
        y = lax.conv_general_dilated(
            x.astype(jnp.bfloat16),
            w.astype(jnp.bfloat16),
            window_strides=(2, 2),
            padding=((1, 1), (1, 1)),
            dimension_numbers=("NCHW", "OIHW", "NCHW"),
            preferred_element_type=jnp.float32,
        )
        return y + b.reshape(1, -1, 1, 1).astype(jnp.float32)

    def lrelu(x):
        return jnp.where(x > 0, x, 0.2 * x)

    x = lrelu(conv(x_nchw, params["w1"], params["b1"])).astype(jnp.bfloat16)
    x = lrelu(conv(x, params["w2"], params["b2"])).astype(jnp.bfloat16)
    x = lrelu(conv(x, params["w3"], params["b3"])).astype(jnp.bfloat16)
    x = lrelu(conv(x, params["w4"], params["b4"])).astype(jnp.bfloat16)
    x = conv(x, params["w5"], params["b5"])
    return x


if __name__ == "__main__":
    num_classes = 4
    ndf = 8              # small ndf (module default is 64) to keep shapes tiny
    N, H, W = 2, 32, 32  # 32 -> 16 -> 8 -> 4 -> 2 -> 1 through five stride-2 convs

    key = jax.random.PRNGKey(0)
    key, kx = jax.random.split(key)
    x = jax.random.normal(kx, (N, num_classes, H, W), jnp.float32)
    params = init_params(key, num_classes, ndf)

    fwd = jax.jit(fc_discriminator_forward)
    out = jax.block_until_ready(fwd(x, params))

    ref = jax.block_until_ready(_reference_forward(x, params))
    assert out.shape == (N, 1, H // 32, W // 32), out.shape
    assert jnp.allclose(out, ref, atol=2e-3, rtol=2e-3), "mismatch vs reference"

    print("KERNEL_OK")
</pallas_src>

<mosaic_0001>
module attributes {stable_mosaic.version = 11 : i64} {
  func.func @_conv4x4_s2_kernel(%arg0: i32, %arg1: i32, %arg2: memref<1x1x290x128xbf16, #tpu.memory_space<vmem>>, %arg3: memref<4x128x128xbf16, #tpu.memory_space<vmem>>, %arg4: memref<1x128xf32, #tpu.memory_space<vmem>>, %arg5: memref<1x1x272x128xbf16, #tpu.memory_space<vmem>>) attributes {dimension_semantics = [#tpu.dimension_semantics<parallel>, #tpu.dimension_semantics<parallel>], iteration_bounds = array<i64: 2, 1>, scalar_prefetch = 0 : i64, scratch_operands = 0 : i64, tpu.core_type = #tpu.core_type<tc>, window_params = [{transform_indices = @transform_0, window_bounds = array<i64: 1, 1, 290, 128>}, {pipeline_mode = #tpu.pipeline_mode<synchronous>, transform_indices = @transform_1, window_bounds = array<i64: 4, 128, 128>}, {pipeline_mode = #tpu.pipeline_mode<synchronous>, transform_indices = @transform_2, window_bounds = array<i64: 1, 128>}, {transform_indices = @transform_3, window_bounds = array<i64: 1, 1, 272, 128>}]} {
    %c0 = arith.constant 0 : index
    %c0_0 = arith.constant 0 : index
    %c0_1 = arith.constant 0 : index
    %c0_2 = arith.constant 0 : index
    %0 = vector.load %arg2[%c0, %c0_0, %c0_1, %c0_2] : memref<1x1x290x128xbf16, #tpu.memory_space<vmem>>, vector<1x1x272x128xbf16>
    %1 = vector.shape_cast %0 : vector<1x1x272x128xbf16> to vector<272x128xbf16>
    %c0_3 = arith.constant 0 : index
    %c0_4 = arith.constant 0 : index
    %c0_5 = arith.constant 0 : index
    %2 = vector.load %arg3[%c0_3, %c0_4, %c0_5] : memref<4x128x128xbf16, #tpu.memory_space<vmem>>, vector<1x128x128xbf16>
    %3 = vector.shape_cast %2 : vector<1x128x128xbf16> to vector<128x128xbf16>
    %cst = arith.constant dense<0.000000e+00> : vector<272x128xf32>
    %4 = tpu.matmul %1, %3, %cst {dimension_numbers = #tpu.dot_dimension_numbers<[1], [0], [0], [1], [0, 0, 1, 1], [], []>} : vector<272x128xbf16>, vector<128x128xbf16>, vector<272x128xf32> -> vector<272x128xf32>
    %c0_6 = arith.constant 0 : index
    %c0_7 = arith.constant 0 : index
    %c1 = arith.constant 1 : index
    %c0_8 = arith.constant 0 : index
    %5 = vector.load %arg2[%c0_6, %c0_7, %c1, %c0_8] : memref<1x1x290x128xbf16, #tpu.memory_space<vmem>>, vector<1x1x272x128xbf16>
    %6 = vector.shape_cast %5 : vector<1x1x272x128xbf16> to vector<272x128xbf16>
    %c1_9 = arith.constant 1 : index
    %c0_10 = arith.constant 0 : index
    %c0_11 = arith.constant 0 : index
    %7 = vector.load %arg3[%c1_9, %c0_10, %c0_11] : memref<4x128x128xbf16, #tpu.memory_space<vmem>>, vector<1x128x128xbf16>
    %8 = vector.shape_cast %7 : vector<1x128x128xbf16> to vector<128x128xbf16>
    %cst_12 = arith.constant dense<0.000000e+00> : vector<272x128xf32>
    %9 = tpu.matmul %6, %8, %cst_12 {dimension_numbers = #tpu.dot_dimension_numbers<[1], [0], [0], [1], [0, 0, 1, 1], [], []>} : vector<272x128xbf16>, vector<128x128xbf16>, vector<272x128xf32> -> vector<272x128xf32>
    %10 = arith.addf %4, %9 : vector<272x128xf32>
    %c0_13 = arith.constant 0 : index
    %c0_14 = arith.constant 0 : index
    %c17 = arith.constant 17 : index
    %c0_15 = arith.constant 0 : index
    %11 = vector.load %arg2[%c0_13, %c0_14, %c17, %c0_15] : memref<1x1x290x128xbf16, #tpu.memory_space<vmem>>, vector<1x1x272x128xbf16>
    %12 = vector.shape_cast %11 : vector<1x1x272x128xbf16> to vector<272x128xbf16>
    %c2 = arith.constant 2 : index
    %c0_16 = arith.constant 0 : index
    %c0_17 = arith.constant 0 : index
    %13 = vector.load %arg3[%c2, %c0_16, %c0_17] : memref<4x128x128xbf16, #tpu.memory_space<vmem>>, vector<1x128x128xbf16>
    %14 = vector.shape_cast %13 : vector<1x128x128xbf16> to vector<128x128xbf16>
    %cst_18 = arith.constant dense<0.000000e+00> : vector<272x128xf32>
    %15 = tpu.matmul %12, %14, %cst_18 {dimension_numbers = #tpu.dot_dimension_numbers<[1], [0], [0], [1], [0, 0, 1, 1], [], []>} : vector<272x128xbf16>, vector<128x128xbf16>, vector<272x128xf32> -> vector<272x128xf32>
    %16 = arith.addf %10, %15 : vector<272x128xf32>
    %c0_19 = arith.constant 0 : index
    %c0_20 = arith.constant 0 : index
    %c18 = arith.constant 18 : index
    %c0_21 = arith.constant 0 : index
    %17 = vector.load %arg2[%c0_19, %c0_20, %c18, %c0_21] : memref<1x1x290x128xbf16, #tpu.memory_space<vmem>>, vector<1x1x272x128xbf16>
    %18 = vector.shape_cast %17 : vector<1x1x272x128xbf16> to vector<272x128xbf16>
    %c3 = arith.constant 3 : index
    %c0_22 = arith.constant 0 : index
    %c0_23 = arith.constant 0 : index
    %19 = vector.load %arg3[%c3, %c0_22, %c0_23] : memref<4x128x128xbf16, #tpu.memory_space<vmem>>, vector<1x128x128xbf16>
    %20 = vector.shape_cast %19 : vector<1x128x128xbf16> to vector<128x128xbf16>
    %cst_24 = arith.constant dense<0.000000e+00> : vector<272x128xf32>
    %21 = tpu.matmul %18, %20, %cst_24 {dimension_numbers = #tpu.dot_dimension_numbers<[1], [0], [0], [1], [0, 0, 1, 1], [], []>} : vector<272x128xbf16>, vector<128x128xbf16>, vector<272x128xf32> -> vector<272x128xf32>
    %22 = arith.addf %16, %21 : vector<272x128xf32>
    %c0_25 = arith.constant 0 : index
    %c0_26 = arith.constant 0 : index
    %23 = vector.load %arg4[%c0_25, %c0_26] : memref<1x128xf32, #tpu.memory_space<vmem>>, vector<1x128xf32>
    %24 = vector.broadcast %23 : vector<1x128xf32> to vector<272x128xf32>
    %25 = arith.addf %22, %24 : vector<272x128xf32>
    %cst_27 = arith.constant 0.000000e+00 : f32
    %26 = vector.broadcast %cst_27 : f32 to vector<272x128xf32>
    %27 = arith.cmpf ogt, %25, %26 : vector<272x128xf32>
    %cst_28 = arith.constant 2.000000e-01 : f32
    %28 = vector.broadcast %cst_28 : f32 to vector<272x128xf32>
    %29 = arith.mulf %28, %25 : vector<272x128xf32>
    %30 = arith.select %27, %25, %29 : vector<272x128xi1>, vector<272x128xf32>
    %31 = arith.truncf %30 : vector<272x128xf32> to vector<272x128xbf16>
    %c0_29 = arith.constant 0 : index
    %c0_30 = arith.constant 0 : index
    %c0_31 = arith.constant 0 : index
    %c0_32 = arith.constant 0 : index
    %32 = vector.load %arg5[%c0_29, %c0_30, %c0_31, %c0_32] : memref<1x1x272x128xbf16, #tpu.memory_space<vmem>>, vector<1x1x272x128xbf16>
    %33 = vector.shape_cast %32 : vector<1x1x272x128xbf16> to vector<272x128xbf16>
    %34 = vector.shape_cast %31 : vector<272x128xbf16> to vector<1x1x272x128xbf16>
    tpu.vector_store %arg5[%c0_29, %c0_30, %c0_31, %c0_32], %34 {strides = array<i32>} : memref<1x1x272x128xbf16, #tpu.memory_space<vmem>>, vector<1x1x272x128xbf16>,
    return
  }
  func.func @transform_0(%arg0: i32, %arg1: i32) -> (i32, i32, i32, i32) {
    %c0_i32 = arith.constant 0 : i32
    %c0_i32_0 = arith.constant 0 : i32
    %c0_i32_1 = arith.constant 0 : i32
    return %arg0, %arg1, %c0_i32, %c0_i32_0 : i32, i32, i32, i32
  }
  func.func @transform_1(%arg0: i32, %arg1: i32) -> (i32, i32, i32) {
    %c0_i32 = arith.constant 0 : i32
    %c0_i32_0 = arith.constant 0 : i32
    %c0_i32_1 = arith.constant 0 : i32
    %c0_i32_2 = arith.constant 0 : i32
    return %c0_i32, %c0_i32_0, %c0_i32_1 : i32, i32, i32
  }
  func.func @transform_2(%arg0: i32, %arg1: i32) -> (i32, i32) {
    %c0_i32 = arith.constant 0 : i32
    %c0_i32_0 = arith.constant 0 : i32
    %c0_i32_1 = arith.constant 0 : i32
    return %c0_i32, %c0_i32_0 : i32, i32
  }
  func.func @transform_3(%arg0: i32, %arg1: i32) -> (i32, i32, i32, i32) {
    %c0_i32 = arith.constant 0 : i32
    %c0_i32_0 = arith.constant 0 : i32
    %c0_i32_1 = arith.constant 0 : i32
    return %arg0, %arg1, %c0_i32, %c0_i32_0 : i32, i32, i32, i32
  }
}

module attributes {stable_mosaic.version = 11 : i64} {
  func.func @_conv4x4_s2_kernel(%arg0: i32, %arg1: i32, %arg2: memref<1x1x82x128xbf16, #tpu.memory_space<vmem>>, %arg3: memref<4x128x128xbf16, #tpu.memory_space<vmem>>, %arg4: memref<1x128xf32, #tpu.memory_space<vmem>>, %arg5: memref<1x1x72x128xbf16, #tpu.memory_space<vmem>>) attributes {dimension_semantics = [#tpu.dimension_semantics<parallel>, #tpu.dimension_semantics<parallel>], iteration_bounds = array<i64: 2, 1>, scalar_prefetch = 0 : i64, scratch_operands = 0 : i64, tpu.core_type = #tpu.core_type<tc>, window_params = [{transform_indices = @transform_0, window_bounds = array<i64: 1, 1, 82, 128>}, {pipeline_mode = #tpu.pipeline_mode<synchronous>, transform_indices = @transform_1, window_bounds = array<i64: 4, 128, 128>}, {pipeline_mode = #tpu.pipeline_mode<synchronous>, transform_indices = @transform_2, window_bounds = array<i64: 1, 128>}, {transform_indices = @transform_3, window_bounds = array<i64: 1, 1, 72, 128>}]} {
    %c0 = arith.constant 0 : index
    %c0_0 = arith.constant 0 : index
    %c0_1 = arith.constant 0 : index
    %c0_2 = arith.constant 0 : index
    %0 = vector.load %arg2[%c0, %c0_0, %c0_1, %c0_2] : memref<1x1x82x128xbf16, #tpu.memory_space<vmem>>, vector<1x1x72x128xbf16>
    %1 = vector.shape_cast %0 : vector<1x1x72x128xbf16> to vector<72x128xbf16>
    %c0_3 = arith.constant 0 : index
    %c0_4 = arith.constant 0 : index
    %c0_5 = arith.constant 0 : index
    %2 = vector.load %arg3[%c0_3, %c0_4, %c0_5] : memref<4x128x128xbf16, #tpu.memory_space<vmem>>, vector<1x128x128xbf16>
    %3 = vector.shape_cast %2 : vector<1x128x128xbf16> to vector<128x128xbf16>
    %cst = arith.constant dense<0.000000e+00> : vector<72x128xf32>
    %4 = tpu.matmul %1, %3, %cst {dimension_numbers = #tpu.dot_dimension_numbers<[1], [0], [0], [1], [0, 0, 1, 1], [], []>} : vector<72x128xbf16>, vector<128x128xbf16>, vector<72x128xf32> -> vector<72x128xf32>
    %c0_6 = arith.constant 0 : index
    %c0_7 = arith.constant 0 : index
    %c1 = arith.constant 1 : index
    %c0_8 = arith.constant 0 : index
    %5 = vector.load %arg2[%c0_6, %c0_7, %c1, %c0_8] : memref<1x1x82x128xbf16, #tpu.memory_space<vmem>>, vector<1x1x72x128xbf16>
    %6 = vector.shape_cast %5 : vector<1x1x72x128xbf16> to vector<72x128xbf16>
    %c1_9 = arith.constant 1 : index
    %c0_10 = arith.constant 0 : index
    %c0_11 = arith.constant 0 : index
    %7 = vector.load %arg3[%c1_9, %c0_10, %c0_11] : memref<4x128x128xbf16, #tpu.memory_space<vmem>>, vector<1x128x128xbf16>
    %8 = vector.shape_cast %7 : vector<1x128x128xbf16> to vector<128x128xbf16>
    %cst_12 = arith.constant dense<0.000000e+00> : vector<72x128xf32>
    %9 = tpu.matmul %6, %8, %cst_12 {dimension_numbers = #tpu.dot_dimension_numbers<[1], [0], [0], [1], [0, 0, 1, 1], [], []>} : vector<72x128xbf16>, vector<128x128xbf16>, vector<72x128xf32> -> vector<72x128xf32>
    %10 = arith.addf %4, %9 : vector<72x128xf32>
    %c0_13 = arith.constant 0 : index
    %c0_14 = arith.constant 0 : index
    %c9 = arith.constant 9 : index
    %c0_15 = arith.constant 0 : index
    %11 = vector.load %arg2[%c0_13, %c0_14, %c9, %c0_15] : memref<1x1x82x128xbf16, #tpu.memory_space<vmem>>, vector<1x1x72x128xbf16>
    %12 = vector.shape_cast %11 : vector<1x1x72x128xbf16> to vector<72x128xbf16>
    %c2 = arith.constant 2 : index
    %c0_16 = arith.constant 0 : index
    %c0_17 = arith.constant 0 : index
    %13 = vector.load %arg3[%c2, %c0_16, %c0_17] : memref<4x128x128xbf16, #tpu.memory_space<vmem>>, vector<1x128x128xbf16>
    %14 = vector.shape_cast %13 : vector<1x128x128xbf16> to vector<128x128xbf16>
    %cst_18 = arith.constant dense<0.000000e+00> : vector<72x128xf32>
    %15 = tpu.matmul %12, %14, %cst_18 {dimension_numbers = #tpu.dot_dimension_numbers<[1], [0], [0], [1], [0, 0, 1, 1], [], []>} : vector<72x128xbf16>, vector<128x128xbf16>, vector<72x128xf32> -> vector<72x128xf32>
    %16 = arith.addf %10, %15 : vector<72x128xf32>
    %c0_19 = arith.constant 0 : index
    %c0_20 = arith.constant 0 : index
    %c10 = arith.constant 10 : index
    %c0_21 = arith.constant 0 : index
    %17 = vector.load %arg2[%c0_19, %c0_20, %c10, %c0_21] : memref<1x1x82x128xbf16, #tpu.memory_space<vmem>>, vector<1x1x72x128xbf16>
    %18 = vector.shape_cast %17 : vector<1x1x72x128xbf16> to vector<72x128xbf16>
    %c3 = arith.constant 3 : index
    %c0_22 = arith.constant 0 : index
    %c0_23 = arith.constant 0 : index
    %19 = vector.load %arg3[%c3, %c0_22, %c0_23] : memref<4x128x128xbf16, #tpu.memory_space<vmem>>, vector<1x128x128xbf16>
    %20 = vector.shape_cast %19 : vector<1x128x128xbf16> to vector<128x128xbf16>
    %cst_24 = arith.constant dense<0.000000e+00> : vector<72x128xf32>
    %21 = tpu.matmul %18, %20, %cst_24 {dimension_numbers = #tpu.dot_dimension_numbers<[1], [0], [0], [1], [0, 0, 1, 1], [], []>} : vector<72x128xbf16>, vector<128x128xbf16>, vector<72x128xf32> -> vector<72x128xf32>
    %22 = arith.addf %16, %21 : vector<72x128xf32>
    %c0_25 = arith.constant 0 : index
    %c0_26 = arith.constant 0 : index
    %23 = vector.load %arg4[%c0_25, %c0_26] : memref<1x128xf32, #tpu.memory_space<vmem>>, vector<1x128xf32>
    %24 = vector.broadcast %23 : vector<1x128xf32> to vector<72x128xf32>
    %25 = arith.addf %22, %24 : vector<72x128xf32>
    %cst_27 = arith.constant 0.000000e+00 : f32
    %26 = vector.broadcast %cst_27 : f32 to vector<72x128xf32>
    %27 = arith.cmpf ogt, %25, %26 : vector<72x128xf32>
    %cst_28 = arith.constant 2.000000e-01 : f32
    %28 = vector.broadcast %cst_28 : f32 to vector<72x128xf32>
    %29 = arith.mulf %28, %25 : vector<72x128xf32>
    %30 = arith.select %27, %25, %29 : vector<72x128xi1>, vector<72x128xf32>
    %31 = arith.truncf %30 : vector<72x128xf32> to vector<72x128xbf16>
    %c0_29 = arith.constant 0 : index
    %c0_30 = arith.constant 0 : index
    %c0_31 = arith.constant 0 : index
    %c0_32 = arith.constant 0 : index
    %32 = vector.load %arg5[%c0_29, %c0_30, %c0_31, %c0_32] : memref<1x1x72x128xbf16, #tpu.memory_space<vmem>>, vector<1x1x72x128xbf16>
    %33 = vector.shape_cast %32 : vector<1x1x72x128xbf16> to vector<72x128xbf16>
    %34 = vector.shape_cast %31 : vector<72x128xbf16> to vector<1x1x72x128xbf16>
    tpu.vector_store %arg5[%c0_29, %c0_30, %c0_31, %c0_32], %34 {strides = array<i32>} : memref<1x1x72x128xbf16, #tpu.memory_space<vmem>>, vector<1x1x72x128xbf16>,
    return
  }
  func.func @transform_0(%arg0: i32, %arg1: i32) -> (i32, i32, i32, i32) {
    %c0_i32 = arith.constant 0 : i32
    %c0_i32_0 = arith.constant 0 : i32
    %c0_i32_1 = arith.constant 0 : i32
    return %arg0, %arg1, %c0_i32, %c0_i32_0 : i32, i32, i32, i32
  }
  func.func @transform_1(%arg0: i32, %arg1: i32) -> (i32, i32, i32) {
    %c0_i32 = arith.constant 0 : i32
    %c0_i32_0 = arith.constant 0 : i32
    %c0_i32_1 = arith.constant 0 : i32
    %c0_i32_2 = arith.constant 0 : i32
    return %c0_i32, %c0_i32_0, %c0_i32_1 : i32, i32, i32
  }
  func.func @transform_2(%arg0: i32, %arg1: i32) -> (i32, i32) {
    %c0_i32 = arith.constant 0 : i32
    %c0_i32_0 = arith.constant 0 : i32
    %c0_i32_1 = arith.constant 0 : i32
    return %c0_i32, %c0_i32_0 : i32, i32
  }
  func.func @transform_3(%arg0: i32, %arg1: i32) -> (i32, i32, i32, i32) {
    %c0_i32 = arith.constant 0 : i32
    %c0_i32_0 = arith.constant 0 : i32
    %c0_i32_1 = arith.constant 0 : i32
    return %arg0, %arg1, %c0_i32, %c0_i32_0 : i32, i32, i32, i32
  }
}

module attributes {stable_mosaic.version = 11 : i64} {
  func.func @_conv4x4_s2_kernel(%arg0: i32, %arg1: i32, %arg2: memref<1x1x26x128xbf16, #tpu.memory_space<vmem>>, %arg3: memref<4x128x128xbf16, #tpu.memory_space<vmem>>, %arg4: memref<1x128xf32, #tpu.memory_space<vmem>>, %arg5: memref<1x1x20x128xbf16, #tpu.memory_space<vmem>>) attributes {dimension_semantics = [#tpu.dimension_semantics<parallel>, #tpu.dimension_semantics<parallel>], iteration_bounds = array<i64: 2, 1>, scalar_prefetch = 0 : i64, scratch_operands = 0 : i64, tpu.core_type = #tpu.core_type<tc>, window_params = [{transform_indices = @transform_0, window_bounds = array<i64: 1, 1, 26, 128>}, {pipeline_mode = #tpu.pipeline_mode<synchronous>, transform_indices = @transform_1, window_bounds = array<i64: 4, 128, 128>}, {pipeline_mode = #tpu.pipeline_mode<synchronous>, transform_indices = @transform_2, window_bounds = array<i64: 1, 128>}, {transform_indices = @transform_3, window_bounds = array<i64: 1, 1, 20, 128>}]} {
    %c0 = arith.constant 0 : index
    %c0_0 = arith.constant 0 : index
    %c0_1 = arith.constant 0 : index
    %c0_2 = arith.constant 0 : index
    %0 = vector.load %arg2[%c0, %c0_0, %c0_1, %c0_2] : memref<1x1x26x128xbf16, #tpu.memory_space<vmem>>, vector<1x1x20x128xbf16>
    %1 = vector.shape_cast %0 : vector<1x1x20x128xbf16> to vector<20x128xbf16>
    %c0_3 = arith.constant 0 : index
    %c0_4 = arith.constant 0 : index
    %c0_5 = arith.constant 0 : index
    %2 = vector.load %arg3[%c0_3, %c0_4, %c0_5] : memref<4x128x128xbf16, #tpu.memory_space<vmem>>, vector<1x128x128xbf16>
    %3 = vector.shape_cast %2 : vector<1x128x128xbf16> to vector<128x128xbf16>
    %cst = arith.constant dense<0.000000e+00> : vector<20x128xf32>
    %4 = tpu.matmul %1, %3, %cst {dimension_numbers = #tpu.dot_dimension_numbers<[1], [0], [0], [1], [0, 0, 1, 1], [], []>} : vector<20x128xbf16>, vector<128x128xbf16>, vector<20x128xf32> -> vector<20x128xf32>
    %c0_6 = arith.constant 0 : index
    %c0_7 = arith.constant 0 : index
    %c1 = arith.constant 1 : index
    %c0_8 = arith.constant 0 : index
    %5 = vector.load %arg2[%c0_6, %c0_7, %c1, %c0_8] : memref<1x1x26x128xbf16, #tpu.memory_space<vmem>>, vector<1x1x20x128xbf16>
    %6 = vector.shape_cast %5 : vector<1x1x20x128xbf16> to vector<20x128xbf16>
    %c1_9 = arith.constant 1 : index
    %c0_10 = arith.constant 0 : index
    %c0_11 = arith.constant 0 : index
    %7 = vector.load %arg3[%c1_9, %c0_10, %c0_11] : memref<4x128x128xbf16, #tpu.memory_space<vmem>>, vector<1x128x128xbf16>
    %8 = vector.shape_cast %7 : vector<1x128x128xbf16> to vector<128x128xbf16>
    %cst_12 = arith.constant dense<0.000000e+00> : vector<20x128xf32>
    %9 = tpu.matmul %6, %8, %cst_12 {dimension_numbers = #tpu.dot_dimension_numbers<[1], [0], [0], [1], [0, 0, 1, 1], [], []>} : vector<20x128xbf16>, vector<128x128xbf16>, vector<20x128xf32> -> vector<20x128xf32>
    %10 = arith.addf %4, %9 : vector<20x128xf32>
    %c0_13 = arith.constant 0 : index
    %c0_14 = arith.constant 0 : index
    %c5 = arith.constant 5 : index
    %c0_15 = arith.constant 0 : index
    %11 = vector.load %arg2[%c0_13, %c0_14, %c5, %c0_15] : memref<1x1x26x128xbf16, #tpu.memory_space<vmem>>, vector<1x1x20x128xbf16>
    %12 = vector.shape_cast %11 : vector<1x1x20x128xbf16> to vector<20x128xbf16>
    %c2 = arith.constant 2 : index
    %c0_16 = arith.constant 0 : index
    %c0_17 = arith.constant 0 : index
    %13 = vector.load %arg3[%c2, %c0_16, %c0_17] : memref<4x128x128xbf16, #tpu.memory_space<vmem>>, vector<1x128x128xbf16>
    %14 = vector.shape_cast %13 : vector<1x128x128xbf16> to vector<128x128xbf16>
    %cst_18 = arith.constant dense<0.000000e+00> : vector<20x128xf32>
    %15 = tpu.matmul %12, %14, %cst_18 {dimension_numbers = #tpu.dot_dimension_numbers<[1], [0], [0], [1], [0, 0, 1, 1], [], []>} : vector<20x128xbf16>, vector<128x128xbf16>, vector<20x128xf32> -> vector<20x128xf32>
    %16 = arith.addf %10, %15 : vector<20x128xf32>
    %c0_19 = arith.constant 0 : index
    %c0_20 = arith.constant 0 : index
    %c6 = arith.constant 6 : index
    %c0_21 = arith.constant 0 : index
    %17 = vector.load %arg2[%c0_19, %c0_20, %c6, %c0_21] : memref<1x1x26x128xbf16, #tpu.memory_space<vmem>>, vector<1x1x20x128xbf16>
    %18 = vector.shape_cast %17 : vector<1x1x20x128xbf16> to vector<20x128xbf16>
    %c3 = arith.constant 3 : index
    %c0_22 = arith.constant 0 : index
    %c0_23 = arith.constant 0 : index
    %19 = vector.load %arg3[%c3, %c0_22, %c0_23] : memref<4x128x128xbf16, #tpu.memory_space<vmem>>, vector<1x128x128xbf16>
    %20 = vector.shape_cast %19 : vector<1x128x128xbf16> to vector<128x128xbf16>
    %cst_24 = arith.constant dense<0.000000e+00> : vector<20x128xf32>
    %21 = tpu.matmul %18, %20, %cst_24 {dimension_numbers = #tpu.dot_dimension_numbers<[1], [0], [0], [1], [0, 0, 1, 1], [], []>} : vector<20x128xbf16>, vector<128x128xbf16>, vector<20x128xf32> -> vector<20x128xf32>
    %22 = arith.addf %16, %21 : vector<20x128xf32>
    %c0_25 = arith.constant 0 : index
    %c0_26 = arith.constant 0 : index
    %23 = vector.load %arg4[%c0_25, %c0_26] : memref<1x128xf32, #tpu.memory_space<vmem>>, vector<1x128xf32>
    %24 = vector.broadcast %23 : vector<1x128xf32> to vector<20x128xf32>
    %25 = arith.addf %22, %24 : vector<20x128xf32>
    %cst_27 = arith.constant 0.000000e+00 : f32
    %26 = vector.broadcast %cst_27 : f32 to vector<20x128xf32>
    %27 = arith.cmpf ogt, %25, %26 : vector<20x128xf32>
    %cst_28 = arith.constant 2.000000e-01 : f32
    %28 = vector.broadcast %cst_28 : f32 to vector<20x128xf32>
    %29 = arith.mulf %28, %25 : vector<20x128xf32>
    %30 = arith.select %27, %25, %29 : vector<20x128xi1>, vector<20x128xf32>
    %31 = arith.truncf %30 : vector<20x128xf32> to vector<20x128xbf16>
    %c0_29 = arith.constant 0 : index
    %c0_30 = arith.constant 0 : index
    %c0_31 = arith.constant 0 : index
    %c0_32 = arith.constant 0 : index
    %32 = vector.load %arg5[%c0_29, %c0_30, %c0_31, %c0_32] : memref<1x1x20x128xbf16, #tpu.memory_space<vmem>>, vector<1x1x20x128xbf16>
    %33 = vector.shape_cast %32 : vector<1x1x20x128xbf16> to vector<20x128xbf16>
    %34 = vector.shape_cast %31 : vector<20x128xbf16> to vector<1x1x20x128xbf16>
    tpu.vector_store %arg5[%c0_29, %c0_30, %c0_31, %c0_32], %34 {strides = array<i32>} : memref<1x1x20x128xbf16, #tpu.memory_space<vmem>>, vector<1x1x20x128xbf16>,
    return
  }
  func.func @transform_0(%arg0: i32, %arg1: i32) -> (i32, i32, i32, i32) {
    %c0_i32 = arith.constant 0 : i32
    %c0_i32_0 = arith.constant 0 : i32
    %c0_i32_1 = arith.constant 0 : i32
    return %arg0, %arg1, %c0_i32, %c0_i32_0 : i32, i32, i32, i32
  }
  func.func @transform_1(%arg0: i32, %arg1: i32) -> (i32, i32, i32) {
    %c0_i32 = arith.constant 0 : i32
    %c0_i32_0 = arith.constant 0 : i32
    %c0_i32_1 = arith.constant 0 : i32
    %c0_i32_2 = arith.constant 0 : i32
    return %c0_i32, %c0_i32_0, %c0_i32_1 : i32, i32, i32
  }
  func.func @transform_2(%arg0: i32, %arg1: i32) -> (i32, i32) {
    %c0_i32 = arith.constant 0 : i32
    %c0_i32_0 = arith.constant 0 : i32
    %c0_i32_1 = arith.constant 0 : i32
    return %c0_i32, %c0_i32_0 : i32, i32
  }
  func.func @transform_3(%arg0: i32, %arg1: i32) -> (i32, i32, i32, i32) {
    %c0_i32 = arith.constant 0 : i32
    %c0_i32_0 = arith.constant 0 : i32
    %c0_i32_1 = arith.constant 0 : i32
    return %arg0, %arg1, %c0_i32, %c0_i32_0 : i32, i32, i32, i32
  }
}

module attributes {stable_mosaic.version = 11 : i64} {
  func.func @_conv4x4_s2_kernel(%arg0: i32, %arg1: i32, %arg2: memref<1x1x10x128xbf16, #tpu.memory_space<vmem>>, %arg3: memref<4x128x128xbf16, #tpu.memory_space<vmem>>, %arg4: memref<1x128xf32, #tpu.memory_space<vmem>>, %arg5: memref<1x1x6x128xbf16, #tpu.memory_space<vmem>>) attributes {dimension_semantics = [#tpu.dimension_semantics<parallel>, #tpu.dimension_semantics<parallel>], iteration_bounds = array<i64: 2, 1>, scalar_prefetch = 0 : i64, scratch_operands = 0 : i64, tpu.core_type = #tpu.core_type<tc>, window_params = [{transform_indices = @transform_0, window_bounds = array<i64: 1, 1, 10, 128>}, {pipeline_mode = #tpu.pipeline_mode<synchronous>, transform_indices = @transform_1, window_bounds = array<i64: 4, 128, 128>}, {pipeline_mode = #tpu.pipeline_mode<synchronous>, transform_indices = @transform_2, window_bounds = array<i64: 1, 128>}, {transform_indices = @transform_3, window_bounds = array<i64: 1, 1, 6, 128>}]} {
    %c0 = arith.constant 0 : index
    %c0_0 = arith.constant 0 : index
    %c0_1 = arith.constant 0 : index
    %c0_2 = arith.constant 0 : index
    %0 = vector.load %arg2[%c0, %c0_0, %c0_1, %c0_2] : memref<1x1x10x128xbf16, #tpu.memory_space<vmem>>, vector<1x1x6x128xbf16>
    %1 = vector.shape_cast %0 : vector<1x1x6x128xbf16> to vector<6x128xbf16>
    %c0_3 = arith.constant 0 : index
    %c0_4 = arith.constant 0 : index
    %c0_5 = arith.constant 0 : index
    %2 = vector.load %arg3[%c0_3, %c0_4, %c0_5] : memref<4x128x128xbf16, #tpu.memory_space<vmem>>, vector<1x128x128xbf16>
    %3 = vector.shape_cast %2 : vector<1x128x128xbf16> to vector<128x128xbf16>
    %cst = arith.constant dense<0.000000e+00> : vector<6x128xf32>
    %4 = tpu.matmul %1, %3, %cst {dimension_numbers = #tpu.dot_dimension_numbers<[1], [0], [0], [1], [0, 0, 1, 1], [], []>} : vector<6x128xbf16>, vector<128x128xbf16>, vector<6x128xf32> -> vector<6x128xf32>
    %c0_6 = arith.constant 0 : index
    %c0_7 = arith.constant 0 : index
    %c1 = arith.constant 1 : index
    %c0_8 = arith.constant 0 : index
    %5 = vector.load %arg2[%c0_6, %c0_7, %c1, %c0_8] : memref<1x1x10x128xbf16, #tpu.memory_space<vmem>>, vector<1x1x6x128xbf16>
    %6 = vector.shape_cast %5 : vector<1x1x6x128xbf16> to vector<6x128xbf16>
    %c1_9 = arith.constant 1 : index
    %c0_10 = arith.constant 0 : index
    %c0_11 = arith.constant 0 : index
    %7 = vector.load %arg3[%c1_9, %c0_10, %c0_11] : memref<4x128x128xbf16, #tpu.memory_space<vmem>>, vector<1x128x128xbf16>
    %8 = vector.shape_cast %7 : vector<1x128x128xbf16> to vector<128x128xbf16>
    %cst_12 = arith.constant dense<0.000000e+00> : vector<6x128xf32>
    %9 = tpu.matmul %6, %8, %cst_12 {dimension_numbers = #tpu.dot_dimension_numbers<[1], [0], [0], [1], [0, 0, 1, 1], [], []>} : vector<6x128xbf16>, vector<128x128xbf16>, vector<6x128xf32> -> vector<6x128xf32>
    %10 = arith.addf %4, %9 : vector<6x128xf32>
    %c0_13 = arith.constant 0 : index
    %c0_14 = arith.constant 0 : index
    %c3 = arith.constant 3 : index
    %c0_15 = arith.constant 0 : index
    %11 = vector.load %arg2[%c0_13, %c0_14, %c3, %c0_15] : memref<1x1x10x128xbf16, #tpu.memory_space<vmem>>, vector<1x1x6x128xbf16>
    %12 = vector.shape_cast %11 : vector<1x1x6x128xbf16> to vector<6x128xbf16>
    %c2 = arith.constant 2 : index
    %c0_16 = arith.constant 0 : index
    %c0_17 = arith.constant 0 : index
    %13 = vector.load %arg3[%c2, %c0_16, %c0_17] : memref<4x128x128xbf16, #tpu.memory_space<vmem>>, vector<1x128x128xbf16>
    %14 = vector.shape_cast %13 : vector<1x128x128xbf16> to vector<128x128xbf16>
    %cst_18 = arith.constant dense<0.000000e+00> : vector<6x128xf32>
    %15 = tpu.matmul %12, %14, %cst_18 {dimension_numbers = #tpu.dot_dimension_numbers<[1], [0], [0], [1], [0, 0, 1, 1], [], []>} : vector<6x128xbf16>, vector<128x128xbf16>, vector<6x128xf32> -> vector<6x128xf32>
    %16 = arith.addf %10, %15 : vector<6x128xf32>
    %c0_19 = arith.constant 0 : index
    %c0_20 = arith.constant 0 : index
    %c4 = arith.constant 4 : index
    %c0_21 = arith.constant 0 : index
    %17 = vector.load %arg2[%c0_19, %c0_20, %c4, %c0_21] : memref<1x1x10x128xbf16, #tpu.memory_space<vmem>>, vector<1x1x6x128xbf16>
    %18 = vector.shape_cast %17 : vector<1x1x6x128xbf16> to vector<6x128xbf16>
    %c3_22 = arith.constant 3 : index
    %c0_23 = arith.constant 0 : index
    %c0_24 = arith.constant 0 : index
    %19 = vector.load %arg3[%c3_22, %c0_23, %c0_24] : memref<4x128x128xbf16, #tpu.memory_space<vmem>>, vector<1x128x128xbf16>
    %20 = vector.shape_cast %19 : vector<1x128x128xbf16> to vector<128x128xbf16>
    %cst_25 = arith.constant dense<0.000000e+00> : vector<6x128xf32>
    %21 = tpu.matmul %18, %20, %cst_25 {dimension_numbers = #tpu.dot_dimension_numbers<[1], [0], [0], [1], [0, 0, 1, 1], [], []>} : vector<6x128xbf16>, vector<128x128xbf16>, vector<6x128xf32> -> vector<6x128xf32>
    %22 = arith.addf %16, %21 : vector<6x128xf32>
    %c0_26 = arith.constant 0 : index
    %c0_27 = arith.constant 0 : index
    %23 = vector.load %arg4[%c0_26, %c0_27] : memref<1x128xf32, #tpu.memory_space<vmem>>, vector<1x128xf32>
    %24 = vector.broadcast %23 : vector<1x128xf32> to vector<6x128xf32>
    %25 = arith.addf %22, %24 : vector<6x128xf32>
    %cst_28 = arith.constant 0.000000e+00 : f32
    %26 = vector.broadcast %cst_28 : f32 to vector<6x128xf32>
    %27 = arith.cmpf ogt, %25, %26 : vector<6x128xf32>
    %cst_29 = arith.constant 2.000000e-01 : f32
    %28 = vector.broadcast %cst_29 : f32 to vector<6x128xf32>
    %29 = arith.mulf %28, %25 : vector<6x128xf32>
    %30 = arith.select %27, %25, %29 : vector<6x128xi1>, vector<6x128xf32>
    %31 = arith.truncf %30 : vector<6x128xf32> to vector<6x128xbf16>
    %c0_30 = arith.constant 0 : index
    %c0_31 = arith.constant 0 : index
    %c0_32 = arith.constant 0 : index
    %c0_33 = arith.constant 0 : index
    %32 = vector.load %arg5[%c0_30, %c0_31, %c0_32, %c0_33] : memref<1x1x6x128xbf16, #tpu.memory_space<vmem>>, vector<1x1x6x128xbf16>
    %33 = vector.shape_cast %32 : vector<1x1x6x128xbf16> to vector<6x128xbf16>
    %34 = vector.shape_cast %31 : vector<6x128xbf16> to vector<1x1x6x128xbf16>
    tpu.vector_store %arg5[%c0_30, %c0_31, %c0_32, %c0_33], %34 {strides = array<i32>} : memref<1x1x6x128xbf16, #tpu.memory_space<vmem>>, vector<1x1x6x128xbf16>,
    return
  }
  func.func @transform_0(%arg0: i32, %arg1: i32) -> (i32, i32, i32, i32) {
    %c0_i32 = arith.constant 0 : i32
    %c0_i32_0 = arith.constant 0 : i32
    %c0_i32_1 = arith.constant 0 : i32
    return %arg0, %arg1, %c0_i32, %c0_i32_0 : i32, i32, i32, i32
  }
  func.func @transform_1(%arg0: i32, %arg1: i32) -> (i32, i32, i32) {
    %c0_i32 = arith.constant 0 : i32
    %c0_i32_0 = arith.constant 0 : i32
    %c0_i32_1 = arith.constant 0 : i32
    %c0_i32_2 = arith.constant 0 : i32
    return %c0_i32, %c0_i32_0, %c0_i32_1 : i32, i32, i32
  }
  func.func @transform_2(%arg0: i32, %arg1: i32) -> (i32, i32) {
    %c0_i32 = arith.constant 0 : i32
    %c0_i32_0 = arith.constant 0 : i32
    %c0_i32_1 = arith.constant 0 : i32
    return %c0_i32, %c0_i32_0 : i32, i32
  }
  func.func @transform_3(%arg0: i32, %arg1: i32) -> (i32, i32, i32, i32) {
    %c0_i32 = arith.constant 0 : i32
    %c0_i32_0 = arith.constant 0 : i32
    %c0_i32_1 = arith.constant 0 : i32
    return %arg0, %arg1, %c0_i32, %c0_i32_0 : i32, i32, i32, i32
  }
}

module attributes {stable_mosaic.version = 11 : i64} {
  func.func @_conv4x4_s2_kernel(%arg0: i32, %arg1: i32, %arg2: memref<1x1x5x256xbf16, #tpu.memory_space<vmem>>, %arg3: memref<4x256x128xbf16, #tpu.memory_space<vmem>>, %arg4: memref<1x128xf32, #tpu.memory_space<vmem>>, %arg5: memref<1x1x2x128xf32, #tpu.memory_space<vmem>>) attributes {dimension_semantics = [#tpu.dimension_semantics<parallel>, #tpu.dimension_semantics<parallel>], iteration_bounds = array<i64: 2, 1>, scalar_prefetch = 0 : i64, scratch_operands = 0 : i64, tpu.core_type = #tpu.core_type<tc>, window_params = [{transform_indices = @transform_0, window_bounds = array<i64: 1, 1, 5, 256>}, {pipeline_mode = #tpu.pipeline_mode<synchronous>, transform_indices = @transform_1, window_bounds = array<i64: 4, 256, 128>}, {pipeline_mode = #tpu.pipeline_mode<synchronous>, transform_indices = @transform_2, window_bounds = array<i64: 1, 128>}, {transform_indices = @transform_3, window_bounds = array<i64: 1, 1, 2, 128>}]} {
    %c0 = arith.constant 0 : index
    %c0_0 = arith.constant 0 : index
    %c0_1 = arith.constant 0 : index
    %c0_2 = arith.constant 0 : index
    %0 = vector.load %arg2[%c0, %c0_0, %c0_1, %c0_2] : memref<1x1x5x256xbf16, #tpu.memory_space<vmem>>, vector<1x1x2x256xbf16>
    %1 = vector.shape_cast %0 : vector<1x1x2x256xbf16> to vector<2x256xbf16>
    %c0_3 = arith.constant 0 : index
    %c0_4 = arith.constant 0 : index
    %c0_5 = arith.constant 0 : index
    %2 = vector.load %arg3[%c0_3, %c0_4, %c0_5] : memref<4x256x128xbf16, #tpu.memory_space<vmem>>, vector<1x256x128xbf16>
    %3 = vector.shape_cast %2 : vector<1x256x128xbf16> to vector<256x128xbf16>
    %cst = arith.constant dense<0.000000e+00> : vector<2x128xf32>
    %4 = tpu.matmul %1, %3, %cst {dimension_numbers = #tpu.dot_dimension_numbers<[1], [0], [0], [1], [0, 0, 1, 1], [], []>} : vector<2x256xbf16>, vector<256x128xbf16>, vector<2x128xf32> -> vector<2x128xf32>
    %c0_6 = arith.constant 0 : index
    %c0_7 = arith.constant 0 : index
    %c1 = arith.constant 1 : index
    %c0_8 = arith.constant 0 : index
    %5 = vector.load %arg2[%c0_6, %c0_7, %c1, %c0_8] : memref<1x1x5x256xbf16, #tpu.memory_space<vmem>>, vector<1x1x2x256xbf16>
    %6 = vector.shape_cast %5 : vector<1x1x2x256xbf16> to vector<2x256xbf16>
    %c1_9 = arith.constant 1 : index
    %c0_10 = arith.constant 0 : index
    %c0_11 = arith.constant 0 : index
    %7 = vector.load %arg3[%c1_9, %c0_10, %c0_11] : memref<4x256x128xbf16, #tpu.memory_space<vmem>>, vector<1x256x128xbf16>
    %8 = vector.shape_cast %7 : vector<1x256x128xbf16> to vector<256x128xbf16>
    %cst_12 = arith.constant dense<0.000000e+00> : vector<2x128xf32>
    %9 = tpu.matmul %6, %8, %cst_12 {dimension_numbers = #tpu.dot_dimension_numbers<[1], [0], [0], [1], [0, 0, 1, 1], [], []>} : vector<2x256xbf16>, vector<256x128xbf16>, vector<2x128xf32> -> vector<2x128xf32>
    %10 = arith.addf %4, %9 : vector<2x128xf32>
    %c0_13 = arith.constant 0 : index
    %c0_14 = arith.constant 0 : index
    %c2 = arith.constant 2 : index
    %c0_15 = arith.constant 0 : index
    %11 = vector.load %arg2[%c0_13, %c0_14, %c2, %c0_15] : memref<1x1x5x256xbf16, #tpu.memory_space<vmem>>, vector<1x1x2x256xbf16>
    %12 = vector.shape_cast %11 : vector<1x1x2x256xbf16> to vector<2x256xbf16>
    %c2_16 = arith.constant 2 : index
    %c0_17 = arith.constant 0 : index
    %c0_18 = arith.constant 0 : index
    %13 = vector.load %arg3[%c2_16, %c0_17, %c0_18] : memref<4x256x128xbf16, #tpu.memory_space<vmem>>, vector<1x256x128xbf16>
    %14 = vector.shape_cast %13 : vector<1x256x128xbf16> to vector<256x128xbf16>
    %cst_19 = arith.constant dense<0.000000e+00> : vector<2x128xf32>
    %15 = tpu.matmul %12, %14, %cst_19 {dimension_numbers = #tpu.dot_dimension_numbers<[1], [0], [0], [1], [0, 0, 1, 1], [], []>} : vector<2x256xbf16>, vector<256x128xbf16>, vector<2x128xf32> -> vector<2x128xf32>
    %16 = arith.addf %10, %15 : vector<2x128xf32>
    %c0_20 = arith.constant 0 : index
    %c0_21 = arith.constant 0 : index
    %c3 = arith.constant 3 : index
    %c0_22 = arith.constant 0 : index
    %17 = vector.load %arg2[%c0_20, %c0_21, %c3, %c0_22] : memref<1x1x5x256xbf16, #tpu.memory_space<vmem>>, vector<1x1x2x256xbf16>
    %18 = vector.shape_cast %17 : vector<1x1x2x256xbf16> to vector<2x256xbf16>
    %c3_23 = arith.constant 3 : index
    %c0_24 = arith.constant 0 : index
    %c0_25 = arith.constant 0 : index
    %19 = vector.load %arg3[%c3_23, %c0_24, %c0_25] : memref<4x256x128xbf16, #tpu.memory_space<vmem>>, vector<1x256x128xbf16>
    %20 = vector.shape_cast %19 : vector<1x256x128xbf16> to vector<256x128xbf16>
    %cst_26 = arith.constant dense<0.000000e+00> : vector<2x128xf32>
    %21 = tpu.matmul %18, %20, %cst_26 {dimension_numbers = #tpu.dot_dimension_numbers<[1], [0], [0], [1], [0, 0, 1, 1], [], []>} : vector<2x256xbf16>, vector<256x128xbf16>, vector<2x128xf32> -> vector<2x128xf32>
    %22 = arith.addf %16, %21 : vector<2x128xf32>
    %c0_27 = arith.constant 0 : index
    %c0_28 = arith.constant 0 : index
    %23 = vector.load %arg4[%c0_27, %c0_28] : memref<1x128xf32, #tpu.memory_space<vmem>>, vector<1x128xf32>
    %24 = vector.broadcast %23 : vector<1x128xf32> to vector<2x128xf32>
    %25 = arith.addf %22, %24 : vector<2x128xf32>
    %c0_29 = arith.constant 0 : index
    %c0_30 = arith.constant 0 : index
    %c0_31 = arith.constant 0 : index
    %c0_32 = arith.constant 0 : index
    %26 = vector.load %arg5[%c0_29, %c0_30, %c0_31, %c0_32] : memref<1x1x2x128xf32, #tpu.memory_space<vmem>>, vector<1x1x2x128xf32>
    %27 = vector.shape_cast %26 : vector<1x1x2x128xf32> to vector<2x128xf32>
    %28 = vector.shape_cast %25 : vector<2x128xf32> to vector<1x1x2x128xf32>
    tpu.vector_store %arg5[%c0_29, %c0_30, %c0_31, %c0_32], %28 {strides = array<i32>} : memref<1x1x2x128xf32, #tpu.memory_space<vmem>>, vector<1x1x2x128xf32>,
    return
  }
  func.func @transform_0(%arg0: i32, %arg1: i32) -> (i32, i32, i32, i32) {
    %c0_i32 = arith.constant 0 : i32
    %c0_i32_0 = arith.constant 0 : i32
    %c0_i32_1 = arith.constant 0 : i32
    return %arg0, %arg1, %c0_i32, %c0_i32_0 : i32, i32, i32, i32
  }
  func.func @transform_1(%arg0: i32, %arg1: i32) -> (i32, i32, i32) {
    %c0_i32 = arith.constant 0 : i32
    %c0_i32_0 = arith.constant 0 : i32
    %c0_i32_1 = arith.constant 0 : i32
    %c0_i32_2 = arith.constant 0 : i32
    return %c0_i32, %c0_i32_0, %c0_i32_1 : i32, i32, i32
  }
  func.func @transform_2(%arg0: i32, %arg1: i32) -> (i32, i32) {
    %c0_i32 = arith.constant 0 : i32
    %c0_i32_0 = arith.constant 0 : i32
    %c0_i32_1 = arith.constant 0 : i32
    return %c0_i32, %c0_i32_0 : i32, i32
  }
  func.func @transform_3(%arg0: i32, %arg1: i32) -> (i32, i32, i32, i32) {
    %c0_i32 = arith.constant 0 : i32
    %c0_i32_0 = arith.constant 0 : i32
    %c0_i32_1 = arith.constant 0 : i32
    return %arg0, %arg1, %c0_i32, %c0_i32_0 : i32, i32, i32, i32
  }
}

</mosaic_0001>

<llo_original>
// kernel: fc_discriminator_forward.5
$region0: #{fc_discriminator_forward.5}
  #allocation0 [shape = 'u32[]', space=smem, size = 0x4, offset = 0x4, fixed_abs, tag = 'smem constant byte address 0x4 - core index']
  #allocation1 [shape = 'u32[144,128]{1,0:T(1,128)}', space=vmem, size = 0x12000, scoped, tag = 'internal scratch']
  %s0 = inlined_call_operand.vmem [shape: bf16[2,1,290,128], index: 0, kind: input, shape index: {}]
  %s1 = inlined_call_operand.vmem [shape: bf16[4,128,128], index: 1, kind: input, shape index: {}]
  %s2 = inlined_call_operand.vmem [shape: f32[1,128], index: 2, kind: input, shape index: {}]
  %s3 = inlined_call_operand.vmem [shape: bf16[2,1,272,128], index: 3, kind: output, shape index: {}]
  %s4 = sld [smem:[#allocation0]]
  $region45: #{fc_discriminator_forward.5} parent=0
    _
  %s6 = ssub.s32 1, %s4
  %s7 = scalar_select 0, %s6, %s4
  loop: start=0, step=1, limit=4
  $region2: #{fc_discriminator_forward.5} parent=0 // loop_pre_header
    _
  $region3: #{fc_discriminator_forward.5} parent=0 // loop_header
    %s9 = sphi 0, %s13
    %p10 = scmp.ge.s32.totalorder %s9, 4
    %s16 = sphi 0, %s28
    %s17 = sphi 0, %s24
    %s18 = sphi 0, %s16
    %s19 = sphi 0, %s17
    %s20 = sphi 0, %s18
    %s21 = sphi 0, %s19
    %s33 = sphi 0, %s35
    %s36 = sphi 0, %s33
    %s37 = sphi 0, %s36
    %s53 = sphi 0, %s37
    %s57 = sphi 0, %s57
    %s59 = sphi 0, %s57
    %s60 = sphi 0, %s59
    %s74 = sphi 0, %s60
    %s78 = sphi 0, %s78
    %s80 = sphi 0, %s78
    %s81 = sphi 0, %s80
    %s95 = sphi 0, %s81
    %s103 = sphi 0, %s105
    %s106 = sphi 0, %s103
    %s107 = sphi 0, %s106
    %s123 = sphi 0, %s107
  $region4: #{fc_discriminator_forward.5} parent=0 // loop_header_branch
    %12 = sbr.rel (%p10) target = $region8
  $region5: #{fc_discriminator_forward.5} parent=0 // loop_body
    %s14 = ssub.s32 %s9, 1
    %s15 = ssub.s32 %s9, 2
    %s22 = sadd.s32 1, %s17
    %p23 = scmp.ge.s32.totalorder %s22, 1
    %s24 = scalar_select %p23, 0, %s22
    %s25 = sadd.s32 1, %s16
    %s26 = scalar_select %p23, %s25, %s16
    %p27 = scmp.ge.s32.totalorder %s26, 2
    %s28 = scalar_select %p27, 0, %s26
    %s29 = ssub.s32 %s16, %s28
    %s30 = ssub.s32 %s17, %s24
    %s31 = sor.u32 %s29, %s30
    %p32 = scmp.eq.s32.totalorder %s31, 0
    %s34 = sadd.s32 %s33, 1
    %s35 = scalar_select %p32, %s33, %s34
    %p38 = pneg %p32
    %p39 = scmp.eq.s32.totalorder %s9, 1
    %p40 = por %p38, %p39
    %p41 = scmp.ne.s32.totalorder %s33, %s36
    %p42 = scmp.eq.s32.totalorder %s9, 0
    %p43 = por %p41, %p42
    %p44 = scmp.ne.s32.totalorder %s33, %s36
    %p45 = scmp.eq.s32.totalorder %s14, 1
    %p46 = por %p44, %p45
    %p47 = scmp.ne.s32.totalorder %s36, %s37
    %p48 = scmp.eq.s32.totalorder %s14, 0
    %p49 = por %p47, %p48
    %p50 = scmp.ne.s32.totalorder %s36, %s37
    %p51 = scmp.eq.s32.totalorder %s15, 1
    %p52 = por %p50, %p51
    %p54 = scmp.ne.s32.totalorder %s37, %s53
    %p55 = scmp.eq.s32.totalorder %s15, 0
    %p56 = por %p54, %p55
    %s58 = sadd.s32 %s57, 1
    %p61 = scmp.eq.s32.totalorder %s9, 1
    %p62 = scmp.ne.s32.totalorder %s57, %s59
    %p63 = scmp.eq.s32.totalorder %s9, 0
    %p64 = por %p62, %p63
    %p65 = scmp.ne.s32.totalorder %s57, %s59
    %p66 = scmp.eq.s32.totalorder %s14, 1
    %p67 = por %p65, %p66
    %p68 = scmp.ne.s32.totalorder %s59, %s60
    %p69 = scmp.eq.s32.totalorder %s14, 0
    %p70 = por %p68, %p69
    %p71 = scmp.ne.s32.totalorder %s59, %s60
    %p72 = scmp.eq.s32.totalorder %s15, 1
    %p73 = por %p71, %p72
    %p75 = scmp.ne.s32.totalorder %s60, %s74
    %p76 = scmp.eq.s32.totalorder %s15, 0
    %p77 = por %p75, %p76
    %s79 = sadd.s32 %s78, 1
    %p82 = scmp.eq.s32.totalorder %s9, 1
    %p83 = scmp.ne.s32.totalorder %s78, %s80
    %p84 = scmp.eq.s32.totalorder %s9, 0
    %p85 = por %p83, %p84
    %p86 = scmp.ne.s32.totalorder %s78, %s80
    %p87 = scmp.eq.s32.totalorder %s14, 1
    %p88 = por %p86, %p87
    %p89 = scmp.ne.s32.totalorder %s80, %s81
    %p90 = scmp.eq.s32.totalorder %s14, 0
    %p91 = por %p89, %p90
    %p92 = scmp.ne.s32.totalorder %s80, %s81
    %p93 = scmp.eq.s32.totalorder %s15, 1
    %p94 = por %p92, %p93
    %p96 = scmp.ne.s32.totalorder %s81, %s95
    %p97 = scmp.eq.s32.totalorder %s15, 0
    %p98 = por %p96, %p97
    %s99 = ssub.s32 %s16, %s28
    %s100 = ssub.s32 %s17, %s24
    %s101 = sor.u32 %s99, %s100
    %p102 = scmp.eq.s32.totalorder %s101, 0
    %s104 = sadd.s32 %s103, 1
    %s105 = scalar_select %p102, %s103, %s104
    %p108 = pneg %p102
    %p109 = scmp.eq.s32.totalorder %s9, 1
    %p110 = por %p108, %p109
    %p111 = scmp.ne.s32.totalorder %s103, %s106
    %p112 = scmp.eq.s32.totalorder %s9, 0
    %p113 = por %p111, %p112
    %p114 = scmp.ne.s32.totalorder %s103, %s106
    %p115 = scmp.eq.s32.totalorder %s14, 1
    %p116 = por %p114, %p115
    %p117 = scmp.ne.s32.totalorder %s106, %s107
    %p118 = scmp.eq.s32.totalorder %s14, 0
    %p119 = por %p117, %p118
    %p120 = scmp.ne.s32.totalorder %s106, %s107
    %p121 = scmp.eq.s32.totalorder %s15, 1
    %p122 = por %p120, %p121
    %p124 = scmp.ne.s32.totalorder %s107, %s123
    %p125 = scmp.eq.s32.totalorder %s15, 0
    %p126 = por %p124, %p125
    %p127 = scmp.le.s32.totalorder 1, %s9
    %p128 = scmp.lt.s32.totalorder %s9, 3
    %p129 = pnand %p127, %p128
    %p130 = pneg %p129
    // Predicated region
    $region9: #{fc_discriminator_forward.5} parent=5 // pred_check
      _
    $region10: #{fc_discriminator_forward.5} parent=5 // pred_check_branch
      %132 = sbr.rel (%p129) target = $region12
    $region11: #{fc_discriminator_forward.5} parent=5 // pred_region
      %s133 = ssub.s32 %s9, 1
      // Predicated region
      $region13: #{fc_discriminator_forward.5} parent=11 // pred_check
        %p134 = pneg %p70
      $region14: #{fc_discriminator_forward.5} parent=11 // pred_check_branch
        %136 = sbr.rel (%p134) target = $region16
      $region15: #{fc_discriminator_forward.5} parent=11 // pred_region
        _
      $region16: #{fc_discriminator_forward.5} parent=11 // pred_fallthru
        _
      // Predicated region
      $region17: #{fc_discriminator_forward.5} parent=11 // pred_check
        %p137 = pneg %p91
      $region18: #{fc_discriminator_forward.5} parent=11 // pred_check_branch
        %139 = sbr.rel (%p137) target = $region20
      $region19: #{fc_discriminator_forward.5} parent=11 // pred_region
        _
      $region20: #{fc_discriminator_forward.5} parent=11 // pred_fallthru
        _
    $region12: #{fc_discriminator_forward.5} parent=5 // pred_fallthru
      _
    %p140 = scmp.lt.s32.totalorder %s9, 2
    // Predicated region
    $region21: #{fc_discriminator_forward.5} parent=5 // pred_check
      %p141 = pneg %p140
    $region22: #{fc_discriminator_forward.5} parent=5 // pred_check_branch
      %143 = sbr.rel (%p141) target = $region24
    $region23: #{fc_discriminator_forward.5} parent=5 // pred_region
      // Predicated region
      $region25: #{fc_discriminator_forward.5} parent=23 // pred_check
        %p144 = pneg %p43
      $region26: #{fc_discriminator_forward.5} parent=23 // pred_check_branch
        %146 = sbr.rel (%p144) target = $region28
      $region27: #{fc_discriminator_forward.5} parent=23 // pred_region
        %p147 = scmp.lt.s32.totalorder %s16, 1
        %s148 = scalar_select %p147, %s16, 1
        %p149 = scmp.lt.s32.totalorder %s17, 0
        %s150 = scalar_select %p149, %s17, 0
        %s151 = smul.addr %s150, 37
        %s152 = smul.addr %s148, 37
        %s153 = sadd.s32 %s151, %s152
        %s154 = smul.addr %s153, 4
        %s155 = scalar_lea.vmem %s0, %s154
      $region28: #{fc_discriminator_forward.5} parent=23 // pred_fallthru
        _
    $region24: #{fc_discriminator_forward.5} parent=5 // pred_fallthru
      _
    %p156 = scmp.le.s32.totalorder 1, %s9
    %p157 = scmp.lt.s32.totalorder %s9, 3
    %p158 = pnand %p156, %p157
    %p159 = pneg %p158
    // Predicated region
    $region29: #{fc_discriminator_forward.5} parent=5 // pred_check
      _
    $region30: #{fc_discriminator_forward.5} parent=5 // pred_check_branch
      %161 = sbr.rel (%p158) target = $region32
    $region31: #{fc_discriminator_forward.5} parent=5 // pred_region
      %s162 = ssub.s32 %s9, 1
      %p163 = scmp.lt.s32.totalorder %s18, 1
      %s164 = scalar_select %p163, %s18, 1
      %p165 = scmp.lt.s32.totalorder %s19, 0
      %s166 = scalar_select %p165, %s19, 0
      %s167 = smul.addr %s166, 37
      %s168 = smul.addr %s164, 37
      %s169 = sadd.s32 %s167, %s168
      %s170 = smul.addr %s169, 4
      %s171 = scalar_lea.vmem %s0, %s170
      %p172 = pneg %p49
      %p173 = pneg %p46
      %p174 = pneg %p70
      %p175 = pneg %p67
      %p176 = pneg %p91
      %p177 = pneg %p88
      %p178 = pneg %p119
      %p179 = pneg %p116
      %p180 = scmp.lt.s32.totalorder %s18, 1
      %s181 = scalar_select %p180, %s18, 1
      %p182 = scmp.lt.s32.totalorder %s19, 0
      %s183 = scalar_select %p182, %s19, 0
      %s184 = smul.addr %s183, 34
      %s185 = smul.addr %s181, 34
      %s186 = sadd.s32 %s184, %s185
      %s187 = smul.addr %s186, 4
      %s188 = scalar_lea.vmem %s3, %s187
      %p189 = scmp.lt.s32.totalorder %s18, 1
      %s190 = scalar_select %p189, %s18, 1
      %p191 = scmp.lt.s32.totalorder %s19, 0
      %s192 = scalar_select %p191, %s19, 0
      %s193 = smul.addr %s192, 37
      %s194 = smul.addr %s190, 37
      %s195 = sadd.s32 %s193, %s194
      %s196 = smul.addr %s195, 4
      %s197 = scalar_lea.vmem %s0, %s196
      %p198 = scmp.lt.s32.totalorder %s18, 1
      %s199 = scalar_select %p198, %s18, 1
      %p200 = scmp.lt.s32.totalorder %s19, 0
      %s201 = scalar_select %p200, %s19, 0
      %s202 = smul.addr %s201, 34
      %s203 = smul.addr %s199, 34
      %s204 = sadd.s32 %s202, %s203
      %s205 = smul.addr %s204, 4
      %s206 = scalar_lea.vmem %s3, %s205
      %v208 = vld [vmem:[%s197] sm:$0xf]
      %v209 = vld [vmem:[%s197 + $0x4] sm:$0xf]
      %v210 = vld [vmem:[%s197 + $0x8] sm:$0xf]
      %v211 = vld [vmem:[%s197 + $0xc] sm:$0xf]
      %v212 = vld [vmem:[%s197 + $0x10] sm:$0xf]
      %v213 = vld [vmem:[%s197 + $0x14] sm:$0xf]
      %v214 = vld [vmem:[%s197 + $0x18] sm:$0xf]
      %v215 = vld [vmem:[%s197 + $0x1c] sm:$0xf]
      %v216 = vld [vmem:[%s197 + $0x20] sm:$0xf]
      %v217 = vld [vmem:[%s197 + $0x24] sm:$0xf]
      %v218 = vld [vmem:[%s197 + $0x28] sm:$0xf]
      %v219 = vld [vmem:[%s197 + $0x2c] sm:$0xf]
      %v220 = vld [vmem:[%s197 + $0x30] sm:$0xf]
      %v221 = vld [vmem:[%s197 + $0x34] sm:$0xf]
      %v222 = vld [vmem:[%s197 + $0x38] sm:$0xf]
      %v223 = vld [vmem:[%s197 + $0x3c] sm:$0xf]
      %v224 = vld [vmem:[%s197 + $0x40] sm:$0xf]
      %v225 = vld [vmem:[%s197 + $0x44] sm:$0xf]
      %v226 = vld [vmem:[%s197 + $0x48] sm:$0xf]
      %v227 = vld [vmem:[%s197 + $0x4c] sm:$0xf]
      %v228 = vld [vmem:[%s197 + $0x50] sm:$0xf]
      %v229 = vld [vmem:[%s197 + $0x54] sm:$0xf]
      %v230 = vld [vmem:[%s197 + $0x58] sm:$0xf]
      %v231 = vld [vmem:[%s197 + $0x5c] sm:$0xf]
      %v232 = vld [vmem:[%s197 + $0x60] sm:$0xf]
      %v233 = vld [vmem:[%s197 + $0x64] sm:$0xf]
      %v234 = vld [vmem:[%s197 + $0x68] sm:$0xf]
      %v235 = vld [vmem:[%s197 + $0x6c] sm:$0xf]
      %v236 = vld [vmem:[%s197 + $0x70] sm:$0xf]
      %v237 = vld [vmem:[%s197 + $0x74] sm:$0xf]
      %v238 = vld [vmem:[%s197 + $0x78] sm:$0xf]
      %v239 = vld [vmem:[%s197 + $0x7c] sm:$0xf]
      %v240 = vld [vmem:[%s197 + $0x80] sm:$0xf]
      %v241 = vld [vmem:[%s197 + $0x84] sm:$0xf]
      %v242 = vld [vmem:[%s1] sm:$0xf]
      %v243 = vld [vmem:[%s1 + $0x4] sm:$0xf]
      %v244 = vld [vmem:[%s1 + $0x8] sm:$0xf]
      %v245 = vld [vmem:[%s1 + $0xc] sm:$0xf]
      %v246 = vld [vmem:[%s1 + $0x10] sm:$0xf]
      %v247 = vld [vmem:[%s1 + $0x14] sm:$0xf]
      %v248 = vld [vmem:[%s1 + $0x18] sm:$0xf]
      %v249 = vld [vmem:[%s1 + $0x1c] sm:$0xf]
      %v250 = vld [vmem:[%s1 + $0x20] sm:$0xf]
      %v251 = vld [vmem:[%s1 + $0x24] sm:$0xf]
      %v252 = vld [vmem:[%s1 + $0x28] sm:$0xf]
      %v253 = vld [vmem:[%s1 + $0x2c] sm:$0xf]
      %v254 = vld [vmem:[%s1 + $0x30] sm:$0xf]
      %v255 = vld [vmem:[%s1 + $0x34] sm:$0xf]
      %v256 = vld [vmem:[%s1 + $0x38] sm:$0xf]
      %v257 = vld [vmem:[%s1 + $0x3c] sm:$0xf]
      %v258 = vld [vmem:[%s197 + $0x88] sm:$0x1]
      %s259 = scalar_lea.vmem %s1, 64
      %v260 = vld [vmem:[%s259] sm:$0xf]
      %v261 = vld [vmem:[%s259 + $0x4] sm:$0xf]
      %v262 = vld [vmem:[%s259 + $0x8] sm:$0xf]
      %v263 = vld [vmem:[%s259 + $0xc] sm:$0xf]
      %v264 = vld [vmem:[%s259 + $0x10] sm:$0xf]
      %v265 = vld [vmem:[%s259 + $0x14] sm:$0xf]
      %v266 = vld [vmem:[%s259 + $0x18] sm:$0xf]
      %v267 = vld [vmem:[%s259 + $0x1c] sm:$0xf]
      %v268 = vld [vmem:[%s259 + $0x20] sm:$0xf]
      %v269 = vld [vmem:[%s259 + $0x24] sm:$0xf]
      %v270 = vld [vmem:[%s259 + $0x28] sm:$0xf]
      %v271 = vld [vmem:[%s259 + $0x2c] sm:$0xf]
      %v272 = vld [vmem:[%s259 + $0x30] sm:$0xf]
      %v273 = vld [vmem:[%s259 + $0x34] sm:$0xf]
      %v274 = vld [vmem:[%s259 + $0x38] sm:$0xf]
      %v275 = vld [vmem:[%s259 + $0x3c] sm:$0xf]
      %v311 = vunpack.c.l.b16 %v208
      %v312 = vunpack.c.l.b16 %v209
      %v313 = vunpack.c.l.b16 %v210
      %v314 = vunpack.c.l.b16 %v211
      %v315 = vunpack.c.l.b16 %v212
      %v316 = vunpack.c.l.b16 %v213
      %v317 = vunpack.c.l.b16 %v214
      %v318 = vunpack.c.l.b16 %v215
      %v319 = vunpack.c.l.b16 %v216
      %v320 = vunpack.c.l.b16 %v217
      %v321 = vunpack.c.l.b16 %v218
      %v322 = vunpack.c.l.b16 %v219
      %v323 = vunpack.c.l.b16 %v220
      %v324 = vunpack.c.l.b16 %v221
      %v325 = vunpack.c.l.b16 %v222
      %v326 = vunpack.c.l.b16 %v223
      %v327 = vunpack.c.l.b16 %v224
      %v328 = vunpack.c.l.b16 %v225
      %v329 = vunpack.c.l.b16 %v226
      %v330 = vunpack.c.l.b16 %v227
      %v331 = vunpack.c.l.b16 %v228
      %v332 = vunpack.c.l.b16 %v229
      %v333 = vunpack.c.l.b16 %v230
      %v334 = vunpack.c.l.b16 %v231
      %v335 = vunpack.c.l.b16 %v232
      %v336 = vunpack.c.l.b16 %v233
      %v337 = vunpack.c.l.b16 %v234
      %v338 = vunpack.c.l.b16 %v235
      %v339 = vunpack.c.l.b16 %v236
      %v340 = vunpack.c.l.b16 %v237
      %v341 = vunpack.c.l.b16 %v238
      %v342 = vunpack.c.l.b16 %v239
      %v343 = vunpack.c.l.b16 %v240
      %v344 = vunpack.c.l.b16 %v241
      %v345 = vunpack.c.l.b16 %v258
      %v346 = vpack.c.b16 %v312, %v311
      %v347 = vpack.c.b16 %v314, %v313
      %v348 = vpack.c.b16 %v316, %v315
      %v349 = vpack.c.b16 %v318, %v317
      %v350 = vpack.c.b16 %v320, %v319
      %v351 = vpack.c.b16 %v322, %v321
      %v352 = vpack.c.b16 %v324, %v323
      %v353 = vpack.c.b16 %v326, %v325
      %v354 = vpack.c.b16 %v328, %v327
      %v355 = vpack.c.b16 %v330, %v329
      %v356 = vpack.c.b16 %v332, %v331
      %v357 = vpack.c.b16 %v334, %v333
      %v358 = vpack.c.b16 %v336, %v335
      %v359 = vpack.c.b16 %v338, %v337
      %v360 = vpack.c.b16 %v340, %v339
      %v361 = vpack.c.b16 %v342, %v341
      %v362 = vpack.c.b16 %v344, %v343
      %v363 = vpack.c.b16 %v345, %v345
      %vm364 = vsmask.f32 7424
      %v366 = vshrl.u32 %v346, 16
      %v368 = vshll.u32 %v346, 16
      %v370 = vrot.slane %v368, 1
      %v371 = vor.u32 %v366, %v370
      %v373 = vshll.u32 %v347, 16
      %v375 = vrot.slane %v373, 1
      %v376 = vsel %vm364, %v371, %v375
      %v377 = vshrl.u32 %v347, 16
      %v379 = vor.u32 %v377, %v375
      %v381 = vshll.u32 %v348, 16
      %v383 = vrot.slane %v381, 1
      %v384 = vsel %vm364, %v379, %v383
      %v385 = vshrl.u32 %v348, 16
      %v387 = vor.u32 %v385, %v383
      %v389 = vshll.u32 %v349, 16
      %v391 = vrot.slane %v389, 1
      %v392 = vsel %vm364, %v387, %v391
      %v393 = vshrl.u32 %v349, 16
      %v395 = vor.u32 %v393, %v391
      %v397 = vshll.u32 %v350, 16
      %v399 = vrot.slane %v397, 1
      %v400 = vsel %vm364, %v395, %v399
      %v401 = vshrl.u32 %v350, 16
      %v403 = vor.u32 %v401, %v399
      %v405 = vshll.u32 %v351, 16
      %v407 = vrot.slane %v405, 1
      %v408 = vsel %vm364, %v403, %v407
      %v409 = vshrl.u32 %v351, 16
      %v411 = vor.u32 %v409, %v407
      %v413 = vshll.u32 %v352, 16
      %v415 = vrot.slane %v413, 1
      %v416 = vsel %vm364, %v411, %v415
      %v417 = vshrl.u32 %v352, 16
      %v419 = vor.u32 %v417, %v415
      %v421 = vshll.u32 %v353, 16
      %v423 = vrot.slane %v421, 1
      %v424 = vsel %vm364, %v419, %v423
      %v425 = vshrl.u32 %v353, 16
      %v427 = vor.u32 %v425, %v423
      %v429 = vshll.u32 %v354, 16
      %v431 = vrot.slane %v429, 1
      %v432 = vsel %vm364, %v427, %v431
      %v433 = vshrl.u32 %v354, 16
      %v435 = vor.u32 %v433, %v431
      %v437 = vshll.u32 %v355, 16
      %v439 = vrot.slane %v437, 1
      %v440 = vsel %vm364, %v435, %v439
      %v441 = vshrl.u32 %v355, 16
      %v443 = vor.u32 %v441, %v439
      %v445 = vshll.u32 %v356, 16
      %v447 = vrot.slane %v445, 1
      %v448 = vsel %vm364, %v443, %v447
      %v449 = vshrl.u32 %v356, 16
      %v451 = vor.u32 %v449, %v447
      %v453 = vshll.u32 %v357, 16
      %v455 = vrot.slane %v453, 1
      %v456 = vsel %vm364, %v451, %v455
      %v457 = vshrl.u32 %v357, 16
      %v459 = vor.u32 %v457, %v455
      %v461 = vshll.u32 %v358, 16
      %v463 = vrot.slane %v461, 1
      %v464 = vsel %vm364, %v459, %v463
      %v465 = vshrl.u32 %v358, 16
      %v467 = vor.u32 %v465, %v463
      %v469 = vshll.u32 %v359, 16
      %v471 = vrot.slane %v469, 1
      %v472 = vsel %vm364, %v467, %v471
      %v473 = vshrl.u32 %v359, 16
      %v475 = vor.u32 %v473, %v471
      %v477 = vshll.u32 %v360, 16
      %v479 = vrot.slane %v477, 1
      %v480 = vsel %vm364, %v475, %v479
      %v481 = vshrl.u32 %v360, 16
      %v483 = vor.u32 %v481, %v479
      %v485 = vshll.u32 %v361, 16
      %v487 = vrot.slane %v485, 1
      %v488 = vsel %vm364, %v483, %v487
      %v489 = vshrl.u32 %v361, 16
      %v491 = vor.u32 %v489, %v487
      %v493 = vshll.u32 %v362, 16
      %v495 = vrot.slane %v493, 1
      %v496 = vsel %vm364, %v491, %v495
      %v497 = vshrl.u32 %v362, 16
      %v499 = vor.u32 %v497, %v495
      %v501 = vshll.u32 %v363, 16
      %v503 = vrot.slane %v501, 1
      %v504 = vsel %vm364, %v499, %v503
      %v538 = vunpack.c.l.b16 %v260
      %v539 = vunpack.c.l.b16 %v261
      %v540 = vunpack.c.l.b16 %v262
      %v541 = vunpack.c.l.b16 %v263
      %v542 = vunpack.c.l.b16 %v264
      %v543 = vunpack.c.l.b16 %v265
      %v544 = vunpack.c.l.b16 %v266
      %v545 = vunpack.c.l.b16 %v267
      %v546 = vunpack.c.l.b16 %v268
      %v547 = vunpack.c.l.b16 %v269
      %v548 = vunpack.c.l.b16 %v270
      %v549 = vunpack.c.l.b16 %v271
      %v550 = vunpack.c.l.b16 %v272
      %v551 = vunpack.c.l.b16 %v273
      %v552 = vunpack.c.l.b16 %v274
      %v553 = vunpack.c.l.b16 %v275
      %v554 = vpack.c.b16 %v539, %v538
      %v555 = vpack.c.b16 %v541, %v540
      %v556 = vpack.c.b16 %v543, %v542
      %v557 = vpack.c.b16 %v545, %v544
      %v558 = vpack.c.b16 %v547, %v546
      %v559 = vpack.c.b16 %v549, %v548
      %v560 = vpack.c.b16 %v551, %v550
      %v561 = vpack.c.b16 %v553, %v552
      %570 = vmatprep.subr.bf16.mxu0 0
      %571 = vmatpush1.bf16.msra.mxu0 %v561
      %572 = vmatprep.subr.bf16.mxu0 0
      %573 = vmatpush1.bf16.msra.mxu0 %v560
      %574 = vmatprep.subr.bf16.mxu0 0
      %575 = vmatpush1.bf16.msra.mxu0 %v559
      %576 = vmatprep.subr.bf16.mxu0 0
      %577 = vmatpush1.bf16.msra.mxu0 %v558
      %578 = vmatprep.subr.bf16.mxu0 0
      %579 = vmatpush1.bf16.msra.mxu0 %v557
      %580 = vmatprep.subr.bf16.mxu0 0
      %581 = vmatpush1.bf16.msra.mxu0 %v556
      %582 = vmatprep.subr.bf16.mxu0 0
      %583 = vmatpush1.bf16.msra.mxu0 %v555
      %584 = vmatprep.subr.bf16.mxu0 0
      %585 = vmatpush1.bf16.msra.mxu0 %v554
      %586 = vmatprep.subr.bf16.mxu0 0
      %587 = vmatpush2.bf16.msra.mxu0 0
      %588 = vmatprep.subr.bf16.mxu0 0
      %589 = vmatpush2.bf16.msra.mxu0 0
      %590 = vmatprep.subr.bf16.mxu0 0
      %591 = vmatpush2.bf16.msra.mxu0 0
      %592 = vmatprep.subr.bf16.mxu0 0
      %593 = vmatpush2.bf16.msra.mxu0 0
      %594 = vmatprep.subr.bf16.mxu0 0
      %595 = vmatpush2.bf16.msra.mxu0 0
      %596 = vmatprep.subr.bf16.mxu0 0
      %597 = vmatpush2.bf16.msra.mxu0 0
      %598 = vmatprep.subr.bf16.mxu0 0
      %599 = vmatpush2.bf16.msra.mxu0 0
      %600 = vmatprep.subr.bf16.mxu0 0
      %601 = vmatpush2.bf16.msra.mxu0 0
      %602 = vmatprep.mubr.bf16.mxu0 0
      %603 = vmatmul.mubr.bf16.gmra.mxu0 %v376
      %v604 = vpop.f32.mrf.mxu0
      %v605 = vadd.f32 0.0, %v604
      %v606 = vpop.f32.mrf.mxu0
      %v607 = vpop.f32.mrf.mxu0
      %v608 = vadd.f32 0.0, %v607
      %v609 = vpop.f32.mrf.mxu0
      %610 = vmatprep.mubr.bf16.mxu0 0
      %611 = vmatmul.mubr.bf16.gmra.mxu0 %v384
      %v612 = vpop.f32.mrf.mxu0
      %v613 = vadd.f32 0.0, %v612
      %v614 = vpop.f32.mrf.mxu0
      %v615 = vpop.f32.mrf.mxu0
      %v616 = vadd.f32 0.0, %v615
      %v617 = vpop.f32.mrf.mxu0
      %618 = vmatprep.mubr.bf16.mxu0 0
      %619 = vmatmul.mubr.bf16.gmra.mxu0 %v392
      %v620 = vpop.f32.mrf.mxu0
      %v621 = vadd.f32 0.0, %v620
      %v622 = vpop.f32.mrf.mxu0
      %v623 = vpop.f32.mrf.mxu0
      %v624 = vadd.f32 0.0, %v623
      %v625 = vpop.f32.mrf.mxu0
      %626 = vmatprep.mubr.bf16.mxu0 0
      %627 = vmatmul.mubr.bf16.gmra.mxu0 %v400
      %v628 = vpop.f32.mrf.mxu0
      %v629 = vadd.f32 0.0, %v628
      %v630 = vpop.f32.mrf.mxu0
      %v631 = vpop.f32.mrf.mxu0
      %v632 = vadd.f32 0.0, %v631
      %v633 = vpop.f32.mrf.mxu0
      %634 = vmatprep.mubr.bf16.mxu0 0
      %635 = vmatmul.mubr.bf16.gmra.mxu0 %v408
      %v636 = vpop.f32.mrf.mxu0
      %v637 = vadd.f32 0.0, %v636
      %v638 = vpop.f32.mrf.mxu0
      %v639 = vpop.f32.mrf.mxu0
      %v640 = vadd.f32 0.0, %v639
      %v641 = vpop.f32.mrf.mxu0
      %642 = vmatprep.mubr.bf16.mxu0 0
      %643 = vmatmul.mubr.bf16.gmra.mxu0 %v416
      %v644 = vpop.f32.mrf.mxu0
      %v645 = vadd.f32 0.0, %v644
      %v646 = vpop.f32.mrf.mxu0
      %v647 = vpop.f32.mrf.mxu0
      %v648 = vadd.f32 0.0, %v647
      %v649 = vpop.f32.mrf.mxu0
      %650 = vmatprep.mubr.bf16.mxu0 0
      %651 = vmatmul.mubr.bf16.gmra.mxu0 %v424
      %v652 = vpop.f32.mrf.mxu0
      %v653 = vadd.f32 0.0, %v652
      %v654 = vpop.f32.mrf.mxu0
      %v655 = vpop.f32.mrf.mxu0
      %v656 = vadd.f32 0.0, %v655
      %v657 = vpop.f32.mrf.mxu0
      %658 = vmatprep.mubr.bf16.mxu0 0
      %659 = vmatmul.mubr.bf16.gmra.mxu0 %v432
      %v660 = vpop.f32.mrf.mxu0
      %v661 = vadd.f32 0.0, %v660
      %v662 = vpop.f32.mrf.mxu0
      %v663 = vpop.f32.mrf.mxu0
      %v664 = vadd.f32 0.0, %v663
      %v665 = vpop.f32.mrf.mxu0
      %666 = vmatprep.mubr.bf16.mxu0 0
      %667 = vmatmul.mubr.bf16.gmra.mxu0 %v440
      %v668 = vpop.f32.mrf.mxu0
      %v669 = vadd.f32 0.0, %v668
      %v670 = vpop.f32.mrf.mxu0
      %v671 = vpop.f32.mrf.mxu0
      %v672 = vadd.f32 0.0, %v671
      %v673 = vpop.f32.mrf.mxu0
      %674 = vmatprep.mubr.bf16.mxu0 0
      %675 = vmatmul.mubr.bf16.gmra.mxu0 %v448
      %v676 = vpop.f32.mrf.mxu0
      %v677 = vadd.f32 0.0, %v676
      %v678 = vpop.f32.mrf.mxu0
      %v679 = vpop.f32.mrf.mxu0
      %v680 = vadd.f32 0.0, %v679
      %v681 = vpop.f32.mrf.mxu0
      %682 = vmatprep.mubr.bf16.mxu0 0
      %683 = vmatmul.mubr.bf16.gmra.mxu0 %v456
      %v684 = vpop.f32.mrf.mxu0
      %v685 = vadd.f32 0.0, %v684
      %v686 = vpop.f32.mrf.mxu0
      %v687 = vpop.f32.mrf.mxu0
      %v688 = vadd.f32 0.0, %v687
      %v689 = vpop.f32.mrf.mxu0
      %690 = vmatprep.mubr.bf16.mxu0 0
      %691 = vmatmul.mubr.bf16.gmra.mxu0 %v464
      %v692 = vpop.f32.mrf.mxu0
      %v693 = vadd.f32 0.0, %v692
      %v694 = vpop.f32.mrf.mxu0
      %v695 = vpop.f32.mrf.mxu0
      %v696 = vadd.f32 0.0, %v695
      %v697 = vpop.f32.mrf.mxu0
      %698 = vmatprep.mubr.bf16.mxu0 0
      %699 = vmatmul.mubr.bf16.gmra.mxu0 %v472
      %v700 = vpop.f32.mrf.mxu0
      %v701 = vadd.f32 0.0, %v700
      %v702 = vpop.f32.mrf.mxu0
      %v703 = vpop.f32.mrf.mxu0
      %v704 = vadd.f32 0.0, %v703
      %v705 = vpop.f32.mrf.mxu0
      %706 = vmatprep.mubr.bf16.mxu0 0
      %707 = vmatmul.mubr.bf16.gmra.mxu0 %v480
      %v708 = vpop.f32.mrf.mxu0
      %v709 = vadd.f32 0.0, %v708
      %v710 = vpop.f32.mrf.mxu0
      %v711 = vpop.f32.mrf.mxu0
      %v712 = vadd.f32 0.0, %v711
      %v713 = vpop.f32.mrf.mxu0
      %714 = vmatprep.mubr.bf16.mxu0 0
      %715 = vmatmul.mubr.bf16.gmra.mxu0 %v488
      %v716 = vpop.f32.mrf.mxu0
      %v717 = vadd.f32 0.0, %v716
      %v718 = vpop.f32.mrf.mxu0
      %v719 = vpop.f32.mrf.mxu0
      %v720 = vadd.f32 0.0, %v719
      %v721 = vpop.f32.mrf.mxu0
      %722 = vmatprep.mubr.bf16.mxu0 0
      %723 = vmatmul.mubr.bf16.gmra.mxu0 %v496
      %v724 = vpop.f32.mrf.mxu0
      %v725 = vadd.f32 0.0, %v724
      %v726 = vpop.f32.mrf.mxu0
      %v727 = vpop.f32.mrf.mxu0
      %v728 = vadd.f32 0.0, %v727
      %v729 = vpop.f32.mrf.mxu0
      %730 = vmatprep.mubr.bf16.mxu0 0
      %731 = vmatmul.mubr.bf16.gmra.mxu0 %v504
      %v732 = vpop.f32.mrf.mxu0
      %v733 = vadd.f32 0.0, %v732
      %v734 = vpop.f32.mrf.mxu0
      %v735 = vpop.f32.mrf.mxu0
      %v736 = vadd.f32 0.0, %v735
      %v737 = vpop.f32.mrf.mxu0
      %738 = vdwg.mxu0
      %v772 = vunpack.c.l.b16 %v242
      %v773 = vunpack.c.l.b16 %v243
      %v774 = vunpack.c.l.b16 %v244
      %v775 = vunpack.c.l.b16 %v245
      %v776 = vunpack.c.l.b16 %v246
      %v777 = vunpack.c.l.b16 %v247
      %v778 = vunpack.c.l.b16 %v248
      %v779 = vunpack.c.l.b16 %v249
      %v780 = vunpack.c.l.b16 %v250
      %v781 = vunpack.c.l.b16 %v251
      %v782 = vunpack.c.l.b16 %v252
      %v783 = vunpack.c.l.b16 %v253
      %v784 = vunpack.c.l.b16 %v254
      %v785 = vunpack.c.l.b16 %v255
      %v786 = vunpack.c.l.b16 %v256
      %v787 = vunpack.c.l.b16 %v257
      %v788 = vpack.c.b16 %v773, %v772
      %v789 = vpack.c.b16 %v775, %v774
      %v790 = vpack.c.b16 %v777, %v776
      %v791 = vpack.c.b16 %v779, %v778
      %v792 = vpack.c.b16 %v781, %v780
      %v793 = vpack.c.b16 %v783, %v782
      %v794 = vpack.c.b16 %v785, %v784
      %v795 = vpack.c.b16 %v787, %v786
      %804 = vmatprep.subr.bf16.mxu0 0
      %805 = vmatpush1.bf16.msra.mxu0 %v795
      %806 = vmatprep.subr.bf16.mxu0 0
      %807 = vmatpush1.bf16.msra.mxu0 %v794
      %808 = vmatprep.subr.bf16.mxu0 0
      %809 = vmatpush1.bf16.msra.mxu0 %v793
      %810 = vmatprep.subr.bf16.mxu0 0
      %811 = vmatpush1.bf16.msra.mxu0 %v792
      %812 = vmatprep.subr.bf16.mxu0 0
      %813 = vmatpush1.bf16.msra.mxu0 %v791
      %814 = vmatprep.subr.bf16.mxu0 0
      %815 = vmatpush1.bf16.msra.mxu0 %v790
      %816 = vmatprep.subr.bf16.mxu0 0
      %817 = vmatpush1.bf16.msra.mxu0 %v789
      %818 = vmatprep.subr.bf16.mxu0 0
      %819 = vmatpush1.bf16.msra.mxu0 %v788
      %820 = vmatprep.subr.bf16.mxu0 0
      %821 = vmatpush2.bf16.msra.mxu0 0
      %822 = vmatprep.subr.bf16.mxu0 0
      %823 = vmatpush2.bf16.msra.mxu0 0
      %824 = vmatprep.subr.bf16.mxu0 0
      %825 = vmatpush2.bf16.msra.mxu0 0
      %826 = vmatprep.subr.bf16.mxu0 0
      %827 = vmatpush2.bf16.msra.mxu0 0
      %828 = vmatprep.subr.bf16.mxu0 0
      %829 = vmatpush2.bf16.msra.mxu0 0
      %830 = vmatprep.subr.bf16.mxu0 0
      %831 = vmatpush2.bf16.msra.mxu0 0
      %832 = vmatprep.subr.bf16.mxu0 0
      %833 = vmatpush2.bf16.msra.mxu0 0
      %834 = vmatprep.subr.bf16.mxu0 0
      %835 = vmatpush2.bf16.msra.mxu0 0
      %836 = vmatprep.mubr.bf16.mxu0 0
      %837 = vmatmul.mubr.bf16.gmra.mxu0 %v346
      %v838 = vpop.f32.mrf.mxu0
      %v839 = vadd.f32 %v605, %v838
      %v840 = vpop.f32.mrf.mxu0
      %v841 = vpop.f32.mrf.mxu0
      %v842 = vadd.f32 %v608, %v841
      %v843 = vpop.f32.mrf.mxu0
      %844 = vmatprep.mubr.bf16.mxu0 0
      %845 = vmatmul.mubr.bf16.gmra.mxu0 %v347
      %v846 = vpop.f32.mrf.mxu0
      %v847 = vadd.f32 %v613, %v846
      %v848 = vpop.f32.mrf.mxu0
      %v849 = vpop.f32.mrf.mxu0
      %v850 = vadd.f32 %v616, %v849
      %v851 = vpop.f32.mrf.mxu0
      %852 = vmatprep.mubr.bf16.mxu0 0
      %853 = vmatmul.mubr.bf16.gmra.mxu0 %v348
      %v854 = vpop.f32.mrf.mxu0
      %v855 = vadd.f32 %v621, %v854
      %v856 = vpop.f32.mrf.mxu0
      %v857 = vpop.f32.mrf.mxu0
      %v858 = vadd.f32 %v624, %v857
      %v859 = vpop.f32.mrf.mxu0
      %860 = vmatprep.mubr.bf16.mxu0 0
      %861 = vmatmul.mubr.bf16.gmra.mxu0 %v349
      %v862 = vpop.f32.mrf.mxu0
      %v863 = vadd.f32 %v629, %v862
      %v864 = vpop.f32.mrf.mxu0
      %v865 = vpop.f32.mrf.mxu0
      %v866 = vadd.f32 %v632, %v865
      %v867 = vpop.f32.mrf.mxu0
      %868 = vmatprep.mubr.bf16.mxu0 0
      %869 = vmatmul.mubr.bf16.gmra.mxu0 %v350
      %v870 = vpop.f32.mrf.mxu0
      %v871 = vadd.f32 %v637, %v870
      %v872 = vpop.f32.mrf.mxu0
      %v873 = vpop.f32.mrf.mxu0
      %v874 = vadd.f32 %v640, %v873
      %v875 = vpop.f32.mrf.mxu0
      %876 = vmatprep.mubr.bf16.mxu0 0
      %877 = vmatmul.mubr.bf16.gmra.mxu0 %v351
      %v878 = vpop.f32.mrf.mxu0
      %v879 = vadd.f32 %v645, %v878
      %v880 = vpop.f32.mrf.mxu0
      %v881 = vpop.f32.mrf.mxu0
      %v882 = vadd.f32 %v648, %v881
      %v883 = vpop.f32.mrf.mxu0
      %884 = vmatprep.mubr.bf16.mxu0 0
      %885 = vmatmul.mubr.bf16.gmra.mxu0 %v352
      %v886 = vpop.f32.mrf.mxu0
      %v887 = vadd.f32 %v653, %v886
      %v888 = vpop.f32.mrf.mxu0
      %v889 = vpop.f32.mrf.mxu0
      %v890 = vadd.f32 %v656, %v889
      %v891 = vpop.f32.mrf.mxu0
      %892 = vmatprep.mubr.bf16.mxu0 0
      %893 = vmatmul.mubr.bf16.gmra.mxu0 %v353
      %v894 = vpop.f32.mrf.mxu0
      %v895 = vadd.f32 %v661, %v894
      %v896 = vpop.f32.mrf.mxu0
      %v897 = vpop.f32.mrf.mxu0
      %v898 = vadd.f32 %v664, %v897
      %v899 = vpop.f32.mrf.mxu0
      %900 = vmatprep.mubr.bf16.mxu0 0
      %901 = vmatmul.mubr.bf16.gmra.mxu0 %v354
      %v902 = vpop.f32.mrf.mxu0
      %v903 = vadd.f32 %v669, %v902
      %v904 = vpop.f32.mrf.mxu0
      %v905 = vpop.f32.mrf.mxu0
      %v906 = vadd.f32 %v672, %v905
      %v907 = vpop.f32.mrf.mxu0
      %908 = vmatprep.mubr.bf16.mxu0 0
      %909 = vmatmul.mubr.bf16.gmra.mxu0 %v355
      %v910 = vpop.f32.mrf.mxu0
      %v911 = vadd.f32 %v677, %v910
      %v912 = vpop.f32.mrf.mxu0
      %v913 = vpop.f32.mrf.mxu0
      %v914 = vadd.f32 %v680, %v913
      %v915 = vpop.f32.mrf.mxu0
      %916 = vmatprep.mubr.bf16.mxu0 0
      %917 = vmatmul.mubr.bf16.gmra.mxu0 %v356
      %v918 = vpop.f32.mrf.mxu0
      %v919 = vadd.f32 %v685, %v918
      %v920 = vpop.f32.mrf.mxu0
      %v921 = vpop.f32.mrf.mxu0
      %v922 = vadd.f32 %v688, %v921
      %v923 = vpop.f32.mrf.mxu0
      %924 = vmatprep.mubr.bf16.mxu0 0
      %925 = vmatmul.mubr.bf16.gmra.mxu0 %v357
      %v926 = vpop.f32.mrf.mxu0
      %v927 = vadd.f32 %v693, %v926
      %v928 = vpop.f32.mrf.mxu0
      %v929 = vpop.f32.mrf.mxu0
      %v930 = vadd.f32 %v696, %v929
      %v931 = vpop.f32.mrf.mxu0
      %932 = vmatprep.mubr.bf16.mxu0 0
      %933 = vmatmul.mubr.bf16.gmra.mxu0 %v358
      %v934 = vpop.f32.mrf.mxu0
      %v935 = vadd.f32 %v701, %v934
      %v936 = vpop.f32.mrf.mxu0
      %v937 = vpop.f32.mrf.mxu0
      %v938 = vadd.f32 %v704, %v937
      %v939 = vpop.f32.mrf.mxu0
      %940 = vmatprep.mubr.bf16.mxu0 0
      %941 = vmatmul.mubr.bf16.gmra.mxu0 %v359
      %v942 = vpop.f32.mrf.mxu0
      %v943 = vadd.f32 %v709, %v942
      %v944 = vpop.f32.mrf.mxu0
      %v945 = vpop.f32.mrf.mxu0
      %v946 = vadd.f32 %v712, %v945
      %v947 = vpop.f32.mrf.mxu0
      %948 = vmatprep.mubr.bf16.mxu0 0
      %949 = vmatmul.mubr.bf16.gmra.mxu0 %v360
      %v950 = vpop.f32.mrf.mxu0
      %v951 = vadd.f32 %v717, %v950
      %v952 = vpop.f32.mrf.mxu0
      %v953 = vpop.f32.mrf.mxu0
      %v954 = vadd.f32 %v720, %v953
      %v955 = vpop.f32.mrf.mxu0
      %956 = vmatprep.mubr.bf16.mxu0 0
      %957 = vmatmul.mubr.bf16.gmra.mxu0 %v361
      %v958 = vpop.f32.mrf.mxu0
      %v959 = vadd.f32 %v725, %v958
      %v960 = vpop.f32.mrf.mxu0
      %v961 = vpop.f32.mrf.mxu0
      %v962 = vadd.f32 %v728, %v961
      %v963 = vpop.f32.mrf.mxu0
      %964 = vmatprep.mubr.bf16.mxu0 0
      %965 = vmatmul.mubr.bf16.gmra.mxu0 %v362
      %v966 = vpop.f32.mrf.mxu0
      %v967 = vadd.f32 %v733, %v966
      %v968 = vpop.f32.mrf.mxu0
      %v969 = vpop.f32.mrf.mxu0
      %v970 = vadd.f32 %v736, %v969
      %v971 = vpop.f32.mrf.mxu0
      %972 = vdwg.mxu0
      %v973 = vld [vmem:[%s197 + $0x8] sm:$0xf]
      %v974 = vld [vmem:[%s197 + $0xc] sm:$0xf]
      %v975 = vld [vmem:[%s197 + $0x10] sm:$0xf]
      %v976 = vld [vmem:[%s197 + $0x14] sm:$0xf]
      %v977 = vld [vmem:[%s197 + $0x18] sm:$0xf]
      %v978 = vld [vmem:[%s197 + $0x1c] sm:$0xf]
      %v979 = vld [vmem:[%s197 + $0x20] sm:$0xf]
      %v980 = vld [vmem:[%s197 + $0x24] sm:$0xf]
      %v981 = vld [vmem:[%s197 + $0x28] sm:$0xf]
      %v982 = vld [vmem:[%s197 + $0x2c] sm:$0xf]
      %v983 = vld [vmem:[%s197 + $0x30] sm:$0xf]
      %v984 = vld [vmem:[%s197 + $0x34] sm:$0xf]
      %v985 = vld [vmem:[%s197 + $0x38] sm:$0xf]
      %v986 = vld [vmem:[%s197 + $0x3c] sm:$0xf]
      %v987 = vld [vmem:[%s197 + $0x40] sm:$0xf]
      %v988 = vld [vmem:[%s197 + $0x44] sm:$0xf]
      %v989 = vld [vmem:[%s197 + $0x48] sm:$0xf]
      %v990 = vld [vmem:[%s197 + $0x4c] sm:$0xf]
      %v991 = vld [vmem:[%s197 + $0x50] sm:$0xf]
      %v992 = vld [vmem:[%s197 + $0x54] sm:$0xf]
      %v993 = vld [vmem:[%s197 + $0x58] sm:$0xf]
      %v994 = vld [vmem:[%s197 + $0x5c] sm:$0xf]
      %v995 = vld [vmem:[%s197 + $0x60] sm:$0xf]
      %v996 = vld [vmem:[%s197 + $0x64] sm:$0xf]
      %v997 = vld [vmem:[%s197 + $0x68] sm:$0xf]
      %v998 = vld [vmem:[%s197 + $0x6c] sm:$0xf]
      %v999 = vld [vmem:[%s197 + $0x70] sm:$0xf]
      %v1000 = vld [vmem:[%s197 + $0x74] sm:$0xf]
      %v1001 = vld [vmem:[%s197 + $0x78] sm:$0xf]
      %v1002 = vld [vmem:[%s197 + $0x7c] sm:$0xf]
      %v1003 = vld [vmem:[%s197 + $0x80] sm:$0xf]
      %v1004 = vld [vmem:[%s197 + $0x84] sm:$0xf]
      %v1005 = vld [vmem:[%s197 + $0x88] sm:$0xf]
      %v1006 = vld [vmem:[%s197 + $0x8c] sm:$0xf]
      %v1007 = vld [vmem:[%s197 + $0x90] sm:$0x1]
      %s1008 = scalar_lea.vmem %s1, 128
      %v1009 = vld [vmem:[%s1008] sm:$0xf]
      %v1010 = vld [vmem:[%s1008 + $0x4] sm:$0xf]
      %v1011 = vld [vmem:[%s1008 + $0x8] sm:$0xf]
      %v1012 = vld [vmem:[%s1008 + $0xc] sm:$0xf]
      %v1013 = vld [vmem:[%s1008 + $0x10] sm:$0xf]
      %v1014 = vld [vmem:[%s1008 + $0x14] sm:$0xf]
      %v1015 = vld [vmem:[%s1008 + $0x18] sm:$0xf]
      %v1016 = vld [vmem:[%s1008 + $0x1c] sm:$0xf]
      %v1017 = vld [vmem:[%s1008 + $0x20] sm:$0xf]
      %v1018 = vld [vmem:[%s1008 + $0x24] sm:$0xf]
      %v1019 = vld [vmem:[%s1008 + $0x28] sm:$0xf]
      %v1020 = vld [vmem:[%s1008 + $0x2c] sm:$0xf]
      %v1021 = vld [vmem:[%s1008 + $0x30] sm:$0xf]
      %v1022 = vld [vmem:[%s1008 + $0x34] sm:$0xf]
      %v1023 = vld [vmem:[%s1008 + $0x38] sm:$0xf]
      %v1024 = vld [vmem:[%s1008 + $0x3c] sm:$0xf]
      %v1060 = vunpack.c.l.b16 %v973
      %v1061 = vunpack.c.l.b16 %v974
      %v1062 = vunpack.c.l.b16 %v975
      %v1063 = vunpack.c.l.b16 %v976
      %v1064 = vunpack.c.l.b16 %v977
      %v1065 = vunpack.c.l.b16 %v978
      %v1066 = vunpack.c.l.b16 %v979
      %v1067 = vunpack.c.l.b16 %v980
      %v1068 = vunpack.c.l.b16 %v981
      %v1069 = vunpack.c.l.b16 %v982
      %v1070 = vunpack.c.l.b16 %v983
      %v1071 = vunpack.c.l.b16 %v984
      %v1072 = vunpack.c.l.b16 %v985
      %v1073 = vunpack.c.l.b16 %v986
      %v1074 = vunpack.c.l.b16 %v987
      %v1075 = vunpack.c.l.b16 %v988
      %v1076 = vunpack.c.l.b16 %v989
      %v1077 = vunpack.c.l.b16 %v990
      %v1078 = vunpack.c.l.b16 %v991
      %v1079 = vunpack.c.l.b16 %v992
      %v1080 = vunpack.c.l.b16 %v993
      %v1081 = vunpack.c.l.b16 %v994
      %v1082 = vunpack.c.l.b16 %v995
      %v1083 = vunpack.c.l.b16 %v996
      %v1084 = vunpack.c.l.b16 %v997
      %v1085 = vunpack.c.l.b16 %v998
      %v1086 = vunpack.c.l.b16 %v999
      %v1087 = vunpack.c.l.b16 %v1000
      %v1088 = vunpack.c.l.b16 %v1001
      %v1089 = vunpack.c.l.b16 %v1002
      %v1090 = vunpack.c.l.b16 %v1003
      %v1091 = vunpack.c.l.b16 %v1004
      %v1092 = vunpack.c.l.b16 %v1005
      %v1093 = vunpack.c.l.b16 %v1006
      %v1094 = vunpack.c.l.b16 %v1007
      %v1095 = vpack.c.b16 %v1061, %v1060
      %v1096 = vpack.c.b16 %v1063, %v1062
      %v1097 = vpack.c.b16 %v1065, %v1064
      %v1098 = vpack.c.b16 %v1067, %v1066
      %v1099 = vpack.c.b16 %v1069, %v1068
      %v1100 = vpack.c.b16 %v1071, %v1070
      %v1101 = vpack.c.b16 %v1073, %v1072
      %v1102 = vpack.c.b16 %v1075, %v1074
      %v1103 = vpack.c.b16 %v1077, %v1076
      %v1104 = vpack.c.b16 %v1079, %v1078
      %v1105 = vpack.c.b16 %v1081, %v1080
      %v1106 = vpack.c.b16 %v1083, %v1082
      %v1107 = vpack.c.b16 %v1085, %v1084
      %v1108 = vpack.c.b16 %v1087, %v1086
      %v1109 = vpack.c.b16 %v1089, %v1088
      %v1110 = vpack.c.b16 %v1091, %v1090
      %v1111 = vpack.c.b16 %v1093, %v1092
      %v1112 = vpack.c.b16 %v1094, %v1094
      %v1114 = vshrl.u32 %v1095, 16
      %v1116 = vshll.u32 %v1095, 16
      %v1118 = vrot.slane %v1116, 1
      %v1119 = vor.u32 %v1114, %v1118
      %v1121 = vshll.u32 %v1096, 16
      %v1123 = vrot.slane %v1121, 1
      %v1124 = vsel %vm364, %v1119, %v1123
      %v1125 = vshrl.u32 %v1096, 16
      %v1127 = vor.u32 %v1125, %v1123
      %v1129 = vshll.u32 %v1097, 16
      %v1131 = vrot.slane %v1129, 1
      %v1132 = vsel %vm364, %v1127, %v1131
      %v1133 = vshrl.u32 %v1097, 16
      %v1135 = vor.u32 %v1133, %v1131
      %v1137 = vshll.u32 %v1098, 16
      %v1139 = vrot.slane %v1137, 1
      %v1140 = vsel %vm364, %v1135, %v1139
      %v1141 = vshrl.u32 %v1098, 16
      %v1143 = vor.u32 %v1141, %v1139
      %v1145 = vshll.u32 %v1099, 16
      %v1147 = vrot.slane %v1145, 1
      %v1148 = vsel %vm364, %v1143, %v1147
      %v1149 = vshrl.u32 %v1099, 16
      %v1151 = vor.u32 %v1149, %v1147
      %v1153 = vshll.u32 %v1100, 16
      %v1155 = vrot.slane %v1153, 1
      %v1156 = vsel %vm364, %v1151, %v1155
      %v1157 = vshrl.u32 %v1100, 16
      %v1159 = vor.u32 %v1157, %v1155
      %v1161 = vshll.u32 %v1101, 16
      %v1163 = vrot.slane %v1161, 1
      %v1164 = vsel %vm364, %v1159, %v1163
      %v1165 = vshrl.u32 %v1101, 16
      %v1167 = vor.u32 %v1165, %v1163
      %v1169 = vshll.u32 %v1102, 16
      %v1171 = vrot.slane %v1169, 1
      %v1172 = vsel %vm364, %v1167, %v1171
      %v1173 = vshrl.u32 %v1102, 16
      %v1175 = vor.u32 %v1173, %v1171
      %v1177 = vshll.u32 %v1103, 16
      %v1179 = vrot.slane %v1177, 1
      %v1180 = vsel %vm364, %v1175, %v1179
      %v1181 = vshrl.u32 %v1103, 16
      %v1183 = vor.u32 %v1181, %v1179
      %v1185 = vshll.u32 %v1104, 16
      %v1187 = vrot.slane %v1185, 1
      %v1188 = vsel %vm364, %v1183, %v1187
      %v1189 = vshrl.u32 %v1104, 16
      %v1191 = vor.u32 %v1189, %v1187
      %v1193 = vshll.u32 %v1105, 16
      %v1195 = vrot.slane %v1193, 1
      %v1196 = vsel %vm364, %v1191, %v1195
      %v1197 = vshrl.u32 %v1105, 16
      %v1199 = vor.u32 %v1197, %v1195
      %v1201 = vshll.u32 %v1106, 16
      %v1203 = vrot.slane %v1201, 1
      %v1204 = vsel %vm364, %v1199, %v1203
      %v1205 = vshrl.u32 %v1106, 16
      %v1207 = vor.u32 %v1205, %v1203
      %v1209 = vshll.u32 %v1107, 16
      %v1211 = vrot.slane %v1209, 1
      %v1212 = vsel %vm364, %v1207, %v1211
      %v1213 = vshrl.u32 %v1107, 16
      %v1215 = vor.u32 %v1213, %v1211
      %v1217 = vshll.u32 %v1108, 16
      %v1219 = vrot.slane %v1217, 1
      %v1220 = vsel %vm364, %v1215, %v1219
      %v1221 = vshrl.u32 %v1108, 16
      %v1223 = vor.u32 %v1221, %v1219
      %v1225 = vshll.u32 %v1109, 16
      %v1227 = vrot.slane %v1225, 1
      %v1228 = vsel %vm364, %v1223, %v1227
      %v1229 = vshrl.u32 %v1109, 16
      %v1231 = vor.u32 %v1229, %v1227
      %v1233 = vshll.u32 %v1110, 16
      %v1235 = vrot.slane %v1233, 1
      %v1236 = vsel %vm364, %v1231, %v1235
      %v1237 = vshrl.u32 %v1110, 16
      %v1239 = vor.u32 %v1237, %v1235
      %v1241 = vshll.u32 %v1111, 16
      %v1243 = vrot.slane %v1241, 1
      %v1244 = vsel %vm364, %v1239, %v1243
      %v1245 = vshrl.u32 %v1111, 16
      %v1247 = vor.u32 %v1245, %v1243
      %v1249 = vshll.u32 %v1112, 16
      %v1251 = vrot.slane %v1249, 1
      %v1252 = vsel %vm364, %v1247, %v1251
      %v1286 = vunpack.c.l.b16 %v1009
      %v1287 = vunpack.c.l.b16 %v1010
      %v1288 = vunpack.c.l.b16 %v1011
      %v1289 = vunpack.c.l.b16 %v1012
      %v1290 = vunpack.c.l.b16 %v1013
      %v1291 = vunpack.c.l.b16 %v1014
      %v1292 = vunpack.c.l.b16 %v1015
      %v1293 = vunpack.c.l.b16 %v1016
      %v1294 = vunpack.c.l.b16 %v1017
      %v1295 = vunpack.c.l.b16 %v1018
      %v1296 = vunpack.c.l.b16 %v1019
      %v1297 = vunpack.c.l.b16 %v1020
      %v1298 = vunpack.c.l.b16 %v1021
      %v1299 = vunpack.c.l.b16 %v1022
      %v1300 = vunpack.c.l.b16 %v1023
      %v1301 = vunpack.c.l.b16 %v1024
      %v1302 = vpack.c.b16 %v1287, %v1286
      %v1303 = vpack.c.b16 %v1289, %v1288
      %v1304 = vpack.c.b16 %v1291, %v1290
      %v1305 = vpack.c.b16 %v1293, %v1292
      %v1306 = vpack.c.b16 %v1295, %v1294
      %v1307 = vpack.c.b16 %v1297, %v1296
      %v1308 = vpack.c.b16 %v1299, %v1298
      %v1309 = vpack.c.b16 %v1301, %v1300
      %1318 = vmatprep.subr.bf16.mxu0 0
      %1319 = vmatpush1.bf16.msra.mxu0 %v1309
      %1320 = vmatprep.subr.bf16.mxu0 0
      %1321 = vmatpush1.bf16.msra.mxu0 %v1308
      %1322 = vmatprep.subr.bf16.mxu0 0
      %1323 = vmatpush1.bf16.msra.mxu0 %v1307
      %1324 = vmatprep.subr.bf16.mxu0 0
      %1325 = vmatpush1.bf16.msra.mxu0 %v1306
      %1326 = vmatprep.subr.bf16.mxu0 0
      %1327 = vmatpush1.bf16.msra.mxu0 %v1305
      %1328 = vmatprep.subr.bf16.mxu0 0
      %1329 = vmatpush1.bf16.msra.mxu0 %v1304
      %1330 = vmatprep.subr.bf16.mxu0 0
      %1331 = vmatpush1.bf16.msra.mxu0 %v1303
      %1332 = vmatprep.subr.bf16.mxu0 0
      %1333 = vmatpush1.bf16.msra.mxu0 %v1302
      %1334 = vmatprep.subr.bf16.mxu0 0
      %1335 = vmatpush2.bf16.msra.mxu0 0
      %1336 = vmatprep.subr.bf16.mxu0 0
      %1337 = vmatpush2.bf16.msra.mxu0 0
      %1338 = vmatprep.subr.bf16.mxu0 0
      %1339 = vmatpush2.bf16.msra.mxu0 0
      %1340 = vmatprep.subr.bf16.mxu0 0
      %1341 = vmatpush2.bf16.msra.mxu0 0
      %1342 = vmatprep.subr.bf16.mxu0 0
      %1343 = vmatpush2.bf16.msra.mxu0 0
      %1344 = vmatprep.subr.bf16.mxu0 0
      %1345 = vmatpush2.bf16.msra.mxu0 0
      %1346 = vmatprep.subr.bf16.mxu0 0
      %1347 = vmatpush2.bf16.msra.mxu0 0
      %1348 = vmatprep.subr.bf16.mxu0 0
      %1349 = vmatpush2.bf16.msra.mxu0 0
      %1350 = vmatprep.mubr.bf16.mxu0 0
      %1351 = vmatmul.mubr.bf16.gmra.mxu0 %v1124
      %v1352 = vpop.f32.mrf.mxu0
      %v1353 = vadd.f32 0.0, %v1352
      %v1354 = vpop.f32.mrf.mxu0
      %v1355 = vpop.f32.mrf.mxu0
      %v1356 = vadd.f32 0.0, %v1355
      %v1357 = vpop.f32.mrf.mxu0
      %1358 = vmatprep.mubr.bf16.mxu0 0
      %1359 = vmatmul.mubr.bf16.gmra.mxu0 %v1132
      %v1360 = vpop.f32.mrf.mxu0
      %v1361 = vadd.f32 0.0, %v1360
      %v1362 = vpop.f32.mrf.mxu0
      %v1363 = vpop.f32.mrf.mxu0
      %v1364 = vadd.f32 0.0, %v1363
      %v1365 = vpop.f32.mrf.mxu0
      %1366 = vmatprep.mubr.bf16.mxu0 0
      %1367 = vmatmul.mubr.bf16.gmra.mxu0 %v1140
      %v1368 = vpop.f32.mrf.mxu0
      %v1369 = vadd.f32 0.0, %v1368
      %v1370 = vpop.f32.mrf.mxu0
      %v1371 = vpop.f32.mrf.mxu0
      %v1372 = vadd.f32 0.0, %v1371
      %v1373 = vpop.f32.mrf.mxu0
      %1374 = vmatprep.mubr.bf16.mxu0 0
      %1375 = vmatmul.mubr.bf16.gmra.mxu0 %v1148
      %v1376 = vpop.f32.mrf.mxu0
      %v1377 = vadd.f32 0.0, %v1376
      %v1378 = vpop.f32.mrf.mxu0
      %v1379 = vpop.f32.mrf.mxu0
      %v1380 = vadd.f32 0.0, %v1379
      %v1381 = vpop.f32.mrf.mxu0
      %1382 = vmatprep.mubr.bf16.mxu0 0
      %1383 = vmatmul.mubr.bf16.gmra.mxu0 %v1156
      %v1384 = vpop.f32.mrf.mxu0
      %v1385 = vadd.f32 0.0, %v1384
      %v1386 = vpop.f32.mrf.mxu0
      %v1387 = vpop.f32.mrf.mxu0
      %v1388 = vadd.f32 0.0, %v1387
      %v1389 = vpop.f32.mrf.mxu0
      %1390 = vmatprep.mubr.bf16.mxu0 0
      %1391 = vmatmul.mubr.bf16.gmra.mxu0 %v1164
      %v1392 = vpop.f32.mrf.mxu0
      %v1393 = vadd.f32 0.0, %v1392
      %v1394 = vpop.f32.mrf.mxu0
      %v1395 = vpop.f32.mrf.mxu0
      %v1396 = vadd.f32 0.0, %v1395
      %v1397 = vpop.f32.mrf.mxu0
      %1398 = vmatprep.mubr.bf16.mxu0 0
      %1399 = vmatmul.mubr.bf16.gmra.mxu0 %v1172
      %v1400 = vpop.f32.mrf.mxu0
      %v1401 = vadd.f32 0.0, %v1400
      %v1402 = vpop.f32.mrf.mxu0
      %v1403 = vpop.f32.mrf.mxu0
      %v1404 = vadd.f32 0.0, %v1403
      %v1405 = vpop.f32.mrf.mxu0
      %1406 = vmatprep.mubr.bf16.mxu0 0
      %1407 = vmatmul.mubr.bf16.gmra.mxu0 %v1180
      %v1408 = vpop.f32.mrf.mxu0
      %v1409 = vadd.f32 0.0, %v1408
      %v1410 = vpop.f32.mrf.mxu0
      %v1411 = vpop.f32.mrf.mxu0
      %v1412 = vadd.f32 0.0, %v1411
      %v1413 = vpop.f32.mrf.mxu0
      %1414 = vmatprep.mubr.bf16.mxu0 0
      %1415 = vmatmul.mubr.bf16.gmra.mxu0 %v1188
      %v1416 = vpop.f32.mrf.mxu0
      %v1417 = vadd.f32 0.0, %v1416
      %v1418 = vpop.f32.mrf.mxu0
      %v1419 = vpop.f32.mrf.mxu0
      %v1420 = vadd.f32 0.0, %v1419
      %v1421 = vpop.f32.mrf.mxu0
      %1422 = vmatprep.mubr.bf16.mxu0 0
      %1423 = vmatmul.mubr.bf16.gmra.mxu0 %v1196
      %v1424 = vpop.f32.mrf.mxu0
      %v1425 = vadd.f32 0.0, %v1424
      %v1426 = vpop.f32.mrf.mxu0
      %v1427 = vpop.f32.mrf.mxu0
      %v1428 = vadd.f32 0.0, %v1427
      %v1429 = vpop.f32.mrf.mxu0
      %1430 = vmatprep.mubr.bf16.mxu0 0
      %1431 = vmatmul.mubr.bf16.gmra.mxu0 %v1204
      %v1432 = vpop.f32.mrf.mxu0
      %v1433 = vadd.f32 0.0, %v1432
      %v1434 = vpop.f32.mrf.mxu0
      %v1435 = vpop.f32.mrf.mxu0
      %v1436 = vadd.f32 0.0, %v1435
      %v1437 = vpop.f32.mrf.mxu0
      %1438 = vmatprep.mubr.bf16.mxu0 0
      %1439 = vmatmul.mubr.bf16.gmra.mxu0 %v1212
      %v1440 = vpop.f32.mrf.mxu0
      %v1441 = vadd.f32 0.0, %v1440
      %v1442 = vpop.f32.mrf.mxu0
      %v1443 = vpop.f32.mrf.mxu0
      %v1444 = vadd.f32 0.0, %v1443
      %v1445 = vpop.f32.mrf.mxu0
      %1446 = vmatprep.mubr.bf16.mxu0 0
      %1447 = vmatmul.mubr.bf16.gmra.mxu0 %v1220
      %v1448 = vpop.f32.mrf.mxu0
      %v1449 = vadd.f32 0.0, %v1448
      %v1450 = vpop.f32.mrf.mxu0
      %v1451 = vpop.f32.mrf.mxu0
      %v1452 = vadd.f32 0.0, %v1451
      %v1453 = vpop.f32.mrf.mxu0
      %1454 = vmatprep.mubr.bf16.mxu0 0
      %1455 = vmatmul.mubr.bf16.gmra.mxu0 %v1228
      %v1456 = vpop.f32.mrf.mxu0
      %v1457 = vadd.f32 0.0, %v1456
      %v1458 = vpop.f32.mrf.mxu0
      %v1459 = vpop.f32.mrf.mxu0
      %v1460 = vadd.f32 0.0, %v1459
      %v1461 = vpop.f32.mrf.mxu0
      %1462 = vmatprep.mubr.bf16.mxu0 0
      %1463 = vmatmul.mubr.bf16.gmra.mxu0 %v1236
      %v1464 = vpop.f32.mrf.mxu0
      %v1465 = vadd.f32 0.0, %v1464
      %v1466 = vpop.f32.mrf.mxu0
      %v1467 = vpop.f32.mrf.mxu0
      %v1468 = vadd.f32 0.0, %v1467
      %v1469 = vpop.f32.mrf.mxu0
      %1470 = vmatprep.mubr.bf16.mxu0 0
      %1471 = vmatmul.mubr.bf16.gmra.mxu0 %v1244
      %v1472 = vpop.f32.mrf.mxu0
      %v1473 = vadd.f32 0.0, %v1472
      %v1474 = vpop.f32.mrf.mxu0
      %v1475 = vpop.f32.mrf.mxu0
      %v1476 = vadd.f32 0.0, %v1475
      %v1477 = vpop.f32.mrf.mxu0
      %1478 = vmatprep.mubr.bf16.mxu0 0
      %1479 = vmatmul.mubr.bf16.gmra.mxu0 %v1252
      %v1480 = vpop.f32.mrf.mxu0
      %v1481 = vadd.f32 0.0, %v1480
      %v1482 = vpop.f32.mrf.mxu0
      %v1483 = vpop.f32.mrf.mxu0
      %v1484 = vadd.f32 0.0, %v1483
      %v1485 = vpop.f32.mrf.mxu0
      %1486 = vdwg.mxu0
      %v1487 = vadd.f32 %v839, %v1353
      %v1488 = vadd.f32 %v842, %v1356
      %v1489 = vadd.f32 %v847, %v1361
      %v1490 = vadd.f32 %v850, %v1364
      %v1491 = vadd.f32 %v855, %v1369
      %v1492 = vadd.f32 %v858, %v1372
      %v1493 = vadd.f32 %v863, %v1377
      %v1494 = vadd.f32 %v866, %v1380
      %v1495 = vadd.f32 %v871, %v1385
      %v1496 = vadd.f32 %v874, %v1388
      %v1497 = vadd.f32 %v879, %v1393
      %v1498 = vadd.f32 %v882, %v1396
      %v1499 = vadd.f32 %v887, %v1401
      %v1500 = vadd.f32 %v890, %v1404
      %v1501 = vadd.f32 %v895, %v1409
      %v1502 = vadd.f32 %v898, %v1412
      %v1503 = vadd.f32 %v903, %v1417
      %v1504 = vadd.f32 %v906, %v1420
      %v1505 = vadd.f32 %v911, %v1425
      %v1506 = vadd.f32 %v914, %v1428
      %v1507 = vadd.f32 %v919, %v1433
      %v1508 = vadd.f32 %v922, %v1436
      %v1509 = vadd.f32 %v927, %v1441
      %v1510 = vadd.f32 %v930, %v1444
      %v1511 = vadd.f32 %v935, %v1449
      %v1512 = vadd.f32 %v938, %v1452
      %v1513 = vadd.f32 %v943, %v1457
      %v1514 = vadd.f32 %v946, %v1460
      %v1515 = vadd.f32 %v951, %v1465
      %v1516 = vadd.f32 %v954, %v1468
      %v1517 = vadd.f32 %v959, %v1473
      %v1518 = vadd.f32 %v962, %v1476
      %v1519 = vadd.f32 %v967, %v1481
      %v1520 = vadd.f32 %v970, %v1484
      %v1521 = vld [vmem:[%s197 + $0x8] sm:$0xe]
      %s1522 = scalar_lea.vmem %s1, 192
      %v1523 = vld [vmem:[%s1522] sm:$0xf]
      %v1524 = vld [vmem:[%s1522 + $0x4] sm:$0xf]
      %v1525 = vld [vmem:[%s1522 + $0x8] sm:$0xf]
      %v1526 = vld [vmem:[%s1522 + $0xc] sm:$0xf]
      %v1527 = vld [vmem:[%s1522 + $0x10] sm:$0xf]
      %v1528 = vld [vmem:[%s1522 + $0x14] sm:$0xf]
      %v1529 = vld [vmem:[%s1522 + $0x18] sm:$0xf]
      %v1530 = vld [vmem:[%s1522 + $0x1c] sm:$0xf]
      %v1531 = vld [vmem:[%s1522 + $0x20] sm:$0xf]
      %v1532 = vld [vmem:[%s1522 + $0x24] sm:$0xf]
      %v1533 = vld [vmem:[%s1522 + $0x28] sm:$0xf]
      %v1534 = vld [vmem:[%s1522 + $0x2c] sm:$0xf]
      %v1535 = vld [vmem:[%s1522 + $0x30] sm:$0xf]
      %v1536 = vld [vmem:[%s1522 + $0x34] sm:$0xf]
      %v1537 = vld [vmem:[%s1522 + $0x38] sm:$0xf]
      %v1538 = vld [vmem:[%s1522 + $0x3c] sm:$0xf]
      %v1540 = vunpack.c.l.b16 %v1521
      %v1541 = vpack.c.b16 %v1061, %v1540
      %vm1542 = vcmask 1046528
      %v1543 = vrot.slane %v1541, 1
      %v1544 = vrot.slane %v1096, 1
      %v1545 = vsel %vm1542, %v1543, %v1544
      %v1546 = vrot.slane %v1097, 1
      %v1547 = vsel %vm1542, %v1544, %v1546
      %v1548 = vrot.slane %v1098, 1
      %v1549 = vsel %vm1542, %v1546, %v1548
      %v1550 = vrot.slane %v1099, 1
      %v1551 = vsel %vm1542, %v1548, %v1550
      %v1552 = vrot.slane %v1100, 1
      %v1553 = vsel %vm1542, %v1550, %v1552
      %v1554 = vrot.slane %v1101, 1
      %v1555 = vsel %vm1542, %v1552, %v1554
      %v1556 = vrot.slane %v1102, 1
      %v1557 = vsel %vm1542, %v1554, %v1556
      %v1558 = vrot.slane %v1103, 1
      %v1559 = vsel %vm1542, %v1556, %v1558
      %v1560 = vrot.slane %v1104, 1
      %v1561 = vsel %vm1542, %v1558, %v1560
      %v1562 = vrot.slane %v1105, 1
      %v1563 = vsel %vm1542, %v1560, %v1562
      %v1564 = vrot.slane %v1106, 1
      %v1565 = vsel %vm1542, %v1562, %v1564
      %v1566 = vrot.slane %v1107, 1
      %v1567 = vsel %vm1542, %v1564, %v1566
      %v1568 = vrot.slane %v1108, 1
      %v1569 = vsel %vm1542, %v1566, %v1568
      %v1570 = vrot.slane %v1109, 1
      %v1571 = vsel %vm1542, %v1568, %v1570
      %v1572 = vrot.slane %v1110, 1
      %v1573 = vsel %vm1542, %v1570, %v1572
      %v1574 = vrot.slane %v1111, 1
      %v1575 = vsel %vm1542, %v1572, %v1574
      %v1576 = vrot.slane %v1112, 1
      %v1577 = vsel %vm1542, %v1574, %v1576
      %v1611 = vunpack.c.l.b16 %v1523
      %v1612 = vunpack.c.l.b16 %v1524
      %v1613 = vunpack.c.l.b16 %v1525
      %v1614 = vunpack.c.l.b16 %v1526
      %v1615 = vunpack.c.l.b16 %v1527
      %v1616 = vunpack.c.l.b16 %v1528
      %v1617 = vunpack.c.l.b16 %v1529
      %v1618 = vunpack.c.l.b16 %v1530
      %v1619 = vunpack.c.l.b16 %v1531
      %v1620 = vunpack.c.l.b16 %v1532
      %v1621 = vunpack.c.l.b16 %v1533
      %v1622 = vunpack.c.l.b16 %v1534
      %v1623 = vunpack.c.l.b16 %v1535
      %v1624 = vunpack.c.l.b16 %v1536
      %v1625 = vunpack.c.l.b16 %v1537
      %v1626 = vunpack.c.l.b16 %v1538
      %v1627 = vpack.c.b16 %v1612, %v1611
      %v1628 = vpack.c.b16 %v1614, %v1613
      %v1629 = vpack.c.b16 %v1616, %v1615
      %v1630 = vpack.c.b16 %v1618, %v1617
      %v1631 = vpack.c.b16 %v1620, %v1619
      %v1632 = vpack.c.b16 %v1622, %v1621
      %v1633 = vpack.c.b16 %v1624, %v1623
      %v1634 = vpack.c.b16 %v1626, %v1625
      %1643 = vmatprep.subr.bf16.mxu0 0
      %1644 = vmatpush1.bf16.msra.mxu0 %v1634
      %1645 = vmatprep.subr.bf16.mxu0 0
      %1646 = vmatpush1.bf16.msra.mxu0 %v1633
      %1647 = vmatprep.subr.bf16.mxu0 0
      %1648 = vmatpush1.bf16.msra.mxu0 %v1632
      %1649 = vmatprep.subr.bf16.mxu0 0
      %1650 = vmatpush1.bf16.msra.mxu0 %v1631
      %1651 = vmatprep.subr.bf16.mxu0 0
      %1652 = vmatpush1.bf16.msra.mxu0 %v1630
      %1653 = vmatprep.subr.bf16.mxu0 0
      %1654 = vmatpush1.bf16.msra.mxu0 %v1629
      %1655 = vmatprep.subr.bf16.mxu0 0
      %1656 = vmatpush1.bf16.msra.mxu0 %v1628
      %1657 = vmatprep.subr.bf16.mxu0 0
      %1658 = vmatpush1.bf16.msra.mxu0 %v1627
      %1659 = vmatprep.subr.bf16.mxu0 0
      %1660 = vmatpush2.bf16.msra.mxu0 0
      %1661 = vmatprep.subr.bf16.mxu0 0
      %1662 = vmatpush2.bf16.msra.mxu0 0
      %1663 = vmatprep.subr.bf16.mxu0 0
      %1664 = vmatpush2.bf16.msra.mxu0 0
      %1665 = vmatprep.subr.bf16.mxu0 0
      %1666 = vmatpush2.bf16.msra.mxu0 0
      %1667 = vmatprep.subr.bf16.mxu0 0
      %1668 = vmatpush2.bf16.msra.mxu0 0
      %1669 = vmatprep.subr.bf16.mxu0 0
      %1670 = vmatpush2.bf16.msra.mxu0 0
      %1671 = vmatprep.subr.bf16.mxu0 0
      %1672 = vmatpush2.bf16.msra.mxu0 0
      %1673 = vmatprep.subr.bf16.mxu0 0
      %1674 = vmatpush2.bf16.msra.mxu0 0
      %1675 = vmatprep.mubr.bf16.mxu0 0
      %1676 = vmatmul.mubr.bf16.gmra.mxu0 %v1545
      %v1677 = vpop.f32.mrf.mxu0
      %v1678 = vadd.f32 0.0, %v1677
      %v1679 = vpop.f32.mrf.mxu0
      %v1680 = vpop.f32.mrf.mxu0
      %v1681 = vadd.f32 0.0, %v1680
      %v1682 = vpop.f32.mrf.mxu0
      %1683 = vmatprep.mubr.bf16.mxu0 0
      %1684 = vmatmul.mubr.bf16.gmra.mxu0 %v1547
      %v1685 = vpop.f32.mrf.mxu0
      %v1686 = vadd.f32 0.0, %v1685
      %v1687 = vpop.f32.mrf.mxu0
      %v1688 = vpop.f32.mrf.mxu0
      %v1689 = vadd.f32 0.0, %v1688
      %v1690 = vpop.f32.mrf.mxu0
      %1691 = vmatprep.mubr.bf16.mxu0 0
      %1692 = vmatmul.mubr.bf16.gmra.mxu0 %v1549
      %v1693 = vpop.f32.mrf.mxu0
      %v1694 = vadd.f32 0.0, %v1693
      %v1695 = vpop.f32.mrf.mxu0
      %v1696 = vpop.f32.mrf.mxu0
      %v1697 = vadd.f32 0.0, %v1696
      %v1698 = vpop.f32.mrf.mxu0
      %1699 = vmatprep.mubr.bf16.mxu0 0
      %1700 = vmatmul.mubr.bf16.gmra.mxu0 %v1551
      %v1701 = vpop.f32.mrf.mxu0
      %v1702 = vadd.f32 0.0, %v1701
      %v1703 = vpop.f32.mrf.mxu0
      %v1704 = vpop.f32.mrf.mxu0
      %v1705 = vadd.f32 0.0, %v1704
      %v1706 = vpop.f32.mrf.mxu0
      %1707 = vmatprep.mubr.bf16.mxu0 0
      %1708 = vmatmul.mubr.bf16.gmra.mxu0 %v1553
      %v1709 = vpop.f32.mrf.mxu0
      %v1710 = vadd.f32 0.0, %v1709
      %v1711 = vpop.f32.mrf.mxu0
      %v1712 = vpop.f32.mrf.mxu0
      %v1713 = vadd.f32 0.0, %v1712
      %v1714 = vpop.f32.mrf.mxu0
      %1715 = vmatprep.mubr.bf16.mxu0 0
      %1716 = vmatmul.mubr.bf16.gmra.mxu0 %v1555
      %v1717 = vpop.f32.mrf.mxu0
      %v1718 = vadd.f32 0.0, %v1717
      %v1719 = vpop.f32.mrf.mxu0
      %v1720 = vpop.f32.mrf.mxu0
      %v1721 = vadd.f32 0.0, %v1720
      %v1722 = vpop.f32.mrf.mxu0
      %1723 = vmatprep.mubr.bf16.mxu0 0
      %1724 = vmatmul.mubr.bf16.gmra.mxu0 %v1557
      %v1725 = vpop.f32.mrf.mxu0
      %v1726 = vadd.f32 0.0, %v1725
      %v1727 = vpop.f32.mrf.mxu0
      %v1728 = vpop.f32.mrf.mxu0
      %v1729 = vadd.f32 0.0, %v1728
      %v1730 = vpop.f32.mrf.mxu0
      %1731 = vmatprep.mubr.bf16.mxu0 0
      %1732 = vmatmul.mubr.bf16.gmra.mxu0 %v1559
      %v1733 = vpop.f32.mrf.mxu0
      %v1734 = vadd.f32 0.0, %v1733
      %v1735 = vpop.f32.mrf.mxu0
      %v1736 = vpop.f32.mrf.mxu0
      %v1737 = vadd.f32 0.0, %v1736
      %v1738 = vpop.f32.mrf.mxu0
      %1739 = vmatprep.mubr.bf16.mxu0 0
      %1740 = vmatmul.mubr.bf16.gmra.mxu0 %v1561
      %v1741 = vpop.f32.mrf.mxu0
      %v1742 = vadd.f32 0.0, %v1741
      %v1743 = vpop.f32.mrf.mxu0
      %v1744 = vpop.f32.mrf.mxu0
      %v1745 = vadd.f32 0.0, %v1744
      %v1746 = vpop.f32.mrf.mxu0
      %1747 = vmatprep.mubr.bf16.mxu0 0
      %1748 = vmatmul.mubr.bf16.gmra.mxu0 %v1563
      %v1749 = vpop.f32.mrf.mxu0
      %v1750 = vadd.f32 0.0, %v1749
      %v1751 = vpop.f32.mrf.mxu0
      %v1752 = vpop.f32.mrf.mxu0
      %v1753 = vadd.f32 0.0, %v1752
      %v1754 = vpop.f32.mrf.mxu0
      %1755 = vmatprep.mubr.bf16.mxu0 0
      %1756 = vmatmul.mubr.bf16.gmra.mxu0 %v1565
      %v1757 = vpop.f32.mrf.mxu0
      %v1758 = vadd.f32 0.0, %v1757
      %v1759 = vpop.f32.mrf.mxu0
      %v1760 = vpop.f32.mrf.mxu0
      %v1761 = vadd.f32 0.0, %v1760
      %v1762 = vpop.f32.mrf.mxu0
      %1763 = vmatprep.mubr.bf16.mxu0 0
      %1764 = vmatmul.mubr.bf16.gmra.mxu0 %v1567
      %v1765 = vpop.f32.mrf.mxu0
      %v1766 = vadd.f32 0.0, %v1765
      %v1767 = vpop.f32.mrf.mxu0
      %v1768 = vpop.f32.mrf.mxu0
      %v1769 = vadd.f32 0.0, %v1768
      %v1770 = vpop.f32.mrf.mxu0
      %1771 = vmatprep.mubr.bf16.mxu0 0
      %1772 = vmatmul.mubr.bf16.gmra.mxu0 %v1569
      %v1773 = vpop.f32.mrf.mxu0
      %v1774 = vadd.f32 0.0, %v1773
      %v1775 = vpop.f32.mrf.mxu0
      %v1776 = vpop.f32.mrf.mxu0
      %v1777 = vadd.f32 0.0, %v1776
      %v1778 = vpop.f32.mrf.mxu0
      %1779 = vmatprep.mubr.bf16.mxu0 0
      %1780 = vmatmul.mubr.bf16.gmra.mxu0 %v1571
      %v1781 = vpop.f32.mrf.mxu0
      %v1782 = vadd.f32 0.0, %v1781
      %v1783 = vpop.f32.mrf.mxu0
      %v1784 = vpop.f32.mrf.mxu0
      %v1785 = vadd.f32 0.0, %v1784
      %v1786 = vpop.f32.mrf.mxu0
      %1787 = vmatprep.mubr.bf16.mxu0 0
      %1788 = vmatmul.mubr.bf16.gmra.mxu0 %v1573
      %v1789 = vpop.f32.mrf.mxu0
      %v1790 = vadd.f32 0.0, %v1789
      %v1791 = vpop.f32.mrf.mxu0
      %v1792 = vpop.f32.mrf.mxu0
      %v1793 = vadd.f32 0.0, %v1792
      %v1794 = vpop.f32.mrf.mxu0
      %1795 = vmatprep.mubr.bf16.mxu0 0
      %1796 = vmatmul.mubr.bf16.gmra.mxu0 %v1575
      %v1797 = vpop.f32.mrf.mxu0
      %v1798 = vadd.f32 0.0, %v1797
      %v1799 = vpop.f32.mrf.mxu0
      %v1800 = vpop.f32.mrf.mxu0
      %v1801 = vadd.f32 0.0, %v1800
      %v1802 = vpop.f32.mrf.mxu0
      %1803 = vmatprep.mubr.bf16.mxu0 0
      %1804 = vmatmul.mubr.bf16.gmra.mxu0 %v1577
      %v1805 = vpop.f32.mrf.mxu0
      %v1806 = vadd.f32 0.0, %v1805
      %v1807 = vpop.f32.mrf.mxu0
      %v1808 = vpop.f32.mrf.mxu0
      %v1809 = vadd.f32 0.0, %v1808
      %v1810 = vpop.f32.mrf.mxu0
      %1811 = vdwg.mxu0
      %v1812 = vadd.f32 %v1487, %v1678
      %v1813 = vadd.f32 %v1488, %v1681
      %v1814 = vadd.f32 %v1489, %v1686
      %v1815 = vadd.f32 %v1490, %v1689
      %v1816 = vadd.f32 %v1491, %v1694
      %v1817 = vadd.f32 %v1492, %v1697
      %v1818 = vadd.f32 %v1493, %v1702
      %v1819 = vadd.f32 %v1494, %v1705
      %v1820 = vadd.f32 %v1495, %v1710
      %v1821 = vadd.f32 %v1496, %v1713
      %v1822 = vadd.f32 %v1497, %v1718
      %v1823 = vadd.f32 %v1498, %v1721
      %v1824 = vadd.f32 %v1499, %v1726
      %v1825 = vadd.f32 %v1500, %v1729
      %v1826 = vadd.f32 %v1501, %v1734
      %v1827 = vadd.f32 %v1502, %v1737
      %v1828 = vadd.f32 %v1503, %v1742
      %v1829 = vadd.f32 %v1504, %v1745
      %v1830 = vadd.f32 %v1505, %v1750
      %v1831 = vadd.f32 %v1506, %v1753
      %v1832 = vadd.f32 %v1507, %v1758
      %v1833 = vadd.f32 %v1508, %v1761
      %v1834 = vadd.f32 %v1509, %v1766
      %v1835 = vadd.f32 %v1510, %v1769
      %v1836 = vadd.f32 %v1511, %v1774
      %v1837 = vadd.f32 %v1512, %v1777
      %v1838 = vadd.f32 %v1513, %v1782
      %v1839 = vadd.f32 %v1514, %v1785
      %v1840 = vadd.f32 %v1515, %v1790
      %v1841 = vadd.f32 %v1516, %v1793
      %v1842 = vadd.f32 %v1517, %v1798
      %v1843 = vadd.f32 %v1518, %v1801
      %v1844 = vadd.f32 %v1519, %v1806
      %v1845 = vadd.f32 %v1520, %v1809
      %v1846 = vld [vmem:[%s2] sm:$0x1]
      %v1848 = vlaneseq
      %v1849 = vshrl.u32 %v1848, 7
      %v1850 = vsub.s32 0, %v1849
      %v1851 = vrot.slane %v1846, %v1850
      %v1853 = vadd.f32 %v1812, %v1851
      %v1854 = vadd.f32 %v1813, %v1851
      %v1855 = vadd.f32 %v1814, %v1851
      %v1856 = vadd.f32 %v1815, %v1851
      %v1857 = vadd.f32 %v1816, %v1851
      %v1858 = vadd.f32 %v1817, %v1851
      %v1859 = vadd.f32 %v1818, %v1851
      %v1860 = vadd.f32 %v1819, %v1851
      %v1861 = vadd.f32 %v1820, %v1851
      %v1862 = vadd.f32 %v1821, %v1851
      %v1863 = vadd.f32 %v1822, %v1851
      %v1864 = vadd.f32 %v1823, %v1851
      %v1865 = vadd.f32 %v1824, %v1851
      %v1866 = vadd.f32 %v1825, %v1851
      %v1867 = vadd.f32 %v1826, %v1851
      %v1868 = vadd.f32 %v1827, %v1851
      %v1869 = vadd.f32 %v1828, %v1851
      %v1870 = vadd.f32 %v1829, %v1851
      %v1871 = vadd.f32 %v1830, %v1851
      %v1872 = vadd.f32 %v1831, %v1851
      %v1873 = vadd.f32 %v1832, %v1851
      %v1874 = vadd.f32 %v1833, %v1851
      %v1875 = vadd.f32 %v1834, %v1851
      %v1876 = vadd.f32 %v1835, %v1851
      %v1877 = vadd.f32 %v1836, %v1851
      %v1878 = vadd.f32 %v1837, %v1851
      %v1879 = vadd.f32 %v1838, %v1851
      %v1880 = vadd.f32 %v1839, %v1851
      %v1881 = vadd.f32 %v1840, %v1851
      %v1882 = vadd.f32 %v1841, %v1851
      %v1883 = vadd.f32 %v1842, %v1851
      %v1884 = vadd.f32 %v1843, %v1851
      %v1885 = vadd.f32 %v1844, %v1851
      %v1886 = vadd.f32 %v1845, %v1851
      %vm1887 = vcmp.gt.f32.partialorder %v1853, 0.0
      %vm1888 = vcmp.gt.f32.partialorder %v1854, 0.0
      %vm1889 = vcmp.gt.f32.partialorder %v1855, 0.0
      %vm1890 = vcmp.gt.f32.partialorder %v1856, 0.0
      %vm1891 = vcmp.gt.f32.partialorder %v1857, 0.0
      %vm1892 = vcmp.gt.f32.partialorder %v1858, 0.0
      %vm1893 = vcmp.gt.f32.partialorder %v1859, 0.0
      %vm1894 = vcmp.gt.f32.partialorder %v1860, 0.0
      %vm1895 = vcmp.gt.f32.partialorder %v1861, 0.0
      %vm1896 = vcmp.gt.f32.partialorder %v1862, 0.0
      %vm1897 = vcmp.gt.f32.partialorder %v1863, 0.0
      %vm1898 = vcmp.gt.f32.partialorder %v1864, 0.0
      %vm1899 = vcmp.gt.f32.partialorder %v1865, 0.0
      %vm1900 = vcmp.gt.f32.partialorder %v1866, 0.0
      %vm1901 = vcmp.gt.f32.partialorder %v1867, 0.0
      %vm1902 = vcmp.gt.f32.partialorder %v1868, 0.0
      %vm1903 = vcmp.gt.f32.partialorder %v1869, 0.0
      %vm1904 = vcmp.gt.f32.partialorder %v1870, 0.0
      %vm1905 = vcmp.gt.f32.partialorder %v1871, 0.0
      %vm1906 = vcmp.gt.f32.partialorder %v1872, 0.0
      %vm1907 = vcmp.gt.f32.partialorder %v1873, 0.0
      %vm1908 = vcmp.gt.f32.partialorder %v1874, 0.0
      %vm1909 = vcmp.gt.f32.partialorder %v1875, 0.0
      %vm1910 = vcmp.gt.f32.partialorder %v1876, 0.0
      %vm1911 = vcmp.gt.f32.partialorder %v1877, 0.0
      %vm1912 = vcmp.gt.f32.partialorder %v1878, 0.0
      %vm1913 = vcmp.gt.f32.partialorder %v1879, 0.0
      %vm1914 = vcmp.gt.f32.partialorder %v1880, 0.0
      %vm1915 = vcmp.gt.f32.partialorder %v1881, 0.0
      %vm1916 = vcmp.gt.f32.partialorder %v1882, 0.0
      %vm1917 = vcmp.gt.f32.partialorder %v1883, 0.0
      %vm1918 = vcmp.gt.f32.partialorder %v1884, 0.0
      %vm1919 = vcmp.gt.f32.partialorder %v1885, 0.0
      %vm1920 = vcmp.gt.f32.partialorder %v1886, 0.0
      %v1921 = vmul.f32 %v1853, 0.2
      %v1922 = vmul.f32 %v1854, 0.2
      %v1923 = vmul.f32 %v1855, 0.2
      %v1924 = vmul.f32 %v1856, 0.2
      %v1925 = vmul.f32 %v1857, 0.2
      %v1926 = vmul.f32 %v1858, 0.2
      %v1927 = vmul.f32 %v1859, 0.2
      %v1928 = vmul.f32 %v1860, 0.2
      %v1929 = vmul.f32 %v1861, 0.2
      %v1930 = vmul.f32 %v1862, 0.2
      %v1931 = vmul.f32 %v1863, 0.2
      %v1932 = vmul.f32 %v1864, 0.2
      %v1933 = vmul.f32 %v1865, 0.2
      %v1934 = vmul.f32 %v1866, 0.2
      %v1935 = vmul.f32 %v1867, 0.2
      %v1936 = vmul.f32 %v1868, 0.2
      %v1937 = vmul.f32 %v1869, 0.2
      %v1938 = vmul.f32 %v1870, 0.2
      %v1939 = vmul.f32 %v1871, 0.2
      %v1940 = vmul.f32 %v1872, 0.2
      %v1941 = vmul.f32 %v1873, 0.2
      %v1942 = vmul.f32 %v1874, 0.2
      %v1943 = vmul.f32 %v1875, 0.2
      %v1944 = vmul.f32 %v1876, 0.2
      %v1945 = vmul.f32 %v1877, 0.2
      %v1946 = vmul.f32 %v1878, 0.2
      %v1947 = vmul.f32 %v1879, 0.2
      %v1948 = vmul.f32 %v1880, 0.2
      %v1949 = vmul.f32 %v1881, 0.2
      %v1950 = vmul.f32 %v1882, 0.2
      %v1951 = vmul.f32 %v1883, 0.2
      %v1952 = vmul.f32 %v1884, 0.2
      %v1953 = vmul.f32 %v1885, 0.2
      %v1954 = vmul.f32 %v1886, 0.2
      %v1955 = vsel %vm1887, %v1853, %v1921
      %v1956 = vsel %vm1888, %v1854, %v1922
      %v1957 = vsel %vm1889, %v1855, %v1923
      %v1958 = vsel %vm1890, %v1856, %v1924
      %v1959 = vsel %vm1891, %v1857, %v1925
      %v1960 = vsel %vm1892, %v1858, %v1926
      %v1961 = vsel %vm1893, %v1859, %v1927
      %v1962 = vsel %vm1894, %v1860, %v1928
      %v1963 = vsel %vm1895, %v1861, %v1929
      %v1964 = vsel %vm1896, %v1862, %v1930
      %v1965 = vsel %vm1897, %v1863, %v1931
      %v1966 = vsel %vm1898, %v1864, %v1932
      %v1967 = vsel %vm1899, %v1865, %v1933
      %v1968 = vsel %vm1900, %v1866, %v1934
      %v1969 = vsel %vm1901, %v1867, %v1935
      %v1970 = vsel %vm1902, %v1868, %v1936
      %v1971 = vsel %vm1903, %v1869, %v1937
      %v1972 = vsel %vm1904, %v1870, %v1938
      %v1973 = vsel %vm1905, %v1871, %v1939
      %v1974 = vsel %vm1906, %v1872, %v1940
      %v1975 = vsel %vm1907, %v1873, %v1941
      %v1976 = vsel %vm1908, %v1874, %v1942
      %v1977 = vsel %vm1909, %v1875, %v1943
      %v1978 = vsel %vm1910, %v1876, %v1944
      %v1979 = vsel %vm1911, %v1877, %v1945
      %v1980 = vsel %vm1912, %v1878, %v1946
      %v1981 = vsel %vm1913, %v1879, %v1947
      %v1982 = vsel %vm1914, %v1880, %v1948
      %v1983 = vsel %vm1915, %v1881, %v1949
      %v1984 = vsel %vm1916, %v1882, %v1950
      %v1985 = vsel %vm1917, %v1883, %v1951
      %v1986 = vsel %vm1918, %v1884, %v1952
      %v1987 = vsel %vm1919, %v1885, %v1953
      %v1988 = vsel %vm1920, %v1886, %v1954
      %v1989 = vpack.c.bf16 %v1956, %v1955
      %v1990 = vpack.c.bf16 %v1958, %v1957
      %v1991 = vpack.c.bf16 %v1960, %v1959
      %v1992 = vpack.c.bf16 %v1962, %v1961
      %v1993 = vpack.c.bf16 %v1964, %v1963
      %v1994 = vpack.c.bf16 %v1966, %v1965
      %v1995 = vpack.c.bf16 %v1968, %v1967
      %v1996 = vpack.c.bf16 %v1970, %v1969
      %v1997 = vpack.c.bf16 %v1972, %v1971
      %v1998 = vpack.c.bf16 %v1974, %v1973
      %v1999 = vpack.c.bf16 %v1976, %v1975
      %v2000 = vpack.c.bf16 %v1978, %v1977
      %v2001 = vpack.c.bf16 %v1980, %v1979
      %v2002 = vpack.c.bf16 %v1982, %v1981
      %v2003 = vpack.c.bf16 %v1984, %v1983
      %v2004 = vpack.c.bf16 %v1986, %v1985
      %v2005 = vpack.c.bf16 %v1988, %v1987
      %v2023 = vunpack.c.l.b16 %v1989
      %v2024 = vunpack.c.h.b16 %v1989
      %v2025 = vunpack.c.l.b16 %v1990
      %v2026 = vunpack.c.h.b16 %v1990
      %v2027 = vunpack.c.l.b16 %v1991
      %v2028 = vunpack.c.h.b16 %v1991
      %v2029 = vunpack.c.l.b16 %v1992
      %v2030 = vunpack.c.h.b16 %v1992
      %v2031 = vunpack.c.l.b16 %v1993
      %v2032 = vunpack.c.h.b16 %v1993
      %v2033 = vunpack.c.l.b16 %v1994
      %v2034 = vunpack.c.h.b16 %v1994
      %v2035 = vunpack.c.l.b16 %v1995
      %v2036 = vunpack.c.h.b16 %v1995
      %v2037 = vunpack.c.l.b16 %v1996
      %v2038 = vunpack.c.h.b16 %v1996
      %v2039 = vunpack.c.l.b16 %v1997
      %v2040 = vunpack.c.h.b16 %v1997
      %v2041 = vunpack.c.l.b16 %v1998
      %v2042 = vunpack.c.h.b16 %v1998
      %v2043 = vunpack.c.l.b16 %v1999
      %v2044 = vunpack.c.h.b16 %v1999
      %v2045 = vunpack.c.l.b16 %v2000
      %v2046 = vunpack.c.h.b16 %v2000
      %v2047 = vunpack.c.l.b16 %v2001
      %v2048 = vunpack.c.h.b16 %v2001
      %v2049 = vunpack.c.l.b16 %v2002
      %v2050 = vunpack.c.h.b16 %v2002
      %v2051 = vunpack.c.l.b16 %v2003
      %v2052 = vunpack.c.h.b16 %v2003
      %v2053 = vunpack.c.l.b16 %v2004
      %v2054 = vunpack.c.h.b16 %v2004
      %v2055 = vunpack.c.l.b16 %v2005
      %v2056 = vunpack.c.h.b16 %v2005
      %v2057 = vpack.c.b16 %v2023, %v2023
      %v2058 = vpack.c.b16 %v2024, %v2024
      %v2059 = vpack.c.b16 %v2025, %v2025
      %v2060 = vpack.c.b16 %v2026, %v2026
      %v2061 = vpack.c.b16 %v2027, %v2027
      %v2062 = vpack.c.b16 %v2028, %v2028
      %v2063 = vpack.c.b16 %v2029, %v2029
      %v2064 = vpack.c.b16 %v2030, %v2030
      %v2065 = vpack.c.b16 %v2031, %v2031
      %v2066 = vpack.c.b16 %v2032, %v2032
      %v2067 = vpack.c.b16 %v2033, %v2033
      %v2068 = vpack.c.b16 %v2034, %v2034
      %v2069 = vpack.c.b16 %v2035, %v2035
      %v2070 = vpack.c.b16 %v2036, %v2036
      %v2071 = vpack.c.b16 %v2037, %v2037
      %v2072 = vpack.c.b16 %v2038, %v2038
      %v2073 = vpack.c.b16 %v2039, %v2039
      %v2074 = vpack.c.b16 %v2040, %v2040
      %v2075 = vpack.c.b16 %v2041, %v2041
      %v2076 = vpack.c.b16 %v2042, %v2042
      %v2077 = vpack.c.b16 %v2043, %v2043
      %v2078 = vpack.c.b16 %v2044, %v2044
      %v2079 = vpack.c.b16 %v2045, %v2045
      %v2080 = vpack.c.b16 %v2046, %v2046
      %v2081 = vpack.c.b16 %v2047, %v2047
      %v2082 = vpack.c.b16 %v2048, %v2048
      %v2083 = vpack.c.b16 %v2049, %v2049
      %v2084 = vpack.c.b16 %v2050, %v2050
      %v2085 = vpack.c.b16 %v2051, %v2051
      %v2086 = vpack.c.b16 %v2052, %v2052
      %v2087 = vpack.c.b16 %v2053, %v2053
      %v2088 = vpack.c.b16 %v2054, %v2054
      %v2089 = vpack.c.b16 %v2055, %v2055
      %v2090 = vpack.c.b16 %v2056, %v2056
      %2125 = vst [vmem:[%s206] sm:$0xf] %v2057
      %2126 = vst [vmem:[%s206 + $0x4] sm:$0xf] %v2058
      %2127 = vst [vmem:[%s206 + $0x8] sm:$0xf] %v2059
      %2128 = vst [vmem:[%s206 + $0xc] sm:$0xf] %v2060
      %2129 = vst [vmem:[%s206 + $0x10] sm:$0xf] %v2061
      %2130 = vst [vmem:[%s206 + $0x14] sm:$0xf] %v2062
      %2131 = vst [vmem:[%s206 + $0x18] sm:$0xf] %v2063
      %2132 = vst [vmem:[%s206 + $0x1c] sm:$0xf] %v2064
      %2133 = vst [vmem:[%s206 + $0x20] sm:$0xf] %v2065
      %2134 = vst [vmem:[%s206 + $0x24] sm:$0xf] %v2066
      %2135 = vst [vmem:[%s206 + $0x28] sm:$0xf] %v2067
      %2136 = vst [vmem:[%s206 + $0x2c] sm:$0xf] %v2068
      %2137 = vst [vmem:[%s206 + $0x30] sm:$0xf] %v2069
      %2138 = vst [vmem:[%s206 + $0x34] sm:$0xf] %v2070
      %2139 = vst [vmem:[%s206 + $0x38] sm:$0xf] %v2071
      %2140 = vst [vmem:[%s206 + $0x3c] sm:$0xf] %v2072
      %2141 = vst [vmem:[%s206 + $0x40] sm:$0xf] %v2073
      %2142 = vst [vmem:[%s206 + $0x44] sm:$0xf] %v2074
      %2143 = vst [vmem:[%s206 + $0x48] sm:$0xf] %v2075
      %2144 = vst [vmem:[%s206 + $0x4c] sm:$0xf] %v2076
      %2145 = vst [vmem:[%s206 + $0x50] sm:$0xf] %v2077
      %2146 = vst [vmem:[%s206 + $0x54] sm:$0xf] %v2078
      %2147 = vst [vmem:[%s206 + $0x58] sm:$0xf] %v2079
      %2148 = vst [vmem:[%s206 + $0x5c] sm:$0xf] %v2080
      %2149 = vst [vmem:[%s206 + $0x60] sm:$0xf] %v2081
      %2150 = vst [vmem:[%s206 + $0x64] sm:$0xf] %v2082
      %2151 = vst [vmem:[%s206 + $0x68] sm:$0xf] %v2083
      %2152 = vst [vmem:[%s206 + $0x6c] sm:$0xf] %v2084
      %2153 = vst [vmem:[%s206 + $0x70] sm:$0xf] %v2085
      %2154 = vst [vmem:[%s206 + $0x74] sm:$0xf] %v2086
      %2155 = vst [vmem:[%s206 + $0x78] sm:$0xf] %v2087
      %2156 = vst [vmem:[%s206 + $0x7c] sm:$0xf] %v2088
      %2157 = vst [vmem:[%s206 + $0x80] sm:$0xf] %v2089
      %2158 = vst [vmem:[%s206 + $0x84] sm:$0xf] %v2090
      %p2159 = scmp.lt.s32.totalorder %s18, 1
      %s2160 = scalar_select %p2159, %s18, 1
      %p2161 = scmp.lt.s32.totalorder %s19, 0
      %s2162 = scalar_select %p2161, %s19, 0
      %s2163 = smul.addr %s2162, 34
      %s2164 = smul.addr %s2160, 34
      %s2165 = sadd.s32 %s2163, %s2164
      %s2166 = smul.addr %s2165, 4
      %s2167 = scalar_lea.vmem %s3, %s2166
      // Predicated region
      $region33: #{fc_discriminator_forward.5} parent=31 // pred_check
        %p2168 = pneg %p116
      $region34: #{fc_discriminator_forward.5} parent=31 // pred_check_branch
        %2170 = sbr.rel (%p2168) target = $region36
      $region35: #{fc_discriminator_forward.5} parent=31 // pred_region
        _
      $region36: #{fc_discriminator_forward.5} parent=31 // pred_fallthru
        _
    $region32: #{fc_discriminator_forward.5} parent=5 // pred_fallthru
      _
    %p2171 = scmp.le.s32.totalorder 2, %s9
    // Predicated region
    $region37: #{fc_discriminator_forward.5} parent=5 // pred_check
      %p2172 = pneg %p2171
    $region38: #{fc_discriminator_forward.5} parent=5 // pred_check_branch
      %2174 = sbr.rel (%p2172) target = $region40
    $region39: #{fc_discriminator_forward.5} parent=5 // pred_region
      %s2175 = ssub.s32 %s9, 2
      // Predicated region
      $region41: #{fc_discriminator_forward.5} parent=39 // pred_check
        %p2176 = pneg %p122
      $region42: #{fc_discriminator_forward.5} parent=39 // pred_check_branch
        %2178 = sbr.rel (%p2176) target = $region44
      $region43: #{fc_discriminator_forward.5} parent=39 // pred_region
        %p2179 = scmp.lt.s32.totalorder %s20, 1
        %s2180 = scalar_select %p2179, %s20, 1
        %p2181 = scmp.lt.s32.totalorder %s21, 0
        %s2182 = scalar_select %p2181, %s21, 0
        %s2183 = smul.addr %s2182, 34
        %s2184 = smul.addr %s2180, 34
        %s2185 = sadd.s32 %s2183, %s2184
        %s2186 = smul.addr %s2185, 4
        %s2187 = scalar_lea.vmem %s3, %s2186
      $region44: #{fc_discriminator_forward.5} parent=39 // pred_fallthru
        _
    $region40: #{fc_discriminator_forward.5} parent=5 // pred_fallthru
      _
  $region6: #{fc_discriminator_forward.5} parent=0 // loop_footer
    %s13 = sadd.s32 1, %s9
  $region7: #{fc_discriminator_forward.5} parent=0 // loop_footer_branch
    %8 = sbr.rel target = $region3
  $region8: #{fc_discriminator_forward.5} parent=0 // loop_exit
    _

// kernel: fc_discriminator_forward.6
$region0: #{fc_discriminator_forward.6}
  #allocation0 [shape = 'u32[]', space=smem, size = 0x4, offset = 0x4, fixed_abs, tag = 'smem constant byte address 0x4 - core index']
  #allocation1 [shape = 'u32[144,128]{1,0:T(1,128)}', space=vmem, size = 0x12000, scoped, tag = 'internal scratch']
  %s0 = inlined_call_operand.vmem [shape: bf16[2,1,82,128], index: 0, kind: input, shape index: {}]
  %s1 = inlined_call_operand.vmem [shape: bf16[4,128,128], index: 1, kind: input, shape index: {}]
  %s2 = inlined_call_operand.vmem [shape: f32[1,128], index: 2, kind: input, shape index: {}]
  %s3 = inlined_call_operand.vmem [shape: bf16[2,1,72,128], index: 3, kind: output, shape index: {}]
  %s4 = sld [smem:[#allocation0]]
  $region45: #{fc_discriminator_forward.6} parent=0
    _
  %s6 = ssub.s32 1, %s4
  %s7 = scalar_select 0, %s6, %s4
  loop: start=0, step=1, limit=4
  $region2: #{fc_discriminator_forward.6} parent=0 // loop_pre_header
    _
  $region3: #{fc_discriminator_forward.6} parent=0 // loop_header
    %s9 = sphi 0, %s13
    %p10 = scmp.ge.s32.totalorder %s9, 4
    %s16 = sphi 0, %s28
    %s17 = sphi 0, %s24
    %s18 = sphi 0, %s16
    %s19 = sphi 0, %s17
    %s20 = sphi 0, %s18
    %s21 = sphi 0, %s19
    %s33 = sphi 0, %s35
    %s36 = sphi 0, %s33
    %s37 = sphi 0, %s36
    %s53 = sphi 0, %s37
    %s57 = sphi 0, %s57
    %s59 = sphi 0, %s57
    %s60 = sphi 0, %s59
    %s74 = sphi 0, %s60
    %s78 = sphi 0, %s78
    %s80 = sphi 0, %s78
    %s81 = sphi 0, %s80
    %s95 = sphi 0, %s81
    %s103 = sphi 0, %s105
    %s106 = sphi 0, %s103
    %s107 = sphi 0, %s106
    %s123 = sphi 0, %s107
  $region4: #{fc_discriminator_forward.6} parent=0 // loop_header_branch
    %12 = sbr.rel (%p10) target = $region8
  $region5: #{fc_discriminator_forward.6} parent=0 // loop_body
    %s14 = ssub.s32 %s9, 1
    %s15 = ssub.s32 %s9, 2
    %s22 = sadd.s32 1, %s17
    %p23 = scmp.ge.s32.totalorder %s22, 1
    %s24 = scalar_select %p23, 0, %s22
    %s25 = sadd.s32 1, %s16
    %s26 = scalar_select %p23, %s25, %s16
    %p27 = scmp.ge.s32.totalorder %s26, 2
    %s28 = scalar_select %p27, 0, %s26
    %s29 = ssub.s32 %s16, %s28
    %s30 = ssub.s32 %s17, %s24
    %s31 = sor.u32 %s29, %s30
    %p32 = scmp.eq.s32.totalorder %s31, 0
    %s34 = sadd.s32 %s33, 1
    %s35 = scalar_select %p32, %s33, %s34
    %p38 = pneg %p32
    %p39 = scmp.eq.s32.totalorder %s9, 1
    %p40 = por %p38, %p39
    %p41 = scmp.ne.s32.totalorder %s33, %s36
    %p42 = scmp.eq.s32.totalorder %s9, 0
    %p43 = por %p41, %p42
    %p44 = scmp.ne.s32.totalorder %s33, %s36
    %p45 = scmp.eq.s32.totalorder %s14, 1
    %p46 = por %p44, %p45
    %p47 = scmp.ne.s32.totalorder %s36, %s37
    %p48 = scmp.eq.s32.totalorder %s14, 0
    %p49 = por %p47, %p48
    %p50 = scmp.ne.s32.totalorder %s36, %s37
    %p51 = scmp.eq.s32.totalorder %s15, 1
    %p52 = por %p50, %p51
    %p54 = scmp.ne.s32.totalorder %s37, %s53
    %p55 = scmp.eq.s32.totalorder %s15, 0
    %p56 = por %p54, %p55
    %s58 = sadd.s32 %s57, 1
    %p61 = scmp.eq.s32.totalorder %s9, 1
    %p62 = scmp.ne.s32.totalorder %s57, %s59
    %p63 = scmp.eq.s32.totalorder %s9, 0
    %p64 = por %p62, %p63
    %p65 = scmp.ne.s32.totalorder %s57, %s59
    %p66 = scmp.eq.s32.totalorder %s14, 1
    %p67 = por %p65, %p66
    %p68 = scmp.ne.s32.totalorder %s59, %s60
    %p69 = scmp.eq.s32.totalorder %s14, 0
    %p70 = por %p68, %p69
    %p71 = scmp.ne.s32.totalorder %s59, %s60
    %p72 = scmp.eq.s32.totalorder %s15, 1
    %p73 = por %p71, %p72
    %p75 = scmp.ne.s32.totalorder %s60, %s74
    %p76 = scmp.eq.s32.totalorder %s15, 0
    %p77 = por %p75, %p76
    %s79 = sadd.s32 %s78, 1
    %p82 = scmp.eq.s32.totalorder %s9, 1
    %p83 = scmp.ne.s32.totalorder %s78, %s80
    %p84 = scmp.eq.s32.totalorder %s9, 0
    %p85 = por %p83, %p84
    %p86 = scmp.ne.s32.totalorder %s78, %s80
    %p87 = scmp.eq.s32.totalorder %s14, 1
    %p88 = por %p86, %p87
    %p89 = scmp.ne.s32.totalorder %s80, %s81
    %p90 = scmp.eq.s32.totalorder %s14, 0
    %p91 = por %p89, %p90
    %p92 = scmp.ne.s32.totalorder %s80, %s81
    %p93 = scmp.eq.s32.totalorder %s15, 1
    %p94 = por %p92, %p93
    %p96 = scmp.ne.s32.totalorder %s81, %s95
    %p97 = scmp.eq.s32.totalorder %s15, 0
    %p98 = por %p96, %p97
    %s99 = ssub.s32 %s16, %s28
    %s100 = ssub.s32 %s17, %s24
    %s101 = sor.u32 %s99, %s100
    %p102 = scmp.eq.s32.totalorder %s101, 0
    %s104 = sadd.s32 %s103, 1
    %s105 = scalar_select %p102, %s103, %s104
    %p108 = pneg %p102
    %p109 = scmp.eq.s32.totalorder %s9, 1
    %p110 = por %p108, %p109
    %p111 = scmp.ne.s32.totalorder %s103, %s106
    %p112 = scmp.eq.s32.totalorder %s9, 0
    %p113 = por %p111, %p112
    %p114 = scmp.ne.s32.totalorder %s103, %s106
    %p115 = scmp.eq.s32.totalorder %s14, 1
    %p116 = por %p114, %p115
    %p117 = scmp.ne.s32.totalorder %s106, %s107
    %p118 = scmp.eq.s32.totalorder %s14, 0
    %p119 = por %p117, %p118
    %p120 = scmp.ne.s32.totalorder %s106, %s107
    %p121 = scmp.eq.s32.totalorder %s15, 1
    %p122 = por %p120, %p121
    %p124 = scmp.ne.s32.totalorder %s107, %s123
    %p125 = scmp.eq.s32.totalorder %s15, 0
    %p126 = por %p124, %p125
    %p127 = scmp.le.s32.totalorder 1, %s9
    %p128 = scmp.lt.s32.totalorder %s9, 3
    %p129 = pnand %p127, %p128
    %p130 = pneg %p129
    // Predicated region
    $region9: #{fc_discriminator_forward.6} parent=5 // pred_check
      _
    $region10: #{fc_discriminator_forward.6} parent=5 // pred_check_branch
      %132 = sbr.rel (%p129) target = $region12
    $region11: #{fc_discriminator_forward.6} parent=5 // pred_region
      %s133 = ssub.s32 %s9, 1
      // Predicated region
      $region13: #{fc_discriminator_forward.6} parent=11 // pred_check
        %p134 = pneg %p70
      $region14: #{fc_discriminator_forward.6} parent=11 // pred_check_branch
        %136 = sbr.rel (%p134) target = $region16
      $region15: #{fc_discriminator_forward.6} parent=11 // pred_region
        _
      $region16: #{fc_discriminator_forward.6} parent=11 // pred_fallthru
        _
      // Predicated region
      $region17: #{fc_discriminator_forward.6} parent=11 // pred_check
        %p137 = pneg %p91
      $region18: #{fc_discriminator_forward.6} parent=11 // pred_check_branch
        %139 = sbr.rel (%p137) target = $region20
      $region19: #{fc_discriminator_forward.6} parent=11 // pred_region
        _
      $region20: #{fc_discriminator_forward.6} parent=11 // pred_fallthru
        _
    $region12: #{fc_discriminator_forward.6} parent=5 // pred_fallthru
      _
    %p140 = scmp.lt.s32.totalorder %s9, 2
    // Predicated region
    $region21: #{fc_discriminator_forward.6} parent=5 // pred_check
      %p141 = pneg %p140
    $region22: #{fc_discriminator_forward.6} parent=5 // pred_check_branch
      %143 = sbr.rel (%p141) target = $region24
    $region23: #{fc_discriminator_forward.6} parent=5 // pred_region
      // Predicated region
      $region25: #{fc_discriminator_forward.6} parent=23 // pred_check
        %p144 = pneg %p43
      $region26: #{fc_discriminator_forward.6} parent=23 // pred_check_branch
        %146 = sbr.rel (%p144) target = $region28
      $region27: #{fc_discriminator_forward.6} parent=23 // pred_region
        %p147 = scmp.lt.s32.totalorder %s16, 1
        %s148 = scalar_select %p147, %s16, 1
        %p149 = scmp.lt.s32.totalorder %s17, 0
        %s150 = scalar_select %p149, %s17, 0
        %s151 = smul.addr %s150, 11
        %s152 = smul.addr %s148, 11
        %s153 = sadd.s32 %s151, %s152
        %s154 = smul.addr %s153, 4
        %s155 = scalar_lea.vmem %s0, %s154
      $region28: #{fc_discriminator_forward.6} parent=23 // pred_fallthru
        _
    $region24: #{fc_discriminator_forward.6} parent=5 // pred_fallthru
      _
    %p156 = scmp.le.s32.totalorder 1, %s9
    %p157 = scmp.lt.s32.totalorder %s9, 3
    %p158 = pnand %p156, %p157
    %p159 = pneg %p158
    // Predicated region
    $region29: #{fc_discriminator_forward.6} parent=5 // pred_check
      _
    $region30: #{fc_discriminator_forward.6} parent=5 // pred_check_branch
      %161 = sbr.rel (%p158) target = $region32
    $region31: #{fc_discriminator_forward.6} parent=5 // pred_region
      %s162 = ssub.s32 %s9, 1
      %p163 = scmp.lt.s32.totalorder %s18, 1
      %s164 = scalar_select %p163, %s18, 1
      %p165 = scmp.lt.s32.totalorder %s19, 0
      %s166 = scalar_select %p165, %s19, 0
      %s167 = smul.addr %s166, 11
      %s168 = smul.addr %s164, 11
      %s169 = sadd.s32 %s167, %s168
      %s170 = smul.addr %s169, 4
      %s171 = scalar_lea.vmem %s0, %s170
      %p172 = pneg %p49
      %p173 = pneg %p46
      %p174 = pneg %p70
      %p175 = pneg %p67
      %p176 = pneg %p91
      %p177 = pneg %p88
      %p178 = pneg %p119
      %p179 = pneg %p116
      %p180 = scmp.lt.s32.totalorder %s18, 1
      %s181 = scalar_select %p180, %s18, 1
      %p182 = scmp.lt.s32.totalorder %s19, 0
      %s183 = scalar_select %p182, %s19, 0
      %s184 = smul.addr %s183, 9
      %s185 = smul.addr %s181, 9
      %s186 = sadd.s32 %s184, %s185
      %s187 = smul.addr %s186, 4
      %s188 = scalar_lea.vmem %s3, %s187
      %p189 = scmp.lt.s32.totalorder %s18, 1
      %s190 = scalar_select %p189, %s18, 1
      %p191 = scmp.lt.s32.totalorder %s19, 0
      %s192 = scalar_select %p191, %s19, 0
      %s193 = smul.addr %s192, 11
      %s194 = smul.addr %s190, 11
      %s195 = sadd.s32 %s193, %s194
      %s196 = smul.addr %s195, 4
      %s197 = scalar_lea.vmem %s0, %s196
      %p198 = scmp.lt.s32.totalorder %s18, 1
      %s199 = scalar_select %p198, %s18, 1
      %p200 = scmp.lt.s32.totalorder %s19, 0
      %s201 = scalar_select %p200, %s19, 0
      %s202 = smul.addr %s201, 9
      %s203 = smul.addr %s199, 9
      %s204 = sadd.s32 %s202, %s203
      %s205 = smul.addr %s204, 4
      %s206 = scalar_lea.vmem %s3, %s205
      %v208 = vld [vmem:[%s197] sm:$0xf]
      %v209 = vld [vmem:[%s197 + $0x4] sm:$0xf]
      %v210 = vld [vmem:[%s197 + $0x8] sm:$0xf]
      %v211 = vld [vmem:[%s197 + $0xc] sm:$0xf]
      %v212 = vld [vmem:[%s197 + $0x10] sm:$0xf]
      %v213 = vld [vmem:[%s197 + $0x14] sm:$0xf]
      %v214 = vld [vmem:[%s197 + $0x18] sm:$0xf]
      %v215 = vld [vmem:[%s197 + $0x1c] sm:$0xf]
      %v216 = vld [vmem:[%s197 + $0x20] sm:$0xf]
      %v217 = vld [vmem:[%s1] sm:$0xf]
      %v218 = vld [vmem:[%s1 + $0x4] sm:$0xf]
      %v219 = vld [vmem:[%s1 + $0x8] sm:$0xf]
      %v220 = vld [vmem:[%s1 + $0xc] sm:$0xf]
      %v221 = vld [vmem:[%s1 + $0x10] sm:$0xf]
      %v222 = vld [vmem:[%s1 + $0x14] sm:$0xf]
      %v223 = vld [vmem:[%s1 + $0x18] sm:$0xf]
      %v224 = vld [vmem:[%s1 + $0x1c] sm:$0xf]
      %v225 = vld [vmem:[%s1 + $0x20] sm:$0xf]
      %v226 = vld [vmem:[%s1 + $0x24] sm:$0xf]
      %v227 = vld [vmem:[%s1 + $0x28] sm:$0xf]
      %v228 = vld [vmem:[%s1 + $0x2c] sm:$0xf]
      %v229 = vld [vmem:[%s1 + $0x30] sm:$0xf]
      %v230 = vld [vmem:[%s1 + $0x34] sm:$0xf]
      %v231 = vld [vmem:[%s1 + $0x38] sm:$0xf]
      %v232 = vld [vmem:[%s1 + $0x3c] sm:$0xf]
      %v233 = vld [vmem:[%s197 + $0x24] sm:$0x1]
      %s234 = scalar_lea.vmem %s1, 64
      %v235 = vld [vmem:[%s234] sm:$0xf]
      %v236 = vld [vmem:[%s234 + $0x4] sm:$0xf]
      %v237 = vld [vmem:[%s234 + $0x8] sm:$0xf]
      %v238 = vld [vmem:[%s234 + $0xc] sm:$0xf]
      %v239 = vld [vmem:[%s234 + $0x10] sm:$0xf]
      %v240 = vld [vmem:[%s234 + $0x14] sm:$0xf]
      %v241 = vld [vmem:[%s234 + $0x18] sm:$0xf]
      %v242 = vld [vmem:[%s234 + $0x1c] sm:$0xf]
      %v243 = vld [vmem:[%s234 + $0x20] sm:$0xf]
      %v244 = vld [vmem:[%s234 + $0x24] sm:$0xf]
      %v245 = vld [vmem:[%s234 + $0x28] sm:$0xf]
      %v246 = vld [vmem:[%s234 + $0x2c] sm:$0xf]
      %v247 = vld [vmem:[%s234 + $0x30] sm:$0xf]
      %v248 = vld [vmem:[%s234 + $0x34] sm:$0xf]
      %v249 = vld [vmem:[%s234 + $0x38] sm:$0xf]
      %v250 = vld [vmem:[%s234 + $0x3c] sm:$0xf]
      %v261 = vunpack.c.l.b16 %v208
      %v262 = vunpack.c.l.b16 %v209
      %v263 = vunpack.c.l.b16 %v210
      %v264 = vunpack.c.l.b16 %v211
      %v265 = vunpack.c.l.b16 %v212
      %v266 = vunpack.c.l.b16 %v213
      %v267 = vunpack.c.l.b16 %v214
      %v268 = vunpack.c.l.b16 %v215
      %v269 = vunpack.c.l.b16 %v216
      %v270 = vunpack.c.l.b16 %v233
      %v271 = vpack.c.b16 %v262, %v261
      %v272 = vpack.c.b16 %v264, %v263
      %v273 = vpack.c.b16 %v266, %v265
      %v274 = vpack.c.b16 %v268, %v267
      %v275 = vpack.c.b16 %v270, %v269
      %vm276 = vsmask.f32 7424
      %v278 = vshrl.u32 %v271, 16
      %v280 = vshll.u32 %v271, 16
      %v282 = vrot.slane %v280, 1
      %v283 = vor.u32 %v278, %v282
      %v285 = vshll.u32 %v272, 16
      %v287 = vrot.slane %v285, 1
      %v288 = vsel %vm276, %v283, %v287
      %v289 = vshrl.u32 %v272, 16
      %v291 = vor.u32 %v289, %v287
      %v293 = vshll.u32 %v273, 16
      %v295 = vrot.slane %v293, 1
      %v296 = vsel %vm276, %v291, %v295
      %v297 = vshrl.u32 %v273, 16
      %v299 = vor.u32 %v297, %v295
      %v301 = vshll.u32 %v274, 16
      %v303 = vrot.slane %v301, 1
      %v304 = vsel %vm276, %v299, %v303
      %v305 = vshrl.u32 %v274, 16
      %v307 = vor.u32 %v305, %v303
      %v309 = vshll.u32 %v275, 16
      %v311 = vrot.slane %v309, 1
      %v312 = vsel %vm276, %v307, %v311
      %v313 = vshrl.u32 %v275, 16
      %v315 = vor.u32 %v313, %v311
      %v337 = vunpack.c.l.b16 %v235
      %v338 = vunpack.c.l.b16 %v236
      %v339 = vunpack.c.l.b16 %v237
      %v340 = vunpack.c.l.b16 %v238
      %v341 = vunpack.c.l.b16 %v239
      %v342 = vunpack.c.l.b16 %v240
      %v343 = vunpack.c.l.b16 %v241
      %v344 = vunpack.c.l.b16 %v242
      %v345 = vunpack.c.l.b16 %v243
      %v346 = vunpack.c.l.b16 %v244
      %v347 = vunpack.c.l.b16 %v245
      %v348 = vunpack.c.l.b16 %v246
      %v349 = vunpack.c.l.b16 %v247
      %v350 = vunpack.c.l.b16 %v248
      %v351 = vunpack.c.l.b16 %v249
      %v352 = vunpack.c.l.b16 %v250
      %v353 = vpack.c.b16 %v338, %v337
      %v354 = vpack.c.b16 %v340, %v339
      %v355 = vpack.c.b16 %v342, %v341
      %v356 = vpack.c.b16 %v344, %v343
      %v357 = vpack.c.b16 %v346, %v345
      %v358 = vpack.c.b16 %v348, %v347
      %v359 = vpack.c.b16 %v350, %v349
      %v360 = vpack.c.b16 %v352, %v351
      %369 = vmatprep.subr.bf16.mxu0 0
      %370 = vmatpush1.bf16.msra.mxu0 %v360
      %371 = vmatprep.subr.bf16.mxu0 0
      %372 = vmatpush1.bf16.msra.mxu0 %v359
      %373 = vmatprep.subr.bf16.mxu0 0
      %374 = vmatpush1.bf16.msra.mxu0 %v358
      %375 = vmatprep.subr.bf16.mxu0 0
      %376 = vmatpush1.bf16.msra.mxu0 %v357
      %377 = vmatprep.subr.bf16.mxu0 0
      %378 = vmatpush1.bf16.msra.mxu0 %v356
      %379 = vmatprep.subr.bf16.mxu0 0
      %380 = vmatpush1.bf16.msra.mxu0 %v355
      %381 = vmatprep.subr.bf16.mxu0 0
      %382 = vmatpush1.bf16.msra.mxu0 %v354
      %383 = vmatprep.subr.bf16.mxu0 0
      %384 = vmatpush1.bf16.msra.mxu0 %v353
      %385 = vmatprep.subr.bf16.mxu0 0
      %386 = vmatpush2.bf16.msra.mxu0 0
      %387 = vmatprep.subr.bf16.mxu0 0
      %388 = vmatpush2.bf16.msra.mxu0 0
      %389 = vmatprep.subr.bf16.mxu0 0
      %390 = vmatpush2.bf16.msra.mxu0 0
      %391 = vmatprep.subr.bf16.mxu0 0
      %392 = vmatpush2.bf16.msra.mxu0 0
      %393 = vmatprep.subr.bf16.mxu0 0
      %394 = vmatpush2.bf16.msra.mxu0 0
      %395 = vmatprep.subr.bf16.mxu0 0
      %396 = vmatpush2.bf16.msra.mxu0 0
      %397 = vmatprep.subr.bf16.mxu0 0
      %398 = vmatpush2.bf16.msra.mxu0 0
      %399 = vmatprep.subr.bf16.mxu0 0
      %400 = vmatpush2.bf16.msra.mxu0 0
      %401 = vmatprep.mubr.bf16.mxu0 0
      %402 = vmatmul.mubr.bf16.gmra.mxu0 %v288
      %v403 = vpop.f32.mrf.mxu0
      %v404 = vadd.f32 0.0, %v403
      %v405 = vpop.f32.mrf.mxu0
      %v406 = vpop.f32.mrf.mxu0
      %v407 = vadd.f32 0.0, %v406
      %v408 = vpop.f32.mrf.mxu0
      %409 = vmatprep.mubr.bf16.mxu0 0
      %410 = vmatmul.mubr.bf16.gmra.mxu0 %v296
      %v411 = vpop.f32.mrf.mxu0
      %v412 = vadd.f32 0.0, %v411
      %v413 = vpop.f32.mrf.mxu0
      %v414 = vpop.f32.mrf.mxu0
      %v415 = vadd.f32 0.0, %v414
      %v416 = vpop.f32.mrf.mxu0
      %417 = vmatprep.mubr.bf16.mxu0 0
      %418 = vmatmul.mubr.bf16.gmra.mxu0 %v304
      %v419 = vpop.f32.mrf.mxu0
      %v420 = vadd.f32 0.0, %v419
      %v421 = vpop.f32.mrf.mxu0
      %v422 = vpop.f32.mrf.mxu0
      %v423 = vadd.f32 0.0, %v422
      %v424 = vpop.f32.mrf.mxu0
      %425 = vmatprep.mubr.bf16.mxu0 0
      %426 = vmatmul.mubr.bf16.gmra.mxu0 %v312
      %v427 = vpop.f32.mrf.mxu0
      %v428 = vadd.f32 0.0, %v427
      %v429 = vpop.f32.mrf.mxu0
      %v430 = vpop.f32.mrf.mxu0
      %v431 = vadd.f32 0.0, %v430
      %v432 = vpop.f32.mrf.mxu0
      %433 = vmatprep.mubr.bf16.mxu0 0
      %434 = vmatmul.mubr.bf16.gmra.mxu0 %v315
      %v435 = vpop.f32.mrf.mxu0
      %v436 = vadd.f32 0.0, %v435
      %v437 = vpop.f32.mrf.mxu0
      %v438 = vpop.f32.mrf.mxu0
      %v439 = vpop.f32.mrf.mxu0
      %440 = vdwg.mxu0
      %v441 = vpack.c.b16 %v269, %v269
      %v463 = vunpack.c.l.b16 %v217
      %v464 = vunpack.c.l.b16 %v218
      %v465 = vunpack.c.l.b16 %v219
      %v466 = vunpack.c.l.b16 %v220
      %v467 = vunpack.c.l.b16 %v221
      %v468 = vunpack.c.l.b16 %v222
      %v469 = vunpack.c.l.b16 %v223
      %v470 = vunpack.c.l.b16 %v224
      %v471 = vunpack.c.l.b16 %v225
      %v472 = vunpack.c.l.b16 %v226
      %v473 = vunpack.c.l.b16 %v227
      %v474 = vunpack.c.l.b16 %v228
      %v475 = vunpack.c.l.b16 %v229
      %v476 = vunpack.c.l.b16 %v230
      %v477 = vunpack.c.l.b16 %v231
      %v478 = vunpack.c.l.b16 %v232
      %v479 = vpack.c.b16 %v464, %v463
      %v480 = vpack.c.b16 %v466, %v465
      %v481 = vpack.c.b16 %v468, %v467
      %v482 = vpack.c.b16 %v470, %v469
      %v483 = vpack.c.b16 %v472, %v471
      %v484 = vpack.c.b16 %v474, %v473
      %v485 = vpack.c.b16 %v476, %v475
      %v486 = vpack.c.b16 %v478, %v477
      %495 = vmatprep.subr.bf16.mxu0 0
      %496 = vmatpush1.bf16.msra.mxu0 %v486
      %497 = vmatprep.subr.bf16.mxu0 0
      %498 = vmatpush1.bf16.msra.mxu0 %v485
      %499 = vmatprep.subr.bf16.mxu0 0
      %500 = vmatpush1.bf16.msra.mxu0 %v484
      %501 = vmatprep.subr.bf16.mxu0 0
      %502 = vmatpush1.bf16.msra.mxu0 %v483
      %503 = vmatprep.subr.bf16.mxu0 0
      %504 = vmatpush1.bf16.msra.mxu0 %v482
      %505 = vmatprep.subr.bf16.mxu0 0
      %506 = vmatpush1.bf16.msra.mxu0 %v481
      %507 = vmatprep.subr.bf16.mxu0 0
      %508 = vmatpush1.bf16.msra.mxu0 %v480
      %509 = vmatprep.subr.bf16.mxu0 0
      %510 = vmatpush1.bf16.msra.mxu0 %v479
      %511 = vmatprep.subr.bf16.mxu0 0
      %512 = vmatpush2.bf16.msra.mxu0 0
      %513 = vmatprep.subr.bf16.mxu0 0
      %514 = vmatpush2.bf16.msra.mxu0 0
      %515 = vmatprep.subr.bf16.mxu0 0
      %516 = vmatpush2.bf16.msra.mxu0 0
      %517 = vmatprep.subr.bf16.mxu0 0
      %518 = vmatpush2.bf16.msra.mxu0 0
      %519 = vmatprep.subr.bf16.mxu0 0
      %520 = vmatpush2.bf16.msra.mxu0 0
      %521 = vmatprep.subr.bf16.mxu0 0
      %522 = vmatpush2.bf16.msra.mxu0 0
      %523 = vmatprep.subr.bf16.mxu0 0
      %524 = vmatpush2.bf16.msra.mxu0 0
      %525 = vmatprep.subr.bf16.mxu0 0
      %526 = vmatpush2.bf16.msra.mxu0 0
      %527 = vmatprep.mubr.bf16.mxu0 0
      %528 = vmatmul.mubr.bf16.gmra.mxu0 %v271
      %v529 = vpop.f32.mrf.mxu0
      %v530 = vadd.f32 %v404, %v529
      %v531 = vpop.f32.mrf.mxu0
      %v532 = vpop.f32.mrf.mxu0
      %v533 = vadd.f32 %v407, %v532
      %v534 = vpop.f32.mrf.mxu0
      %535 = vmatprep.mubr.bf16.mxu0 0
      %536 = vmatmul.mubr.bf16.gmra.mxu0 %v272
      %v537 = vpop.f32.mrf.mxu0
      %v538 = vadd.f32 %v412, %v537
      %v539 = vpop.f32.mrf.mxu0
      %v540 = vpop.f32.mrf.mxu0
      %v541 = vadd.f32 %v415, %v540
      %v542 = vpop.f32.mrf.mxu0
      %543 = vmatprep.mubr.bf16.mxu0 0
      %544 = vmatmul.mubr.bf16.gmra.mxu0 %v273
      %v545 = vpop.f32.mrf.mxu0
      %v546 = vadd.f32 %v420, %v545
      %v547 = vpop.f32.mrf.mxu0
      %v548 = vpop.f32.mrf.mxu0
      %v549 = vadd.f32 %v423, %v548
      %v550 = vpop.f32.mrf.mxu0
      %551 = vmatprep.mubr.bf16.mxu0 0
      %552 = vmatmul.mubr.bf16.gmra.mxu0 %v274
      %v553 = vpop.f32.mrf.mxu0
      %v554 = vadd.f32 %v428, %v553
      %v555 = vpop.f32.mrf.mxu0
      %v556 = vpop.f32.mrf.mxu0
      %v557 = vadd.f32 %v431, %v556
      %v558 = vpop.f32.mrf.mxu0
      %559 = vmatprep.mubr.bf16.mxu0 0
      %560 = vmatmul.mubr.bf16.gmra.mxu0 %v441
      %v561 = vpop.f32.mrf.mxu0
      %v562 = vadd.f32 %v436, %v561
      %v563 = vpop.f32.mrf.mxu0
      %v564 = vpop.f32.mrf.mxu0
      %v565 = vpop.f32.mrf.mxu0
      %566 = vdwg.mxu0
      %v567 = vld [vmem:[%s197 + $0x4] sm:$0xf]
      %v568 = vld [vmem:[%s197 + $0x8] sm:$0xf]
      %v569 = vld [vmem:[%s197 + $0xc] sm:$0xf]
      %v570 = vld [vmem:[%s197 + $0x10] sm:$0xf]
      %v571 = vld [vmem:[%s197 + $0x14] sm:$0xf]
      %v572 = vld [vmem:[%s197 + $0x18] sm:$0xf]
      %v573 = vld [vmem:[%s197 + $0x1c] sm:$0xf]
      %v574 = vld [vmem:[%s197 + $0x20] sm:$0xf]
      %v575 = vld [vmem:[%s197 + $0x24] sm:$0xf]
      %v576 = vld [vmem:[%s197 + $0x28] sm:$0x1]
      %s577 = scalar_lea.vmem %s1, 128
      %v578 = vld [vmem:[%s577] sm:$0xf]
      %v579 = vld [vmem:[%s577 + $0x4] sm:$0xf]
      %v580 = vld [vmem:[%s577 + $0x8] sm:$0xf]
      %v581 = vld [vmem:[%s577 + $0xc] sm:$0xf]
      %v582 = vld [vmem:[%s577 + $0x10] sm:$0xf]
      %v583 = vld [vmem:[%s577 + $0x14] sm:$0xf]
      %v584 = vld [vmem:[%s577 + $0x18] sm:$0xf]
      %v585 = vld [vmem:[%s577 + $0x1c] sm:$0xf]
      %v586 = vld [vmem:[%s577 + $0x20] sm:$0xf]
      %v587 = vld [vmem:[%s577 + $0x24] sm:$0xf]
      %v588 = vld [vmem:[%s577 + $0x28] sm:$0xf]
      %v589 = vld [vmem:[%s577 + $0x2c] sm:$0xf]
      %v590 = vld [vmem:[%s577 + $0x30] sm:$0xf]
      %v591 = vld [vmem:[%s577 + $0x34] sm:$0xf]
      %v592 = vld [vmem:[%s577 + $0x38] sm:$0xf]
      %v593 = vld [vmem:[%s577 + $0x3c] sm:$0xf]
      %v604 = vunpack.c.l.b16 %v567
      %v605 = vunpack.c.l.b16 %v568
      %v606 = vunpack.c.l.b16 %v569
      %v607 = vunpack.c.l.b16 %v570
      %v608 = vunpack.c.l.b16 %v571
      %v609 = vunpack.c.l.b16 %v572
      %v610 = vunpack.c.l.b16 %v573
      %v611 = vunpack.c.l.b16 %v574
      %v612 = vunpack.c.l.b16 %v575
      %v613 = vunpack.c.l.b16 %v576
      %v614 = vpack.c.b16 %v605, %v604
      %v615 = vpack.c.b16 %v607, %v606
      %v616 = vpack.c.b16 %v609, %v608
      %v617 = vpack.c.b16 %v611, %v610
      %v618 = vpack.c.b16 %v613, %v612
      %v620 = vshrl.u32 %v614, 16
      %v622 = vshll.u32 %v614, 16
      %v624 = vrot.slane %v622, 1
      %v625 = vor.u32 %v620, %v624
      %v627 = vshll.u32 %v615, 16
      %v629 = vrot.slane %v627, 1
      %v630 = vsel %vm276, %v625, %v629
      %v631 = vshrl.u32 %v615, 16
      %v633 = vor.u32 %v631, %v629
      %v635 = vshll.u32 %v616, 16
      %v637 = vrot.slane %v635, 1
      %v638 = vsel %vm276, %v633, %v637
      %v639 = vshrl.u32 %v616, 16
      %v641 = vor.u32 %v639, %v637
      %v643 = vshll.u32 %v617, 16
      %v645 = vrot.slane %v643, 1
      %v646 = vsel %vm276, %v641, %v645
      %v647 = vshrl.u32 %v617, 16
      %v649 = vor.u32 %v647, %v645
      %v651 = vshll.u32 %v618, 16
      %v653 = vrot.slane %v651, 1
      %v654 = vsel %vm276, %v649, %v653
      %v655 = vshrl.u32 %v618, 16
      %v657 = vor.u32 %v655, %v653
      %v679 = vunpack.c.l.b16 %v578
      %v680 = vunpack.c.l.b16 %v579
      %v681 = vunpack.c.l.b16 %v580
      %v682 = vunpack.c.l.b16 %v581
      %v683 = vunpack.c.l.b16 %v582
      %v684 = vunpack.c.l.b16 %v583
      %v685 = vunpack.c.l.b16 %v584
      %v686 = vunpack.c.l.b16 %v585
      %v687 = vunpack.c.l.b16 %v586
      %v688 = vunpack.c.l.b16 %v587
      %v689 = vunpack.c.l.b16 %v588
      %v690 = vunpack.c.l.b16 %v589
      %v691 = vunpack.c.l.b16 %v590
      %v692 = vunpack.c.l.b16 %v591
      %v693 = vunpack.c.l.b16 %v592
      %v694 = vunpack.c.l.b16 %v593
      %v695 = vpack.c.b16 %v680, %v679
      %v696 = vpack.c.b16 %v682, %v681
      %v697 = vpack.c.b16 %v684, %v683
      %v698 = vpack.c.b16 %v686, %v685
      %v699 = vpack.c.b16 %v688, %v687
      %v700 = vpack.c.b16 %v690, %v689
      %v701 = vpack.c.b16 %v692, %v691
      %v702 = vpack.c.b16 %v694, %v693
      %711 = vmatprep.subr.bf16.mxu0 0
      %712 = vmatpush1.bf16.msra.mxu0 %v702
      %713 = vmatprep.subr.bf16.mxu0 0
      %714 = vmatpush1.bf16.msra.mxu0 %v701
      %715 = vmatprep.subr.bf16.mxu0 0
      %716 = vmatpush1.bf16.msra.mxu0 %v700
      %717 = vmatprep.subr.bf16.mxu0 0
      %718 = vmatpush1.bf16.msra.mxu0 %v699
      %719 = vmatprep.subr.bf16.mxu0 0
      %720 = vmatpush1.bf16.msra.mxu0 %v698
      %721 = vmatprep.subr.bf16.mxu0 0
      %722 = vmatpush1.bf16.msra.mxu0 %v697
      %723 = vmatprep.subr.bf16.mxu0 0
      %724 = vmatpush1.bf16.msra.mxu0 %v696
      %725 = vmatprep.subr.bf16.mxu0 0
      %726 = vmatpush1.bf16.msra.mxu0 %v695
      %727 = vmatprep.subr.bf16.mxu0 0
      %728 = vmatpush2.bf16.msra.mxu0 0
      %729 = vmatprep.subr.bf16.mxu0 0
      %730 = vmatpush2.bf16.msra.mxu0 0
      %731 = vmatprep.subr.bf16.mxu0 0
      %732 = vmatpush2.bf16.msra.mxu0 0
      %733 = vmatprep.subr.bf16.mxu0 0
      %734 = vmatpush2.bf16.msra.mxu0 0
      %735 = vmatprep.subr.bf16.mxu0 0
      %736 = vmatpush2.bf16.msra.mxu0 0
      %737 = vmatprep.subr.bf16.mxu0 0
      %738 = vmatpush2.bf16.msra.mxu0 0
      %739 = vmatprep.subr.bf16.mxu0 0
      %740 = vmatpush2.bf16.msra.mxu0 0
      %741 = vmatprep.subr.bf16.mxu0 0
      %742 = vmatpush2.bf16.msra.mxu0 0
      %743 = vmatprep.mubr.bf16.mxu0 0
      %744 = vmatmul.mubr.bf16.gmra.mxu0 %v630
      %v745 = vpop.f32.mrf.mxu0
      %v746 = vadd.f32 0.0, %v745
      %v747 = vpop.f32.mrf.mxu0
      %v748 = vpop.f32.mrf.mxu0
      %v749 = vadd.f32 0.0, %v748
      %v750 = vpop.f32.mrf.mxu0
      %751 = vmatprep.mubr.bf16.mxu0 0
      %752 = vmatmul.mubr.bf16.gmra.mxu0 %v638
      %v753 = vpop.f32.mrf.mxu0
      %v754 = vadd.f32 0.0, %v753
      %v755 = vpop.f32.mrf.mxu0
      %v756 = vpop.f32.mrf.mxu0
      %v757 = vadd.f32 0.0, %v756
      %v758 = vpop.f32.mrf.mxu0
      %759 = vmatprep.mubr.bf16.mxu0 0
      %760 = vmatmul.mubr.bf16.gmra.mxu0 %v646
      %v761 = vpop.f32.mrf.mxu0
      %v762 = vadd.f32 0.0, %v761
      %v763 = vpop.f32.mrf.mxu0
      %v764 = vpop.f32.mrf.mxu0
      %v765 = vadd.f32 0.0, %v764
      %v766 = vpop.f32.mrf.mxu0
      %767 = vmatprep.mubr.bf16.mxu0 0
      %768 = vmatmul.mubr.bf16.gmra.mxu0 %v654
      %v769 = vpop.f32.mrf.mxu0
      %v770 = vadd.f32 0.0, %v769
      %v771 = vpop.f32.mrf.mxu0
      %v772 = vpop.f32.mrf.mxu0
      %v773 = vadd.f32 0.0, %v772
      %v774 = vpop.f32.mrf.mxu0
      %775 = vmatprep.mubr.bf16.mxu0 0
      %776 = vmatmul.mubr.bf16.gmra.mxu0 %v657
      %v777 = vpop.f32.mrf.mxu0
      %v778 = vadd.f32 0.0, %v777
      %v779 = vpop.f32.mrf.mxu0
      %v780 = vpop.f32.mrf.mxu0
      %v781 = vpop.f32.mrf.mxu0
      %782 = vdwg.mxu0
      %v783 = vadd.f32 %v530, %v746
      %v784 = vadd.f32 %v533, %v749
      %v785 = vadd.f32 %v538, %v754
      %v786 = vadd.f32 %v541, %v757
      %v787 = vadd.f32 %v546, %v762
      %v788 = vadd.f32 %v549, %v765
      %v789 = vadd.f32 %v554, %v770
      %v790 = vadd.f32 %v557, %v773
      %v791 = vadd.f32 %v562, %v778
      %v792 = vld [vmem:[%s197 + $0x4] sm:$0xe]
      %s793 = scalar_lea.vmem %s1, 192
      %v794 = vld [vmem:[%s793] sm:$0xf]
      %v795 = vld [vmem:[%s793 + $0x4] sm:$0xf]
      %v796 = vld [vmem:[%s793 + $0x8] sm:$0xf]
      %v797 = vld [vmem:[%s793 + $0xc] sm:$0xf]
      %v798 = vld [vmem:[%s793 + $0x10] sm:$0xf]
      %v799 = vld [vmem:[%s793 + $0x14] sm:$0xf]
      %v800 = vld [vmem:[%s793 + $0x18] sm:$0xf]
      %v801 = vld [vmem:[%s793 + $0x1c] sm:$0xf]
      %v802 = vld [vmem:[%s793 + $0x20] sm:$0xf]
      %v803 = vld [vmem:[%s793 + $0x24] sm:$0xf]
      %v804 = vld [vmem:[%s793 + $0x28] sm:$0xf]
      %v805 = vld [vmem:[%s793 + $0x2c] sm:$0xf]
      %v806 = vld [vmem:[%s793 + $0x30] sm:$0xf]
      %v807 = vld [vmem:[%s793 + $0x34] sm:$0xf]
      %v808 = vld [vmem:[%s793 + $0x38] sm:$0xf]
      %v809 = vld [vmem:[%s793 + $0x3c] sm:$0xf]
      %v811 = vunpack.c.l.b16 %v792
      %v812 = vpack.c.b16 %v605, %v811
      %vm813 = vcmask 1046528
      %v814 = vrot.slane %v812, 1
      %v815 = vrot.slane %v615, 1
      %v816 = vsel %vm813, %v814, %v815
      %v817 = vrot.slane %v616, 1
      %v818 = vsel %vm813, %v815, %v817
      %v819 = vrot.slane %v617, 1
      %v820 = vsel %vm813, %v817, %v819
      %v821 = vrot.slane %v618, 1
      %v822 = vsel %vm813, %v819, %v821
      %v844 = vunpack.c.l.b16 %v794
      %v845 = vunpack.c.l.b16 %v795
      %v846 = vunpack.c.l.b16 %v796
      %v847 = vunpack.c.l.b16 %v797
      %v848 = vunpack.c.l.b16 %v798
      %v849 = vunpack.c.l.b16 %v799
      %v850 = vunpack.c.l.b16 %v800
      %v851 = vunpack.c.l.b16 %v801
      %v852 = vunpack.c.l.b16 %v802
      %v853 = vunpack.c.l.b16 %v803
      %v854 = vunpack.c.l.b16 %v804
      %v855 = vunpack.c.l.b16 %v805
      %v856 = vunpack.c.l.b16 %v806
      %v857 = vunpack.c.l.b16 %v807
      %v858 = vunpack.c.l.b16 %v808
      %v859 = vunpack.c.l.b16 %v809
      %v860 = vpack.c.b16 %v845, %v844
      %v861 = vpack.c.b16 %v847, %v846
      %v862 = vpack.c.b16 %v849, %v848
      %v863 = vpack.c.b16 %v851, %v850
      %v864 = vpack.c.b16 %v853, %v852
      %v865 = vpack.c.b16 %v855, %v854
      %v866 = vpack.c.b16 %v857, %v856
      %v867 = vpack.c.b16 %v859, %v858
      %876 = vmatprep.subr.bf16.mxu0 0
      %877 = vmatpush1.bf16.msra.mxu0 %v867
      %878 = vmatprep.subr.bf16.mxu0 0
      %879 = vmatpush1.bf16.msra.mxu0 %v866
      %880 = vmatprep.subr.bf16.mxu0 0
      %881 = vmatpush1.bf16.msra.mxu0 %v865
      %882 = vmatprep.subr.bf16.mxu0 0
      %883 = vmatpush1.bf16.msra.mxu0 %v864
      %884 = vmatprep.subr.bf16.mxu0 0
      %885 = vmatpush1.bf16.msra.mxu0 %v863
      %886 = vmatprep.subr.bf16.mxu0 0
      %887 = vmatpush1.bf16.msra.mxu0 %v862
      %888 = vmatprep.subr.bf16.mxu0 0
      %889 = vmatpush1.bf16.msra.mxu0 %v861
      %890 = vmatprep.subr.bf16.mxu0 0
      %891 = vmatpush1.bf16.msra.mxu0 %v860
      %892 = vmatprep.subr.bf16.mxu0 0
      %893 = vmatpush2.bf16.msra.mxu0 0
      %894 = vmatprep.subr.bf16.mxu0 0
      %895 = vmatpush2.bf16.msra.mxu0 0
      %896 = vmatprep.subr.bf16.mxu0 0
      %897 = vmatpush2.bf16.msra.mxu0 0
      %898 = vmatprep.subr.bf16.mxu0 0
      %899 = vmatpush2.bf16.msra.mxu0 0
      %900 = vmatprep.subr.bf16.mxu0 0
      %901 = vmatpush2.bf16.msra.mxu0 0
      %902 = vmatprep.subr.bf16.mxu0 0
      %903 = vmatpush2.bf16.msra.mxu0 0
      %904 = vmatprep.subr.bf16.mxu0 0
      %905 = vmatpush2.bf16.msra.mxu0 0
      %906 = vmatprep.subr.bf16.mxu0 0
      %907 = vmatpush2.bf16.msra.mxu0 0
      %908 = vmatprep.mubr.bf16.mxu0 0
      %909 = vmatmul.mubr.bf16.gmra.mxu0 %v816
      %v910 = vpop.f32.mrf.mxu0
      %v911 = vadd.f32 0.0, %v910
      %v912 = vpop.f32.mrf.mxu0
      %v913 = vpop.f32.mrf.mxu0
      %v914 = vadd.f32 0.0, %v913
      %v915 = vpop.f32.mrf.mxu0
      %916 = vmatprep.mubr.bf16.mxu0 0
      %917 = vmatmul.mubr.bf16.gmra.mxu0 %v818
      %v918 = vpop.f32.mrf.mxu0
      %v919 = vadd.f32 0.0, %v918
      %v920 = vpop.f32.mrf.mxu0
      %v921 = vpop.f32.mrf.mxu0
      %v922 = vadd.f32 0.0, %v921
      %v923 = vpop.f32.mrf.mxu0
      %924 = vmatprep.mubr.bf16.mxu0 0
      %925 = vmatmul.mubr.bf16.gmra.mxu0 %v820
      %v926 = vpop.f32.mrf.mxu0
      %v927 = vadd.f32 0.0, %v926
      %v928 = vpop.f32.mrf.mxu0
      %v929 = vpop.f32.mrf.mxu0
      %v930 = vadd.f32 0.0, %v929
      %v931 = vpop.f32.mrf.mxu0
      %932 = vmatprep.mubr.bf16.mxu0 0
      %933 = vmatmul.mubr.bf16.gmra.mxu0 %v822
      %v934 = vpop.f32.mrf.mxu0
      %v935 = vadd.f32 0.0, %v934
      %v936 = vpop.f32.mrf.mxu0
      %v937 = vpop.f32.mrf.mxu0
      %v938 = vadd.f32 0.0, %v937
      %v939 = vpop.f32.mrf.mxu0
      %940 = vmatprep.mubr.bf16.mxu0 0
      %941 = vmatmul.mubr.bf16.gmra.mxu0 %v821
      %v942 = vpop.f32.mrf.mxu0
      %v943 = vadd.f32 0.0, %v942
      %v944 = vpop.f32.mrf.mxu0
      %v945 = vpop.f32.mrf.mxu0
      %v946 = vpop.f32.mrf.mxu0
      %947 = vdwg.mxu0
      %v948 = vadd.f32 %v783, %v911
      %v949 = vadd.f32 %v784, %v914
      %v950 = vadd.f32 %v785, %v919
      %v951 = vadd.f32 %v786, %v922
      %v952 = vadd.f32 %v787, %v927
      %v953 = vadd.f32 %v788, %v930
      %v954 = vadd.f32 %v789, %v935
      %v955 = vadd.f32 %v790, %v938
      %v956 = vadd.f32 %v791, %v943
      %v957 = vld [vmem:[%s2] sm:$0x1]
      %v959 = vlaneseq
      %v960 = vshrl.u32 %v959, 7
      %v961 = vsub.s32 0, %v960
      %v962 = vrot.slane %v957, %v961
      %v964 = vadd.f32 %v948, %v962
      %v965 = vadd.f32 %v949, %v962
      %v966 = vadd.f32 %v950, %v962
      %v967 = vadd.f32 %v951, %v962
      %v968 = vadd.f32 %v952, %v962
      %v969 = vadd.f32 %v953, %v962
      %v970 = vadd.f32 %v954, %v962
      %v971 = vadd.f32 %v955, %v962
      %v972 = vadd.f32 %v956, %v962
      %vm973 = vcmp.gt.f32.partialorder %v964, 0.0
      %vm974 = vcmp.gt.f32.partialorder %v965, 0.0
      %vm975 = vcmp.gt.f32.partialorder %v966, 0.0
      %vm976 = vcmp.gt.f32.partialorder %v967, 0.0
      %vm977 = vcmp.gt.f32.partialorder %v968, 0.0
      %vm978 = vcmp.gt.f32.partialorder %v969, 0.0
      %vm979 = vcmp.gt.f32.partialorder %v970, 0.0
      %vm980 = vcmp.gt.f32.partialorder %v971, 0.0
      %vm981 = vcmp.gt.f32.partialorder %v972, 0.0
      %v982 = vmul.f32 %v964, 0.2
      %v983 = vmul.f32 %v965, 0.2
      %v984 = vmul.f32 %v966, 0.2
      %v985 = vmul.f32 %v967, 0.2
      %v986 = vmul.f32 %v968, 0.2
      %v987 = vmul.f32 %v969, 0.2
      %v988 = vmul.f32 %v970, 0.2
      %v989 = vmul.f32 %v971, 0.2
      %v990 = vmul.f32 %v972, 0.2
      %v991 = vsel %vm973, %v964, %v982
      %v992 = vsel %vm974, %v965, %v983
      %v993 = vsel %vm975, %v966, %v984
      %v994 = vsel %vm976, %v967, %v985
      %v995 = vsel %vm977, %v968, %v986
      %v996 = vsel %vm978, %v969, %v987
      %v997 = vsel %vm979, %v970, %v988
      %v998 = vsel %vm980, %v971, %v989
      %v999 = vsel %vm981, %v972, %v990
      %v1000 = vpack.c.bf16 %v992, %v991
      %v1001 = vpack.c.bf16 %v994, %v993
      %v1002 = vpack.c.bf16 %v996, %v995
      %v1003 = vpack.c.bf16 %v998, %v997
      %v1004 = vpack.c.bf16 %v999, %v999
      %v1010 = vunpack.c.l.b16 %v1000
      %v1011 = vunpack.c.h.b16 %v1000
      %v1012 = vunpack.c.l.b16 %v1001
      %v1013 = vunpack.c.h.b16 %v1001
      %v1014 = vunpack.c.l.b16 %v1002
      %v1015 = vunpack.c.h.b16 %v1002
      %v1016 = vunpack.c.l.b16 %v1003
      %v1017 = vunpack.c.h.b16 %v1003
      %v1018 = vunpack.c.l.b16 %v1004
      %v1019 = vpack.c.b16 %v1010, %v1010
      %v1020 = vpack.c.b16 %v1011, %v1011
      %v1021 = vpack.c.b16 %v1012, %v1012
      %v1022 = vpack.c.b16 %v1013, %v1013
      %v1023 = vpack.c.b16 %v1014, %v1014
      %v1024 = vpack.c.b16 %v1015, %v1015
      %v1025 = vpack.c.b16 %v1016, %v1016
      %v1026 = vpack.c.b16 %v1017, %v1017
      %v1027 = vpack.c.b16 %v1018, %v1018
      %1037 = vst [vmem:[%s206] sm:$0xf] %v1019
      %1038 = vst [vmem:[%s206 + $0x4] sm:$0xf] %v1020
      %1039 = vst [vmem:[%s206 + $0x8] sm:$0xf] %v1021
      %1040 = vst [vmem:[%s206 + $0xc] sm:$0xf] %v1022
      %1041 = vst [vmem:[%s206 + $0x10] sm:$0xf] %v1023
      %1042 = vst [vmem:[%s206 + $0x14] sm:$0xf] %v1024
      %1043 = vst [vmem:[%s206 + $0x18] sm:$0xf] %v1025
      %1044 = vst [vmem:[%s206 + $0x1c] sm:$0xf] %v1026
      %1045 = vst [vmem:[%s206 + $0x20] sm:$0xf] %v1027
      %p1046 = scmp.lt.s32.totalorder %s18, 1
      %s1047 = scalar_select %p1046, %s18, 1
      %p1048 = scmp.lt.s32.totalorder %s19, 0
      %s1049 = scalar_select %p1048, %s19, 0
      %s1050 = smul.addr %s1049, 9
      %s1051 = smul.addr %s1047, 9
      %s1052 = sadd.s32 %s1050, %s1051
      %s1053 = smul.addr %s1052, 4
      %s1054 = scalar_lea.vmem %s3, %s1053
      // Predicated region
      $region33: #{fc_discriminator_forward.6} parent=31 // pred_check
        %p1055 = pneg %p116
      $region34: #{fc_discriminator_forward.6} parent=31 // pred_check_branch
        %1057 = sbr.rel (%p1055) target = $region36
      $region35: #{fc_discriminator_forward.6} parent=31 // pred_region
        _
      $region36: #{fc_discriminator_forward.6} parent=31 // pred_fallthru
        _
    $region32: #{fc_discriminator_forward.6} parent=5 // pred_fallthru
      _
    %p1058 = scmp.le.s32.totalorder 2, %s9
    // Predicated region
    $region37: #{fc_discriminator_forward.6} parent=5 // pred_check
      %p1059 = pneg %p1058
    $region38: #{fc_discriminator_forward.6} parent=5 // pred_check_branch
      %1061 = sbr.rel (%p1059) target = $region40
    $region39: #{fc_discriminator_forward.6} parent=5 // pred_region
      %s1062 = ssub.s32 %s9, 2
      // Predicated region
      $region41: #{fc_discriminator_forward.6} parent=39 // pred_check
        %p1063 = pneg %p122
      $region42: #{fc_discriminator_forward.6} parent=39 // pred_check_branch
        %1065 = sbr.rel (%p1063) target = $region44
      $region43: #{fc_discriminator_forward.6} parent=39 // pred_region
        %p1066 = scmp.lt.s32.totalorder %s20, 1
        %s1067 = scalar_select %p1066, %s20, 1
        %p1068 = scmp.lt.s32.totalorder %s21, 0
        %s1069 = scalar_select %p1068, %s21, 0
        %s1070 = smul.addr %s1069, 9
        %s1071 = smul.addr %s1067, 9
        %s1072 = sadd.s32 %s1070, %s1071
        %s1073 = smul.addr %s1072, 4
        %s1074 = scalar_lea.vmem %s3, %s1073
      $region44: #{fc_discriminator_forward.6} parent=39 // pred_fallthru
        _
    $region40: #{fc_discriminator_forward.6} parent=5 // pred_fallthru
      _
  $region6: #{fc_discriminator_forward.6} parent=0 // loop_footer
    %s13 = sadd.s32 1, %s9
  $region7: #{fc_discriminator_forward.6} parent=0 // loop_footer_branch
    %8 = sbr.rel target = $region3
  $region8: #{fc_discriminator_forward.6} parent=0 // loop_exit
    _

// kernel: fc_discriminator_forward.7
$region0: #{fc_discriminator_forward.7}
  #allocation0 [shape = 'u32[]', space=smem, size = 0x4, offset = 0x4, fixed_abs, tag = 'smem constant byte address 0x4 - core index']
  #allocation1 [shape = 'u32[144,128]{1,0:T(1,128)}', space=vmem, size = 0x12000, scoped, tag = 'internal scratch']
  %s0 = inlined_call_operand.vmem [shape: bf16[2,1,26,128], index: 0, kind: input, shape index: {}]
  %s1 = inlined_call_operand.vmem [shape: bf16[4,128,128], index: 1, kind: input, shape index: {}]
  %s2 = inlined_call_operand.vmem [shape: f32[1,128], index: 2, kind: input, shape index: {}]
  %s3 = inlined_call_operand.vmem [shape: bf16[2,1,20,128], index: 3, kind: output, shape index: {}]
  %s4 = sld [smem:[#allocation0]]
  $region45: #{fc_discriminator_forward.7} parent=0
    _
  %s6 = ssub.s32 1, %s4
  %s7 = scalar_select 0, %s6, %s4
  loop: start=0, step=1, limit=4
  $region2: #{fc_discriminator_forward.7} parent=0 // loop_pre_header
    _
  $region3: #{fc_discriminator_forward.7} parent=0 // loop_header
    %s9 = sphi 0, %s13
    %p10 = scmp.ge.s32.totalorder %s9, 4
    %s16 = sphi 0, %s28
    %s17 = sphi 0, %s24
    %s18 = sphi 0, %s16
    %s19 = sphi 0, %s17
    %s20 = sphi 0, %s18
    %s21 = sphi 0, %s19
    %s33 = sphi 0, %s35
    %s36 = sphi 0, %s33
    %s37 = sphi 0, %s36
    %s53 = sphi 0, %s37
    %s57 = sphi 0, %s57
    %s59 = sphi 0, %s57
    %s60 = sphi 0, %s59
    %s74 = sphi 0, %s60
    %s78 = sphi 0, %s78
    %s80 = sphi 0, %s78
    %s81 = sphi 0, %s80
    %s95 = sphi 0, %s81
    %s103 = sphi 0, %s105
    %s106 = sphi 0, %s103
    %s107 = sphi 0, %s106
    %s123 = sphi 0, %s107
  $region4: #{fc_discriminator_forward.7} parent=0 // loop_header_branch
    %12 = sbr.rel (%p10) target = $region8
  $region5: #{fc_discriminator_forward.7} parent=0 // loop_body
    %s14 = ssub.s32 %s9, 1
    %s15 = ssub.s32 %s9, 2
    %s22 = sadd.s32 1, %s17
    %p23 = scmp.ge.s32.totalorder %s22, 1
    %s24 = scalar_select %p23, 0, %s22
    %s25 = sadd.s32 1, %s16
    %s26 = scalar_select %p23, %s25, %s16
    %p27 = scmp.ge.s32.totalorder %s26, 2
    %s28 = scalar_select %p27, 0, %s26
    %s29 = ssub.s32 %s16, %s28
    %s30 = ssub.s32 %s17, %s24
    %s31 = sor.u32 %s29, %s30
    %p32 = scmp.eq.s32.totalorder %s31, 0
    %s34 = sadd.s32 %s33, 1
    %s35 = scalar_select %p32, %s33, %s34
    %p38 = pneg %p32
    %p39 = scmp.eq.s32.totalorder %s9, 1
    %p40 = por %p38, %p39
    %p41 = scmp.ne.s32.totalorder %s33, %s36
    %p42 = scmp.eq.s32.totalorder %s9, 0
    %p43 = por %p41, %p42
    %p44 = scmp.ne.s32.totalorder %s33, %s36
    %p45 = scmp.eq.s32.totalorder %s14, 1
    %p46 = por %p44, %p45
    %p47 = scmp.ne.s32.totalorder %s36, %s37
    %p48 = scmp.eq.s32.totalorder %s14, 0
    %p49 = por %p47, %p48
    %p50 = scmp.ne.s32.totalorder %s36, %s37
    %p51 = scmp.eq.s32.totalorder %s15, 1
    %p52 = por %p50, %p51
    %p54 = scmp.ne.s32.totalorder %s37, %s53
    %p55 = scmp.eq.s32.totalorder %s15, 0
    %p56 = por %p54, %p55
    %s58 = sadd.s32 %s57, 1
    %p61 = scmp.eq.s32.totalorder %s9, 1
    %p62 = scmp.ne.s32.totalorder %s57, %s59
    %p63 = scmp.eq.s32.totalorder %s9, 0
    %p64 = por %p62, %p63
    %p65 = scmp.ne.s32.totalorder %s57, %s59
    %p66 = scmp.eq.s32.totalorder %s14, 1
    %p67 = por %p65, %p66
    %p68 = scmp.ne.s32.totalorder %s59, %s60
    %p69 = scmp.eq.s32.totalorder %s14, 0
    %p70 = por %p68, %p69
    %p71 = scmp.ne.s32.totalorder %s59, %s60
    %p72 = scmp.eq.s32.totalorder %s15, 1
    %p73 = por %p71, %p72
    %p75 = scmp.ne.s32.totalorder %s60, %s74
    %p76 = scmp.eq.s32.totalorder %s15, 0
    %p77 = por %p75, %p76
    %s79 = sadd.s32 %s78, 1
    %p82 = scmp.eq.s32.totalorder %s9, 1
    %p83 = scmp.ne.s32.totalorder %s78, %s80
    %p84 = scmp.eq.s32.totalorder %s9, 0
    %p85 = por %p83, %p84
    %p86 = scmp.ne.s32.totalorder %s78, %s80
    %p87 = scmp.eq.s32.totalorder %s14, 1
    %p88 = por %p86, %p87
    %p89 = scmp.ne.s32.totalorder %s80, %s81
    %p90 = scmp.eq.s32.totalorder %s14, 0
    %p91 = por %p89, %p90
    %p92 = scmp.ne.s32.totalorder %s80, %s81
    %p93 = scmp.eq.s32.totalorder %s15, 1
    %p94 = por %p92, %p93
    %p96 = scmp.ne.s32.totalorder %s81, %s95
    %p97 = scmp.eq.s32.totalorder %s15, 0
    %p98 = por %p96, %p97
    %s99 = ssub.s32 %s16, %s28
    %s100 = ssub.s32 %s17, %s24
    %s101 = sor.u32 %s99, %s100
    %p102 = scmp.eq.s32.totalorder %s101, 0
    %s104 = sadd.s32 %s103, 1
    %s105 = scalar_select %p102, %s103, %s104
    %p108 = pneg %p102
    %p109 = scmp.eq.s32.totalorder %s9, 1
    %p110 = por %p108, %p109
    %p111 = scmp.ne.s32.totalorder %s103, %s106
    %p112 = scmp.eq.s32.totalorder %s9, 0
    %p113 = por %p111, %p112
    %p114 = scmp.ne.s32.totalorder %s103, %s106
    %p115 = scmp.eq.s32.totalorder %s14, 1
    %p116 = por %p114, %p115
    %p117 = scmp.ne.s32.totalorder %s106, %s107
    %p118 = scmp.eq.s32.totalorder %s14, 0
    %p119 = por %p117, %p118
    %p120 = scmp.ne.s32.totalorder %s106, %s107
    %p121 = scmp.eq.s32.totalorder %s15, 1
    %p122 = por %p120, %p121
    %p124 = scmp.ne.s32.totalorder %s107, %s123
    %p125 = scmp.eq.s32.totalorder %s15, 0
    %p126 = por %p124, %p125
    %p127 = scmp.le.s32.totalorder 1, %s9
    %p128 = scmp.lt.s32.totalorder %s9, 3
    %p129 = pnand %p127, %p128
    %p130 = pneg %p129
    // Predicated region
    $region9: #{fc_discriminator_forward.7} parent=5 // pred_check
      _
    $region10: #{fc_discriminator_forward.7} parent=5 // pred_check_branch
      %132 = sbr.rel (%p129) target = $region12
    $region11: #{fc_discriminator_forward.7} parent=5 // pred_region
      %s133 = ssub.s32 %s9, 1
      // Predicated region
      $region13: #{fc_discriminator_forward.7} parent=11 // pred_check
        %p134 = pneg %p70
      $region14: #{fc_discriminator_forward.7} parent=11 // pred_check_branch
        %136 = sbr.rel (%p134) target = $region16
      $region15: #{fc_discriminator_forward.7} parent=11 // pred_region
        _
      $region16: #{fc_discriminator_forward.7} parent=11 // pred_fallthru
        _
      // Predicated region
      $region17: #{fc_discriminator_forward.7} parent=11 // pred_check
        %p137 = pneg %p91
      $region18: #{fc_discriminator_forward.7} parent=11 // pred_check_branch
        %139 = sbr.rel (%p137) target = $region20
      $region19: #{fc_discriminator_forward.7} parent=11 // pred_region
        _
      $region20: #{fc_discriminator_forward.7} parent=11 // pred_fallthru
        _
    $region12: #{fc_discriminator_forward.7} parent=5 // pred_fallthru
      _
    %p140 = scmp.lt.s32.totalorder %s9, 2
    // Predicated region
    $region21: #{fc_discriminator_forward.7} parent=5 // pred_check
      %p141 = pneg %p140
    $region22: #{fc_discriminator_forward.7} parent=5 // pred_check_branch
      %143 = sbr.rel (%p141) target = $region24
    $region23: #{fc_discriminator_forward.7} parent=5 // pred_region
      // Predicated region
      $region25: #{fc_discriminator_forward.7} parent=23 // pred_check
        %p144 = pneg %p43
      $region26: #{fc_discriminator_forward.7} parent=23 // pred_check_branch
        %146 = sbr.rel (%p144) target = $region28
      $region27: #{fc_discriminator_forward.7} parent=23 // pred_region
        %p147 = scmp.lt.s32.totalorder %s16, 1
        %s148 = scalar_select %p147, %s16, 1
        %p149 = scmp.lt.s32.totalorder %s17, 0
        %s150 = scalar_select %p149, %s17, 0
        %s151 = smul.addr %s150, 4
        %s152 = smul.addr %s148, 4
        %s153 = sadd.s32 %s151, %s152
        %s154 = smul.addr %s153, 4
        %s155 = scalar_lea.vmem %s0, %s154
      $region28: #{fc_discriminator_forward.7} parent=23 // pred_fallthru
        _
    $region24: #{fc_discriminator_forward.7} parent=5 // pred_fallthru
      _
    %p156 = scmp.le.s32.totalorder 1, %s9
    %p157 = scmp.lt.s32.totalorder %s9, 3
    %p158 = pnand %p156, %p157
    %p159 = pneg %p158
    // Predicated region
    $region29: #{fc_discriminator_forward.7} parent=5 // pred_check
      _
    $region30: #{fc_discriminator_forward.7} parent=5 // pred_check_branch
      %161 = sbr.rel (%p158) target = $region32
    $region31: #{fc_discriminator_forward.7} parent=5 // pred_region
      %s162 = ssub.s32 %s9, 1
      %p163 = scmp.lt.s32.totalorder %s18, 1
      %s164 = scalar_select %p163, %s18, 1
      %p165 = scmp.lt.s32.totalorder %s19, 0
      %s166 = scalar_select %p165, %s19, 0
      %s167 = smul.addr %s166, 4
      %s168 = smul.addr %s164, 4
      %s169 = sadd.s32 %s167, %s168
      %s170 = smul.addr %s169, 4
      %s171 = scalar_lea.vmem %s0, %s170
      %p172 = pneg %p49
      %p173 = pneg %p46
      %p174 = pneg %p70
      %p175 = pneg %p67
      %p176 = pneg %p91
      %p177 = pneg %p88
      %p178 = pneg %p119
      %p179 = pneg %p116
      %p180 = scmp.lt.s32.totalorder %s18, 1
      %s181 = scalar_select %p180, %s18, 1
      %p182 = scmp.lt.s32.totalorder %s19, 0
      %s183 = scalar_select %p182, %s19, 0
      %s184 = smul.addr %s183, 3
      %s185 = smul.addr %s181, 3
      %s186 = sadd.s32 %s184, %s185
      %s187 = smul.addr %s186, 4
      %s188 = scalar_lea.vmem %s3, %s187
      %p189 = scmp.lt.s32.totalorder %s18, 1
      %s190 = scalar_select %p189, %s18, 1
      %p191 = scmp.lt.s32.totalorder %s19, 0
      %s192 = scalar_select %p191, %s19, 0
      %s193 = smul.addr %s192, 4
      %s194 = smul.addr %s190, 4
      %s195 = sadd.s32 %s193, %s194
      %s196 = smul.addr %s195, 4
      %s197 = scalar_lea.vmem %s0, %s196
      %p198 = scmp.lt.s32.totalorder %s18, 1
      %s199 = scalar_select %p198, %s18, 1
      %p200 = scmp.lt.s32.totalorder %s19, 0
      %s201 = scalar_select %p200, %s19, 0
      %s202 = smul.addr %s201, 3
      %s203 = smul.addr %s199, 3
      %s204 = sadd.s32 %s202, %s203
      %s205 = smul.addr %s204, 4
      %s206 = scalar_lea.vmem %s3, %s205
      %v208 = vld [vmem:[%s197] sm:$0xf]
      %v209 = vld [vmem:[%s197 + $0x4] sm:$0xf]
      %v210 = vld [vmem:[%s197 + $0x8] sm:$0x3]
      %v211 = vld [vmem:[%s1] sm:$0xf]
      %v212 = vld [vmem:[%s1 + $0x4] sm:$0xf]
      %v213 = vld [vmem:[%s1 + $0x8] sm:$0xf]
      %v214 = vld [vmem:[%s1 + $0xc] sm:$0xf]
      %v215 = vld [vmem:[%s1 + $0x10] sm:$0xf]
      %v216 = vld [vmem:[%s1 + $0x14] sm:$0xf]
      %v217 = vld [vmem:[%s1 + $0x18] sm:$0xf]
      %v218 = vld [vmem:[%s1 + $0x1c] sm:$0xf]
      %v219 = vld [vmem:[%s1 + $0x20] sm:$0xf]
      %v220 = vld [vmem:[%s1 + $0x24] sm:$0xf]
      %v221 = vld [vmem:[%s1 + $0x28] sm:$0xf]
      %v222 = vld [vmem:[%s1 + $0x2c] sm:$0xf]
      %v223 = vld [vmem:[%s1 + $0x30] sm:$0xf]
      %v224 = vld [vmem:[%s1 + $0x34] sm:$0xf]
      %v225 = vld [vmem:[%s1 + $0x38] sm:$0xf]
      %v226 = vld [vmem:[%s1 + $0x3c] sm:$0xf]
      %v227 = vld [vmem:[%s197 + $0x8] sm:$0x7]
      %s228 = scalar_lea.vmem %s1, 64
      %v229 = vld [vmem:[%s228] sm:$0xf]
      %v230 = vld [vmem:[%s228 + $0x4] sm:$0xf]
      %v231 = vld [vmem:[%s228 + $0x8] sm:$0xf]
      %v232 = vld [vmem:[%s228 + $0xc] sm:$0xf]
      %v233 = vld [vmem:[%s228 + $0x10] sm:$0xf]
      %v234 = vld [vmem:[%s228 + $0x14] sm:$0xf]
      %v235 = vld [vmem:[%s228 + $0x18] sm:$0xf]
      %v236 = vld [vmem:[%s228 + $0x1c] sm:$0xf]
      %v237 = vld [vmem:[%s228 + $0x20] sm:$0xf]
      %v238 = vld [vmem:[%s228 + $0x24] sm:$0xf]
      %v239 = vld [vmem:[%s228 + $0x28] sm:$0xf]
      %v240 = vld [vmem:[%s228 + $0x2c] sm:$0xf]
      %v241 = vld [vmem:[%s228 + $0x30] sm:$0xf]
      %v242 = vld [vmem:[%s228 + $0x34] sm:$0xf]
      %v243 = vld [vmem:[%s228 + $0x38] sm:$0xf]
      %v244 = vld [vmem:[%s228 + $0x3c] sm:$0xf]
      %v248 = vunpack.c.l.b16 %v208
      %v249 = vunpack.c.l.b16 %v209
      %v250 = vunpack.c.l.b16 %v227
      %v251 = vpack.c.b16 %v249, %v248
      %v252 = vpack.c.b16 %v250, %v250
      %vm253 = vsmask.f32 7424
      %v255 = vshrl.u32 %v251, 16
      %v257 = vshll.u32 %v251, 16
      %v259 = vrot.slane %v257, 1
      %v260 = vor.u32 %v255, %v259
      %v262 = vshll.u32 %v252, 16
      %v264 = vrot.slane %v262, 1
      %v265 = vsel %vm253, %v260, %v264
      %v266 = vshrl.u32 %v252, 16
      %v268 = vor.u32 %v266, %v264
      %v287 = vunpack.c.l.b16 %v229
      %v288 = vunpack.c.l.b16 %v230
      %v289 = vunpack.c.l.b16 %v231
      %v290 = vunpack.c.l.b16 %v232
      %v291 = vunpack.c.l.b16 %v233
      %v292 = vunpack.c.l.b16 %v234
      %v293 = vunpack.c.l.b16 %v235
      %v294 = vunpack.c.l.b16 %v236
      %v295 = vunpack.c.l.b16 %v237
      %v296 = vunpack.c.l.b16 %v238
      %v297 = vunpack.c.l.b16 %v239
      %v298 = vunpack.c.l.b16 %v240
      %v299 = vunpack.c.l.b16 %v241
      %v300 = vunpack.c.l.b16 %v242
      %v301 = vunpack.c.l.b16 %v243
      %v302 = vunpack.c.l.b16 %v244
      %v303 = vpack.c.b16 %v288, %v287
      %v304 = vpack.c.b16 %v290, %v289
      %v305 = vpack.c.b16 %v292, %v291
      %v306 = vpack.c.b16 %v294, %v293
      %v307 = vpack.c.b16 %v296, %v295
      %v308 = vpack.c.b16 %v298, %v297
      %v309 = vpack.c.b16 %v300, %v299
      %v310 = vpack.c.b16 %v302, %v301
      %319 = vmatprep.subr.bf16.mxu0 0
      %320 = vmatpush1.bf16.msra.mxu0 %v310
      %321 = vmatprep.subr.bf16.mxu0 0
      %322 = vmatpush1.bf16.msra.mxu0 %v309
      %323 = vmatprep.subr.bf16.mxu0 0
      %324 = vmatpush1.bf16.msra.mxu0 %v308
      %325 = vmatprep.subr.bf16.mxu0 0
      %326 = vmatpush1.bf16.msra.mxu0 %v307
      %327 = vmatprep.subr.bf16.mxu0 0
      %328 = vmatpush1.bf16.msra.mxu0 %v306
      %329 = vmatprep.subr.bf16.mxu0 0
      %330 = vmatpush1.bf16.msra.mxu0 %v305
      %331 = vmatprep.subr.bf16.mxu0 0
      %332 = vmatpush1.bf16.msra.mxu0 %v304
      %333 = vmatprep.subr.bf16.mxu0 0
      %334 = vmatpush1.bf16.msra.mxu0 %v303
      %335 = vmatprep.subr.bf16.mxu0 0
      %336 = vmatpush2.bf16.msra.mxu0 0
      %337 = vmatprep.subr.bf16.mxu0 0
      %338 = vmatpush2.bf16.msra.mxu0 0
      %339 = vmatprep.subr.bf16.mxu0 0
      %340 = vmatpush2.bf16.msra.mxu0 0
      %341 = vmatprep.subr.bf16.mxu0 0
      %342 = vmatpush2.bf16.msra.mxu0 0
      %343 = vmatprep.subr.bf16.mxu0 0
      %344 = vmatpush2.bf16.msra.mxu0 0
      %345 = vmatprep.subr.bf16.mxu0 0
      %346 = vmatpush2.bf16.msra.mxu0 0
      %347 = vmatprep.subr.bf16.mxu0 0
      %348 = vmatpush2.bf16.msra.mxu0 0
      %349 = vmatprep.subr.bf16.mxu0 0
      %350 = vmatpush2.bf16.msra.mxu0 0
      %351 = vmatprep.mubr.bf16.mxu0 0
      %352 = vmatmul.mubr.bf16.gmra.mxu0 %v265
      %v353 = vpop.f32.mrf.mxu0
      %v354 = vadd.f32 0.0, %v353
      %v355 = vpop.f32.mrf.mxu0
      %v356 = vpop.f32.mrf.mxu0
      %v357 = vadd.f32 0.0, %v356
      %v358 = vpop.f32.mrf.mxu0
      %359 = vmatprep.mubr.bf16.mxu0 0
      %360 = vmatmul.mubr.bf16.gmra.mxu0 %v268
      %v361 = vpop.f32.mrf.mxu0
      %v362 = vadd.f32 0.0, %v361
      %v363 = vpop.f32.mrf.mxu0
      %v364 = vpop.f32.mrf.mxu0
      %v365 = vpop.f32.mrf.mxu0
      %366 = vdwg.mxu0
      %v368 = vunpack.c.l.b16 %v210
      %v369 = vpack.c.b16 %v368, %v368
      %v388 = vunpack.c.l.b16 %v211
      %v389 = vunpack.c.l.b16 %v212
      %v390 = vunpack.c.l.b16 %v213
      %v391 = vunpack.c.l.b16 %v214
      %v392 = vunpack.c.l.b16 %v215
      %v393 = vunpack.c.l.b16 %v216
      %v394 = vunpack.c.l.b16 %v217
      %v395 = vunpack.c.l.b16 %v218
      %v396 = vunpack.c.l.b16 %v219
      %v397 = vunpack.c.l.b16 %v220
      %v398 = vunpack.c.l.b16 %v221
      %v399 = vunpack.c.l.b16 %v222
      %v400 = vunpack.c.l.b16 %v223
      %v401 = vunpack.c.l.b16 %v224
      %v402 = vunpack.c.l.b16 %v225
      %v403 = vunpack.c.l.b16 %v226
      %v404 = vpack.c.b16 %v389, %v388
      %v405 = vpack.c.b16 %v391, %v390
      %v406 = vpack.c.b16 %v393, %v392
      %v407 = vpack.c.b16 %v395, %v394
      %v408 = vpack.c.b16 %v397, %v396
      %v409 = vpack.c.b16 %v399, %v398
      %v410 = vpack.c.b16 %v401, %v400
      %v411 = vpack.c.b16 %v403, %v402
      %420 = vmatprep.subr.bf16.mxu0 0
      %421 = vmatpush1.bf16.msra.mxu0 %v411
      %422 = vmatprep.subr.bf16.mxu0 0
      %423 = vmatpush1.bf16.msra.mxu0 %v410
      %424 = vmatprep.subr.bf16.mxu0 0
      %425 = vmatpush1.bf16.msra.mxu0 %v409
      %426 = vmatprep.subr.bf16.mxu0 0
      %427 = vmatpush1.bf16.msra.mxu0 %v408
      %428 = vmatprep.subr.bf16.mxu0 0
      %429 = vmatpush1.bf16.msra.mxu0 %v407
      %430 = vmatprep.subr.bf16.mxu0 0
      %431 = vmatpush1.bf16.msra.mxu0 %v406
      %432 = vmatprep.subr.bf16.mxu0 0
      %433 = vmatpush1.bf16.msra.mxu0 %v405
      %434 = vmatprep.subr.bf16.mxu0 0
      %435 = vmatpush1.bf16.msra.mxu0 %v404
      %436 = vmatprep.subr.bf16.mxu0 0
      %437 = vmatpush2.bf16.msra.mxu0 0
      %438 = vmatprep.subr.bf16.mxu0 0
      %439 = vmatpush2.bf16.msra.mxu0 0
      %440 = vmatprep.subr.bf16.mxu0 0
      %441 = vmatpush2.bf16.msra.mxu0 0
      %442 = vmatprep.subr.bf16.mxu0 0
      %443 = vmatpush2.bf16.msra.mxu0 0
      %444 = vmatprep.subr.bf16.mxu0 0
      %445 = vmatpush2.bf16.msra.mxu0 0
      %446 = vmatprep.subr.bf16.mxu0 0
      %447 = vmatpush2.bf16.msra.mxu0 0
      %448 = vmatprep.subr.bf16.mxu0 0
      %449 = vmatpush2.bf16.msra.mxu0 0
      %450 = vmatprep.subr.bf16.mxu0 0
      %451 = vmatpush2.bf16.msra.mxu0 0
      %452 = vmatprep.mubr.bf16.mxu0 0
      %453 = vmatmul.mubr.bf16.gmra.mxu0 %v251
      %v454 = vpop.f32.mrf.mxu0
      %v455 = vadd.f32 %v354, %v454
      %v456 = vpop.f32.mrf.mxu0
      %v457 = vpop.f32.mrf.mxu0
      %v458 = vadd.f32 %v357, %v457
      %v459 = vpop.f32.mrf.mxu0
      %460 = vmatprep.mubr.bf16.mxu0 0
      %461 = vmatmul.mubr.bf16.gmra.mxu0 %v369
      %v462 = vpop.f32.mrf.mxu0
      %v463 = vadd.f32 %v362, %v462
      %v464 = vpop.f32.mrf.mxu0
      %v465 = vpop.f32.mrf.mxu0
      %v466 = vpop.f32.mrf.mxu0
      %467 = vdwg.mxu0
      %v468 = vld [vmem:[%s197] sm:$0xc]
      %v469 = vld [vmem:[%s197 + $0x4] sm:$0xf]
      %v470 = vld [vmem:[%s197 + $0x8] sm:$0xf]
      %v471 = vld [vmem:[%s197 + $0xc] sm:$0x1]
      %s472 = scalar_lea.vmem %s1, 128
      %v473 = vld [vmem:[%s472] sm:$0xf]
      %v474 = vld [vmem:[%s472 + $0x4] sm:$0xf]
      %v475 = vld [vmem:[%s472 + $0x8] sm:$0xf]
      %v476 = vld [vmem:[%s472 + $0xc] sm:$0xf]
      %v477 = vld [vmem:[%s472 + $0x10] sm:$0xf]
      %v478 = vld [vmem:[%s472 + $0x14] sm:$0xf]
      %v479 = vld [vmem:[%s472 + $0x18] sm:$0xf]
      %v480 = vld [vmem:[%s472 + $0x1c] sm:$0xf]
      %v481 = vld [vmem:[%s472 + $0x20] sm:$0xf]
      %v482 = vld [vmem:[%s472 + $0x24] sm:$0xf]
      %v483 = vld [vmem:[%s472 + $0x28] sm:$0xf]
      %v484 = vld [vmem:[%s472 + $0x2c] sm:$0xf]
      %v485 = vld [vmem:[%s472 + $0x30] sm:$0xf]
      %v486 = vld [vmem:[%s472 + $0x34] sm:$0xf]
      %v487 = vld [vmem:[%s472 + $0x38] sm:$0xf]
      %v488 = vld [vmem:[%s472 + $0x3c] sm:$0xf]
      %v493 = vunpack.c.l.b16 %v468
      %v494 = vunpack.c.l.b16 %v469
      %v495 = vunpack.c.l.b16 %v470
      %v496 = vunpack.c.l.b16 %v471
      %v497 = vpack.c.b16 %v494, %v493
      %v498 = vpack.c.b16 %v496, %v495
      %vm499 = vsmask.f32 5376
      %v501 = vshrl.u32 %v497, 16
      %v503 = vrot.slane %v501, 2
      %v504 = vshll.u32 %v497, 16
      %v506 = vrot.slane %v504, 3
      %v507 = vor.u32 %v503, %v506
      %v509 = vshrl.u32 %v498, 16
      %v511 = vrot.slane %v509, 2
      %v512 = vshll.u32 %v498, 16
      %v514 = vrot.slane %v512, 3
      %v515 = vor.u32 %v511, %v514
      %v516 = vsel %vm499, %v507, %v515
      %v535 = vunpack.c.l.b16 %v473
      %v536 = vunpack.c.l.b16 %v474
      %v537 = vunpack.c.l.b16 %v475
      %v538 = vunpack.c.l.b16 %v476
      %v539 = vunpack.c.l.b16 %v477
      %v540 = vunpack.c.l.b16 %v478
      %v541 = vunpack.c.l.b16 %v479
      %v542 = vunpack.c.l.b16 %v480
      %v543 = vunpack.c.l.b16 %v481
      %v544 = vunpack.c.l.b16 %v482
      %v545 = vunpack.c.l.b16 %v483
      %v546 = vunpack.c.l.b16 %v484
      %v547 = vunpack.c.l.b16 %v485
      %v548 = vunpack.c.l.b16 %v486
      %v549 = vunpack.c.l.b16 %v487
      %v550 = vunpack.c.l.b16 %v488
      %v551 = vpack.c.b16 %v536, %v535
      %v552 = vpack.c.b16 %v538, %v537
      %v553 = vpack.c.b16 %v540, %v539
      %v554 = vpack.c.b16 %v542, %v541
      %v555 = vpack.c.b16 %v544, %v543
      %v556 = vpack.c.b16 %v546, %v545
      %v557 = vpack.c.b16 %v548, %v547
      %v558 = vpack.c.b16 %v550, %v549
      %567 = vmatprep.subr.bf16.mxu0 0
      %568 = vmatpush1.bf16.msra.mxu0 %v558
      %569 = vmatprep.subr.bf16.mxu0 0
      %570 = vmatpush1.bf16.msra.mxu0 %v557
      %571 = vmatprep.subr.bf16.mxu0 0
      %572 = vmatpush1.bf16.msra.mxu0 %v556
      %573 = vmatprep.subr.bf16.mxu0 0
      %574 = vmatpush1.bf16.msra.mxu0 %v555
      %575 = vmatprep.subr.bf16.mxu0 0
      %576 = vmatpush1.bf16.msra.mxu0 %v554
      %577 = vmatprep.subr.bf16.mxu0 0
      %578 = vmatpush1.bf16.msra.mxu0 %v553
      %579 = vmatprep.subr.bf16.mxu0 0
      %580 = vmatpush1.bf16.msra.mxu0 %v552
      %581 = vmatprep.subr.bf16.mxu0 0
      %582 = vmatpush1.bf16.msra.mxu0 %v551
      %583 = vmatprep.subr.bf16.mxu0 0
      %584 = vmatpush2.bf16.msra.mxu0 0
      %585 = vmatprep.subr.bf16.mxu0 0
      %586 = vmatpush2.bf16.msra.mxu0 0
      %587 = vmatprep.subr.bf16.mxu0 0
      %588 = vmatpush2.bf16.msra.mxu0 0
      %589 = vmatprep.subr.bf16.mxu0 0
      %590 = vmatpush2.bf16.msra.mxu0 0
      %591 = vmatprep.subr.bf16.mxu0 0
      %592 = vmatpush2.bf16.msra.mxu0 0
      %593 = vmatprep.subr.bf16.mxu0 0
      %594 = vmatpush2.bf16.msra.mxu0 0
      %595 = vmatprep.subr.bf16.mxu0 0
      %596 = vmatpush2.bf16.msra.mxu0 0
      %597 = vmatprep.subr.bf16.mxu0 0
      %598 = vmatpush2.bf16.msra.mxu0 0
      %599 = vmatprep.mubr.bf16.mxu0 0
      %600 = vmatmul.mubr.bf16.gmra.mxu0 %v516
      %v601 = vpop.f32.mrf.mxu0
      %v602 = vadd.f32 0.0, %v601
      %v603 = vpop.f32.mrf.mxu0
      %v604 = vpop.f32.mrf.mxu0
      %v605 = vadd.f32 0.0, %v604
      %v606 = vpop.f32.mrf.mxu0
      %607 = vmatprep.mubr.bf16.mxu0 0
      %608 = vmatmul.mubr.bf16.gmra.mxu0 %v515
      %v609 = vpop.f32.mrf.mxu0
      %v610 = vadd.f32 0.0, %v609
      %v611 = vpop.f32.mrf.mxu0
      %v612 = vpop.f32.mrf.mxu0
      %v613 = vpop.f32.mrf.mxu0
      %614 = vdwg.mxu0
      %v615 = vadd.f32 %v455, %v602
      %v616 = vadd.f32 %v458, %v605
      %v617 = vadd.f32 %v463, %v610
      %v618 = vld [vmem:[%s197] sm:$0x8]
      %s619 = scalar_lea.vmem %s1, 192
      %v620 = vld [vmem:[%s619] sm:$0xf]
      %v621 = vld [vmem:[%s619 + $0x4] sm:$0xf]
      %v622 = vld [vmem:[%s619 + $0x8] sm:$0xf]
      %v623 = vld [vmem:[%s619 + $0xc] sm:$0xf]
      %v624 = vld [vmem:[%s619 + $0x10] sm:$0xf]
      %v625 = vld [vmem:[%s619 + $0x14] sm:$0xf]
      %v626 = vld [vmem:[%s619 + $0x18] sm:$0xf]
      %v627 = vld [vmem:[%s619 + $0x1c] sm:$0xf]
      %v628 = vld [vmem:[%s619 + $0x20] sm:$0xf]
      %v629 = vld [vmem:[%s619 + $0x24] sm:$0xf]
      %v630 = vld [vmem:[%s619 + $0x28] sm:$0xf]
      %v631 = vld [vmem:[%s619 + $0x2c] sm:$0xf]
      %v632 = vld [vmem:[%s619 + $0x30] sm:$0xf]
      %v633 = vld [vmem:[%s619 + $0x34] sm:$0xf]
      %v634 = vld [vmem:[%s619 + $0x38] sm:$0xf]
      %v635 = vld [vmem:[%s619 + $0x3c] sm:$0xf]
      %v637 = vunpack.c.l.b16 %v618
      %v638 = vpack.c.b16 %v494, %v637
      %vm639 = vcmask 1044480
      %v640 = vrot.slane %v638, 3
      %v641 = vrot.slane %v498, 3
      %v642 = vsel %vm639, %v640, %v641
      %v661 = vunpack.c.l.b16 %v620
      %v662 = vunpack.c.l.b16 %v621
      %v663 = vunpack.c.l.b16 %v622
      %v664 = vunpack.c.l.b16 %v623
      %v665 = vunpack.c.l.b16 %v624
      %v666 = vunpack.c.l.b16 %v625
      %v667 = vunpack.c.l.b16 %v626
      %v668 = vunpack.c.l.b16 %v627
      %v669 = vunpack.c.l.b16 %v628
      %v670 = vunpack.c.l.b16 %v629
      %v671 = vunpack.c.l.b16 %v630
      %v672 = vunpack.c.l.b16 %v631
      %v673 = vunpack.c.l.b16 %v632
      %v674 = vunpack.c.l.b16 %v633
      %v675 = vunpack.c.l.b16 %v634
      %v676 = vunpack.c.l.b16 %v635
      %v677 = vpack.c.b16 %v662, %v661
      %v678 = vpack.c.b16 %v664, %v663
      %v679 = vpack.c.b16 %v666, %v665
      %v680 = vpack.c.b16 %v668, %v667
      %v681 = vpack.c.b16 %v670, %v669
      %v682 = vpack.c.b16 %v672, %v671
      %v683 = vpack.c.b16 %v674, %v673
      %v684 = vpack.c.b16 %v676, %v675
      %693 = vmatprep.subr.bf16.mxu0 0
      %694 = vmatpush1.bf16.msra.mxu0 %v684
      %695 = vmatprep.subr.bf16.mxu0 0
      %696 = vmatpush1.bf16.msra.mxu0 %v683
      %697 = vmatprep.subr.bf16.mxu0 0
      %698 = vmatpush1.bf16.msra.mxu0 %v682
      %699 = vmatprep.subr.bf16.mxu0 0
      %700 = vmatpush1.bf16.msra.mxu0 %v681
      %701 = vmatprep.subr.bf16.mxu0 0
      %702 = vmatpush1.bf16.msra.mxu0 %v680
      %703 = vmatprep.subr.bf16.mxu0 0
      %704 = vmatpush1.bf16.msra.mxu0 %v679
      %705 = vmatprep.subr.bf16.mxu0 0
      %706 = vmatpush1.bf16.msra.mxu0 %v678
      %707 = vmatprep.subr.bf16.mxu0 0
      %708 = vmatpush1.bf16.msra.mxu0 %v677
      %709 = vmatprep.subr.bf16.mxu0 0
      %710 = vmatpush2.bf16.msra.mxu0 0
      %711 = vmatprep.subr.bf16.mxu0 0
      %712 = vmatpush2.bf16.msra.mxu0 0
      %713 = vmatprep.subr.bf16.mxu0 0
      %714 = vmatpush2.bf16.msra.mxu0 0
      %715 = vmatprep.subr.bf16.mxu0 0
      %716 = vmatpush2.bf16.msra.mxu0 0
      %717 = vmatprep.subr.bf16.mxu0 0
      %718 = vmatpush2.bf16.msra.mxu0 0
      %719 = vmatprep.subr.bf16.mxu0 0
      %720 = vmatpush2.bf16.msra.mxu0 0
      %721 = vmatprep.subr.bf16.mxu0 0
      %722 = vmatpush2.bf16.msra.mxu0 0
      %723 = vmatprep.subr.bf16.mxu0 0
      %724 = vmatpush2.bf16.msra.mxu0 0
      %725 = vmatprep.mubr.bf16.mxu0 0
      %726 = vmatmul.mubr.bf16.gmra.mxu0 %v642
      %v727 = vpop.f32.mrf.mxu0
      %v728 = vadd.f32 0.0, %v727
      %v729 = vpop.f32.mrf.mxu0
      %v730 = vpop.f32.mrf.mxu0
      %v731 = vadd.f32 0.0, %v730
      %v732 = vpop.f32.mrf.mxu0
      %733 = vmatprep.mubr.bf16.mxu0 0
      %734 = vmatmul.mubr.bf16.gmra.mxu0 %v641
      %v735 = vpop.f32.mrf.mxu0
      %v736 = vadd.f32 0.0, %v735
      %v737 = vpop.f32.mrf.mxu0
      %v738 = vpop.f32.mrf.mxu0
      %v739 = vpop.f32.mrf.mxu0
      %740 = vdwg.mxu0
      %v741 = vadd.f32 %v615, %v728
      %v742 = vadd.f32 %v616, %v731
      %v743 = vadd.f32 %v617, %v736
      %v744 = vld [vmem:[%s2] sm:$0x1]
      %v746 = vlaneseq
      %v747 = vshrl.u32 %v746, 7
      %v748 = vsub.s32 0, %v747
      %v749 = vrot.slane %v744, %v748
      %v751 = vadd.f32 %v741, %v749
      %v752 = vadd.f32 %v742, %v749
      %v753 = vadd.f32 %v743, %v749
      %vm754 = vcmp.gt.f32.partialorder %v751, 0.0
      %vm755 = vcmp.gt.f32.partialorder %v752, 0.0
      %vm756 = vcmp.gt.f32.partialorder %v753, 0.0
      %v757 = vmul.f32 %v751, 0.2
      %v758 = vmul.f32 %v752, 0.2
      %v759 = vmul.f32 %v753, 0.2
      %v760 = vsel %vm754, %v751, %v757
      %v761 = vsel %vm755, %v752, %v758
      %v762 = vsel %vm756, %v753, %v759
      %v763 = vpack.c.bf16 %v761, %v760
      %v764 = vpack.c.bf16 %v762, %v762
      %v767 = vunpack.c.l.b16 %v763
      %v768 = vunpack.c.h.b16 %v763
      %v769 = vunpack.c.l.b16 %v764
      %v770 = vpack.c.b16 %v767, %v767
      %v771 = vpack.c.b16 %v768, %v768
      %v772 = vpack.c.b16 %v769, %v769
      %776 = vst [vmem:[%s206] sm:$0xf] %v770
      %777 = vst [vmem:[%s206 + $0x4] sm:$0xf] %v771
      %778 = vst [vmem:[%s206 + $0x8] sm:$0x3] %v772
      %p779 = scmp.lt.s32.totalorder %s18, 1
      %s780 = scalar_select %p779, %s18, 1
      %p781 = scmp.lt.s32.totalorder %s19, 0
      %s782 = scalar_select %p781, %s19, 0
      %s783 = smul.addr %s782, 3
      %s784 = smul.addr %s780, 3
      %s785 = sadd.s32 %s783, %s784
      %s786 = smul.addr %s785, 4
      %s787 = scalar_lea.vmem %s3, %s786
      // Predicated region
      $region33: #{fc_discriminator_forward.7} parent=31 // pred_check
        %p788 = pneg %p116
      $region34: #{fc_discriminator_forward.7} parent=31 // pred_check_branch
        %790 = sbr.rel (%p788) target = $region36
      $region35: #{fc_discriminator_forward.7} parent=31 // pred_region
        _
      $region36: #{fc_discriminator_forward.7} parent=31 // pred_fallthru
        _
    $region32: #{fc_discriminator_forward.7} parent=5 // pred_fallthru
      _
    %p791 = scmp.le.s32.totalorder 2, %s9
    // Predicated region
    $region37: #{fc_discriminator_forward.7} parent=5 // pred_check
      %p792 = pneg %p791
    $region38: #{fc_discriminator_forward.7} parent=5 // pred_check_branch
      %794 = sbr.rel (%p792) target = $region40
    $region39: #{fc_discriminator_forward.7} parent=5 // pred_region
      %s795 = ssub.s32 %s9, 2
      // Predicated region
      $region41: #{fc_discriminator_forward.7} parent=39 // pred_check
        %p796 = pneg %p122
      $region42: #{fc_discriminator_forward.7} parent=39 // pred_check_branch
        %798 = sbr.rel (%p796) target = $region44
      $region43: #{fc_discriminator_forward.7} parent=39 // pred_region
        %p799 = scmp.lt.s32.totalorder %s20, 1
        %s800 = scalar_select %p799, %s20, 1
        %p801 = scmp.lt.s32.totalorder %s21, 0
        %s802 = scalar_select %p801, %s21, 0
        %s803 = smul.addr %s802, 3
        %s804 = smul.addr %s800, 3
        %s805 = sadd.s32 %s803, %s804
        %s806 = smul.addr %s805, 4
        %s807 = scalar_lea.vmem %s3, %s806
      $region44: #{fc_discriminator_forward.7} parent=39 // pred_fallthru
        _
    $region40: #{fc_discriminator_forward.7} parent=5 // pred_fallthru
      _
  $region6: #{fc_discriminator_forward.7} parent=0 // loop_footer
    %s13 = sadd.s32 1, %s9
  $region7: #{fc_discriminator_forward.7} parent=0 // loop_footer_branch
    %8 = sbr.rel target = $region3
  $region8: #{fc_discriminator_forward.7} parent=0 // loop_exit
    _

// kernel: fc_discriminator_forward.8
$region0: #{fc_discriminator_forward.8}
  #allocation0 [shape = 'u32[]', space=smem, size = 0x4, offset = 0x4, fixed_abs, tag = 'smem constant byte address 0x4 - core index']
  #allocation1 [shape = 'u32[144,128]{1,0:T(1,128)}', space=vmem, size = 0x12000, scoped, tag = 'internal scratch']
  %s0 = inlined_call_operand.vmem [shape: bf16[2,1,10,128], index: 0, kind: input, shape index: {}]
  %s1 = inlined_call_operand.vmem [shape: bf16[4,128,128], index: 1, kind: input, shape index: {}]
  %s2 = inlined_call_operand.vmem [shape: f32[1,128], index: 2, kind: input, shape index: {}]
  %s3 = inlined_call_operand.vmem [shape: bf16[2,1,6,128], index: 3, kind: output, shape index: {}]
  %s4 = sld [smem:[#allocation0]]
  $region45: #{fc_discriminator_forward.8} parent=0
    _
  %s6 = ssub.s32 1, %s4
  %s7 = scalar_select 0, %s6, %s4
  loop: start=0, step=1, limit=4
  $region2: #{fc_discriminator_forward.8} parent=0 // loop_pre_header
    _
  $region3: #{fc_discriminator_forward.8} parent=0 // loop_header
    %s9 = sphi 0, %s13
    %p10 = scmp.ge.s32.totalorder %s9, 4
    %s16 = sphi 0, %s28
    %s17 = sphi 0, %s24
    %s18 = sphi 0, %s16
    %s19 = sphi 0, %s17
    %s20 = sphi 0, %s18
    %s21 = sphi 0, %s19
    %s33 = sphi 0, %s35
    %s36 = sphi 0, %s33
    %s37 = sphi 0, %s36
    %s53 = sphi 0, %s37
    %s57 = sphi 0, %s57
    %s59 = sphi 0, %s57
    %s60 = sphi 0, %s59
    %s74 = sphi 0, %s60
    %s78 = sphi 0, %s78
    %s80 = sphi 0, %s78
    %s81 = sphi 0, %s80
    %s95 = sphi 0, %s81
    %s103 = sphi 0, %s105
    %s106 = sphi 0, %s103
    %s107 = sphi 0, %s106
    %s123 = sphi 0, %s107
  $region4: #{fc_discriminator_forward.8} parent=0 // loop_header_branch
    %12 = sbr.rel (%p10) target = $region8
  $region5: #{fc_discriminator_forward.8} parent=0 // loop_body
    %s14 = ssub.s32 %s9, 1
    %s15 = ssub.s32 %s9, 2
    %s22 = sadd.s32 1, %s17
    %p23 = scmp.ge.s32.totalorder %s22, 1
    %s24 = scalar_select %p23, 0, %s22
    %s25 = sadd.s32 1, %s16
    %s26 = scalar_select %p23, %s25, %s16
    %p27 = scmp.ge.s32.totalorder %s26, 2
    %s28 = scalar_select %p27, 0, %s26
    %s29 = ssub.s32 %s16, %s28
    %s30 = ssub.s32 %s17, %s24
    %s31 = sor.u32 %s29, %s30
    %p32 = scmp.eq.s32.totalorder %s31, 0
    %s34 = sadd.s32 %s33, 1
    %s35 = scalar_select %p32, %s33, %s34
    %p38 = pneg %p32
    %p39 = scmp.eq.s32.totalorder %s9, 1
    %p40 = por %p38, %p39
    %p41 = scmp.ne.s32.totalorder %s33, %s36
    %p42 = scmp.eq.s32.totalorder %s9, 0
    %p43 = por %p41, %p42
    %p44 = scmp.ne.s32.totalorder %s33, %s36
    %p45 = scmp.eq.s32.totalorder %s14, 1
    %p46 = por %p44, %p45
    %p47 = scmp.ne.s32.totalorder %s36, %s37
    %p48 = scmp.eq.s32.totalorder %s14, 0
    %p49 = por %p47, %p48
    %p50 = scmp.ne.s32.totalorder %s36, %s37
    %p51 = scmp.eq.s32.totalorder %s15, 1
    %p52 = por %p50, %p51
    %p54 = scmp.ne.s32.totalorder %s37, %s53
    %p55 = scmp.eq.s32.totalorder %s15, 0
    %p56 = por %p54, %p55
    %s58 = sadd.s32 %s57, 1
    %p61 = scmp.eq.s32.totalorder %s9, 1
    %p62 = scmp.ne.s32.totalorder %s57, %s59
    %p63 = scmp.eq.s32.totalorder %s9, 0
    %p64 = por %p62, %p63
    %p65 = scmp.ne.s32.totalorder %s57, %s59
    %p66 = scmp.eq.s32.totalorder %s14, 1
    %p67 = por %p65, %p66
    %p68 = scmp.ne.s32.totalorder %s59, %s60
    %p69 = scmp.eq.s32.totalorder %s14, 0
    %p70 = por %p68, %p69
    %p71 = scmp.ne.s32.totalorder %s59, %s60
    %p72 = scmp.eq.s32.totalorder %s15, 1
    %p73 = por %p71, %p72
    %p75 = scmp.ne.s32.totalorder %s60, %s74
    %p76 = scmp.eq.s32.totalorder %s15, 0
    %p77 = por %p75, %p76
    %s79 = sadd.s32 %s78, 1
    %p82 = scmp.eq.s32.totalorder %s9, 1
    %p83 = scmp.ne.s32.totalorder %s78, %s80
    %p84 = scmp.eq.s32.totalorder %s9, 0
    %p85 = por %p83, %p84
    %p86 = scmp.ne.s32.totalorder %s78, %s80
    %p87 = scmp.eq.s32.totalorder %s14, 1
    %p88 = por %p86, %p87
    %p89 = scmp.ne.s32.totalorder %s80, %s81
    %p90 = scmp.eq.s32.totalorder %s14, 0
    %p91 = por %p89, %p90
    %p92 = scmp.ne.s32.totalorder %s80, %s81
    %p93 = scmp.eq.s32.totalorder %s15, 1
    %p94 = por %p92, %p93
    %p96 = scmp.ne.s32.totalorder %s81, %s95
    %p97 = scmp.eq.s32.totalorder %s15, 0
    %p98 = por %p96, %p97
    %s99 = ssub.s32 %s16, %s28
    %s100 = ssub.s32 %s17, %s24
    %s101 = sor.u32 %s99, %s100
    %p102 = scmp.eq.s32.totalorder %s101, 0
    %s104 = sadd.s32 %s103, 1
    %s105 = scalar_select %p102, %s103, %s104
    %p108 = pneg %p102
    %p109 = scmp.eq.s32.totalorder %s9, 1
    %p110 = por %p108, %p109
    %p111 = scmp.ne.s32.totalorder %s103, %s106
    %p112 = scmp.eq.s32.totalorder %s9, 0
    %p113 = por %p111, %p112
    %p114 = scmp.ne.s32.totalorder %s103, %s106
    %p115 = scmp.eq.s32.totalorder %s14, 1
    %p116 = por %p114, %p115
    %p117 = scmp.ne.s32.totalorder %s106, %s107
    %p118 = scmp.eq.s32.totalorder %s14, 0
    %p119 = por %p117, %p118
    %p120 = scmp.ne.s32.totalorder %s106, %s107
    %p121 = scmp.eq.s32.totalorder %s15, 1
    %p122 = por %p120, %p121
    %p124 = scmp.ne.s32.totalorder %s107, %s123
    %p125 = scmp.eq.s32.totalorder %s15, 0
    %p126 = por %p124, %p125
    %p127 = scmp.le.s32.totalorder 1, %s9
    %p128 = scmp.lt.s32.totalorder %s9, 3
    %p129 = pnand %p127, %p128
    %p130 = pneg %p129
    // Predicated region
    $region9: #{fc_discriminator_forward.8} parent=5 // pred_check
      _
    $region10: #{fc_discriminator_forward.8} parent=5 // pred_check_branch
      %132 = sbr.rel (%p129) target = $region12
    $region11: #{fc_discriminator_forward.8} parent=5 // pred_region
      %s133 = ssub.s32 %s9, 1
      // Predicated region
      $region13: #{fc_discriminator_forward.8} parent=11 // pred_check
        %p134 = pneg %p70
      $region14: #{fc_discriminator_forward.8} parent=11 // pred_check_branch
        %136 = sbr.rel (%p134) target = $region16
      $region15: #{fc_discriminator_forward.8} parent=11 // pred_region
        _
      $region16: #{fc_discriminator_forward.8} parent=11 // pred_fallthru
        _
      // Predicated region
      $region17: #{fc_discriminator_forward.8} parent=11 // pred_check
        %p137 = pneg %p91
      $region18: #{fc_discriminator_forward.8} parent=11 // pred_check_branch
        %139 = sbr.rel (%p137) target = $region20
      $region19: #{fc_discriminator_forward.8} parent=11 // pred_region
        _
      $region20: #{fc_discriminator_forward.8} parent=11 // pred_fallthru
        _
    $region12: #{fc_discriminator_forward.8} parent=5 // pred_fallthru
      _
    %p140 = scmp.lt.s32.totalorder %s9, 2
    // Predicated region
    $region21: #{fc_discriminator_forward.8} parent=5 // pred_check
      %p141 = pneg %p140
    $region22: #{fc_discriminator_forward.8} parent=5 // pred_check_branch
      %143 = sbr.rel (%p141) target = $region24
    $region23: #{fc_discriminator_forward.8} parent=5 // pred_region
      // Predicated region
      $region25: #{fc_discriminator_forward.8} parent=23 // pred_check
        %p144 = pneg %p43
      $region26: #{fc_discriminator_forward.8} parent=23 // pred_check_branch
        %146 = sbr.rel (%p144) target = $region28
      $region27: #{fc_discriminator_forward.8} parent=23 // pred_region
        %p147 = scmp.lt.s32.totalorder %s16, 1
        %s148 = scalar_select %p147, %s16, 1
        %p149 = scmp.lt.s32.totalorder %s17, 0
        %s150 = scalar_select %p149, %s17, 0
        %s151 = smul.addr %s150, 2
        %s152 = smul.addr %s148, 2
        %s153 = sadd.s32 %s151, %s152
        %s154 = smul.addr %s153, 4
        %s155 = scalar_lea.vmem %s0, %s154
      $region28: #{fc_discriminator_forward.8} parent=23 // pred_fallthru
        _
    $region24: #{fc_discriminator_forward.8} parent=5 // pred_fallthru
      _
    %p156 = scmp.le.s32.totalorder 1, %s9
    %p157 = scmp.lt.s32.totalorder %s9, 3
    %p158 = pnand %p156, %p157
    %p159 = pneg %p158
    // Predicated region
    $region29: #{fc_discriminator_forward.8} parent=5 // pred_check
      _
    $region30: #{fc_discriminator_forward.8} parent=5 // pred_check_branch
      %161 = sbr.rel (%p158) target = $region32
    $region31: #{fc_discriminator_forward.8} parent=5 // pred_region
      %s162 = ssub.s32 %s9, 1
      %p163 = scmp.lt.s32.totalorder %s18, 1
      %s164 = scalar_select %p163, %s18, 1
      %p165 = scmp.lt.s32.totalorder %s19, 0
      %s166 = scalar_select %p165, %s19, 0
      %s167 = smul.addr %s166, 2
      %s168 = smul.addr %s164, 2
      %s169 = sadd.s32 %s167, %s168
      %s170 = smul.addr %s169, 4
      %s171 = scalar_lea.vmem %s0, %s170
      %p172 = pneg %p49
      %p173 = pneg %p46
      %p174 = pneg %p70
      %p175 = pneg %p67
      %p176 = pneg %p91
      %p177 = pneg %p88
      %p178 = pneg %p119
      %p179 = pneg %p116
      %p180 = scmp.lt.s32.totalorder %s18, 1
      %s181 = scalar_select %p180, %s18, 1
      %p182 = scmp.lt.s32.totalorder %s19, 0
      %s183 = scalar_select %p182, %s19, 0
      %s184 = sadd.s32 %s183, %s181
      %s185 = smul.addr %s184, 4
      %s186 = scalar_lea.vmem %s3, %s185
      %p187 = scmp.lt.s32.totalorder %s18, 1
      %s188 = scalar_select %p187, %s18, 1
      %p189 = scmp.lt.s32.totalorder %s19, 0
      %s190 = scalar_select %p189, %s19, 0
      %s191 = smul.addr %s190, 2
      %s192 = smul.addr %s188, 2
      %s193 = sadd.s32 %s191, %s192
      %s194 = smul.addr %s193, 4
      %s195 = scalar_lea.vmem %s0, %s194
      %p196 = scmp.lt.s32.totalorder %s18, 1
      %s197 = scalar_select %p196, %s18, 1
      %p198 = scmp.lt.s32.totalorder %s19, 0
      %s199 = scalar_select %p198, %s19, 0
      %s200 = sadd.s32 %s199, %s197
      %s201 = smul.addr %s200, 4
      %s202 = scalar_lea.vmem %s3, %s201
      %v204 = vld [vmem:[%s195] sm:$0x7]
      %v205 = vld [vmem:[%s1] sm:$0xf]
      %v206 = vld [vmem:[%s1 + $0x4] sm:$0xf]
      %v207 = vld [vmem:[%s1 + $0x8] sm:$0xf]
      %v208 = vld [vmem:[%s1 + $0xc] sm:$0xf]
      %v209 = vld [vmem:[%s1 + $0x10] sm:$0xf]
      %v210 = vld [vmem:[%s1 + $0x14] sm:$0xf]
      %v211 = vld [vmem:[%s1 + $0x18] sm:$0xf]
      %v212 = vld [vmem:[%s1 + $0x1c] sm:$0xf]
      %v213 = vld [vmem:[%s1 + $0x20] sm:$0xf]
      %v214 = vld [vmem:[%s1 + $0x24] sm:$0xf]
      %v215 = vld [vmem:[%s1 + $0x28] sm:$0xf]
      %v216 = vld [vmem:[%s1 + $0x2c] sm:$0xf]
      %v217 = vld [vmem:[%s1 + $0x30] sm:$0xf]
      %v218 = vld [vmem:[%s1 + $0x34] sm:$0xf]
      %v219 = vld [vmem:[%s1 + $0x38] sm:$0xf]
      %v220 = vld [vmem:[%s1 + $0x3c] sm:$0xf]
      %v221 = vld [vmem:[%s195] sm:$0xf]
      %s222 = scalar_lea.vmem %s1, 64
      %v223 = vld [vmem:[%s222] sm:$0xf]
      %v224 = vld [vmem:[%s222 + $0x4] sm:$0xf]
      %v225 = vld [vmem:[%s222 + $0x8] sm:$0xf]
      %v226 = vld [vmem:[%s222 + $0xc] sm:$0xf]
      %v227 = vld [vmem:[%s222 + $0x10] sm:$0xf]
      %v228 = vld [vmem:[%s222 + $0x14] sm:$0xf]
      %v229 = vld [vmem:[%s222 + $0x18] sm:$0xf]
      %v230 = vld [vmem:[%s222 + $0x1c] sm:$0xf]
      %v231 = vld [vmem:[%s222 + $0x20] sm:$0xf]
      %v232 = vld [vmem:[%s222 + $0x24] sm:$0xf]
      %v233 = vld [vmem:[%s222 + $0x28] sm:$0xf]
      %v234 = vld [vmem:[%s222 + $0x2c] sm:$0xf]
      %v235 = vld [vmem:[%s222 + $0x30] sm:$0xf]
      %v236 = vld [vmem:[%s222 + $0x34] sm:$0xf]
      %v237 = vld [vmem:[%s222 + $0x38] sm:$0xf]
      %v238 = vld [vmem:[%s222 + $0x3c] sm:$0xf]
      %v240 = vunpack.c.l.b16 %v221
      %v241 = vpack.c.b16 %v240, %v240
      %v243 = vshrl.u32 %v241, 16
      %v245 = vshll.u32 %v241, 16
      %v247 = vrot.slane %v245, 1
      %v248 = vor.u32 %v243, %v247
      %v266 = vunpack.c.l.b16 %v223
      %v267 = vunpack.c.l.b16 %v224
      %v268 = vunpack.c.l.b16 %v225
      %v269 = vunpack.c.l.b16 %v226
      %v270 = vunpack.c.l.b16 %v227
      %v271 = vunpack.c.l.b16 %v228
      %v272 = vunpack.c.l.b16 %v229
      %v273 = vunpack.c.l.b16 %v230
      %v274 = vunpack.c.l.b16 %v231
      %v275 = vunpack.c.l.b16 %v232
      %v276 = vunpack.c.l.b16 %v233
      %v277 = vunpack.c.l.b16 %v234
      %v278 = vunpack.c.l.b16 %v235
      %v279 = vunpack.c.l.b16 %v236
      %v280 = vunpack.c.l.b16 %v237
      %v281 = vunpack.c.l.b16 %v238
      %v282 = vpack.c.b16 %v267, %v266
      %v283 = vpack.c.b16 %v269, %v268
      %v284 = vpack.c.b16 %v271, %v270
      %v285 = vpack.c.b16 %v273, %v272
      %v286 = vpack.c.b16 %v275, %v274
      %v287 = vpack.c.b16 %v277, %v276
      %v288 = vpack.c.b16 %v279, %v278
      %v289 = vpack.c.b16 %v281, %v280
      %298 = vmatprep.subr.bf16.mxu0 0
      %299 = vmatpush1.bf16.msra.mxu0 %v289
      %300 = vmatprep.subr.bf16.mxu0 0
      %301 = vmatpush1.bf16.msra.mxu0 %v288
      %302 = vmatprep.subr.bf16.mxu0 0
      %303 = vmatpush1.bf16.msra.mxu0 %v287
      %304 = vmatprep.subr.bf16.mxu0 0
      %305 = vmatpush1.bf16.msra.mxu0 %v286
      %306 = vmatprep.subr.bf16.mxu0 0
      %307 = vmatpush1.bf16.msra.mxu0 %v285
      %308 = vmatprep.subr.bf16.mxu0 0
      %309 = vmatpush1.bf16.msra.mxu0 %v284
      %310 = vmatprep.subr.bf16.mxu0 0
      %311 = vmatpush1.bf16.msra.mxu0 %v283
      %312 = vmatprep.subr.bf16.mxu0 0
      %313 = vmatpush1.bf16.msra.mxu0 %v282
      %314 = vmatprep.subr.bf16.mxu0 0
      %315 = vmatpush2.bf16.msra.mxu0 0
      %316 = vmatprep.subr.bf16.mxu0 0
      %317 = vmatpush2.bf16.msra.mxu0 0
      %318 = vmatprep.subr.bf16.mxu0 0
      %319 = vmatpush2.bf16.msra.mxu0 0
      %320 = vmatprep.subr.bf16.mxu0 0
      %321 = vmatpush2.bf16.msra.mxu0 0
      %322 = vmatprep.subr.bf16.mxu0 0
      %323 = vmatpush2.bf16.msra.mxu0 0
      %324 = vmatprep.subr.bf16.mxu0 0
      %325 = vmatpush2.bf16.msra.mxu0 0
      %326 = vmatprep.subr.bf16.mxu0 0
      %327 = vmatpush2.bf16.msra.mxu0 0
      %328 = vmatprep.subr.bf16.mxu0 0
      %329 = vmatpush2.bf16.msra.mxu0 0
      %330 = vmatprep.mubr.bf16.mxu0 0
      %331 = vmatmul.mubr.bf16.gmra.mxu0 %v248
      %v332 = vpop.f32.mrf.mxu0
      %v333 = vadd.f32 0.0, %v332
      %v334 = vpop.f32.mrf.mxu0
      %v335 = vpop.f32.mrf.mxu0
      %v336 = vpop.f32.mrf.mxu0
      %337 = vdwg.mxu0
      %v354 = vunpack.c.l.b16 %v205
      %v355 = vunpack.c.l.b16 %v206
      %v356 = vunpack.c.l.b16 %v207
      %v357 = vunpack.c.l.b16 %v208
      %v358 = vunpack.c.l.b16 %v209
      %v359 = vunpack.c.l.b16 %v210
      %v360 = vunpack.c.l.b16 %v211
      %v361 = vunpack.c.l.b16 %v212
      %v362 = vunpack.c.l.b16 %v213
      %v363 = vunpack.c.l.b16 %v214
      %v364 = vunpack.c.l.b16 %v215
      %v365 = vunpack.c.l.b16 %v216
      %v366 = vunpack.c.l.b16 %v217
      %v367 = vunpack.c.l.b16 %v218
      %v368 = vunpack.c.l.b16 %v219
      %v369 = vunpack.c.l.b16 %v220
      %v370 = vpack.c.b16 %v355, %v354
      %v371 = vpack.c.b16 %v357, %v356
      %v372 = vpack.c.b16 %v359, %v358
      %v373 = vpack.c.b16 %v361, %v360
      %v374 = vpack.c.b16 %v363, %v362
      %v375 = vpack.c.b16 %v365, %v364
      %v376 = vpack.c.b16 %v367, %v366
      %v377 = vpack.c.b16 %v369, %v368
      %386 = vmatprep.subr.bf16.mxu0 0
      %387 = vmatpush1.bf16.msra.mxu0 %v377
      %388 = vmatprep.subr.bf16.mxu0 0
      %389 = vmatpush1.bf16.msra.mxu0 %v376
      %390 = vmatprep.subr.bf16.mxu0 0
      %391 = vmatpush1.bf16.msra.mxu0 %v375
      %392 = vmatprep.subr.bf16.mxu0 0
      %393 = vmatpush1.bf16.msra.mxu0 %v374
      %394 = vmatprep.subr.bf16.mxu0 0
      %395 = vmatpush1.bf16.msra.mxu0 %v373
      %396 = vmatprep.subr.bf16.mxu0 0
      %397 = vmatpush1.bf16.msra.mxu0 %v372
      %398 = vmatprep.subr.bf16.mxu0 0
      %399 = vmatpush1.bf16.msra.mxu0 %v371
      %400 = vmatprep.subr.bf16.mxu0 0
      %401 = vmatpush1.bf16.msra.mxu0 %v370
      %402 = vmatprep.subr.bf16.mxu0 0
      %403 = vmatpush2.bf16.msra.mxu0 0
      %404 = vmatprep.subr.bf16.mxu0 0
      %405 = vmatpush2.bf16.msra.mxu0 0
      %406 = vmatprep.subr.bf16.mxu0 0
      %407 = vmatpush2.bf16.msra.mxu0 0
      %408 = vmatprep.subr.bf16.mxu0 0
      %409 = vmatpush2.bf16.msra.mxu0 0
      %410 = vmatprep.subr.bf16.mxu0 0
      %411 = vmatpush2.bf16.msra.mxu0 0
      %412 = vmatprep.subr.bf16.mxu0 0
      %413 = vmatpush2.bf16.msra.mxu0 0
      %414 = vmatprep.subr.bf16.mxu0 0
      %415 = vmatpush2.bf16.msra.mxu0 0
      %416 = vmatprep.subr.bf16.mxu0 0
      %417 = vmatpush2.bf16.msra.mxu0 0
      %418 = vmatprep.mubr.bf16.mxu0 0
      %419 = vmatmul.mubr.bf16.gmra.mxu0 %v204
      %v420 = vpop.f32.mrf.mxu0
      %v421 = vadd.f32 %v333, %v420
      %v422 = vpop.f32.mrf.mxu0
      %v423 = vpop.f32.mrf.mxu0
      %v424 = vpop.f32.mrf.mxu0
      %425 = vdwg.mxu0
      %v426 = vld [vmem:[%s195] sm:$0xe]
      %v427 = vld [vmem:[%s195 + $0x4] sm:$0x1]
      %s428 = scalar_lea.vmem %s1, 128
      %v429 = vld [vmem:[%s428] sm:$0xf]
      %v430 = vld [vmem:[%s428 + $0x4] sm:$0xf]
      %v431 = vld [vmem:[%s428 + $0x8] sm:$0xf]
      %v432 = vld [vmem:[%s428 + $0xc] sm:$0xf]
      %v433 = vld [vmem:[%s428 + $0x10] sm:$0xf]
      %v434 = vld [vmem:[%s428 + $0x14] sm:$0xf]
      %v435 = vld [vmem:[%s428 + $0x18] sm:$0xf]
      %v436 = vld [vmem:[%s428 + $0x1c] sm:$0xf]
      %v437 = vld [vmem:[%s428 + $0x20] sm:$0xf]
      %v438 = vld [vmem:[%s428 + $0x24] sm:$0xf]
      %v439 = vld [vmem:[%s428 + $0x28] sm:$0xf]
      %v440 = vld [vmem:[%s428 + $0x2c] sm:$0xf]
      %v441 = vld [vmem:[%s428 + $0x30] sm:$0xf]
      %v442 = vld [vmem:[%s428 + $0x34] sm:$0xf]
      %v443 = vld [vmem:[%s428 + $0x38] sm:$0xf]
      %v444 = vld [vmem:[%s428 + $0x3c] sm:$0xf]
      %v447 = vunpack.c.l.b16 %v426
      %v448 = vunpack.c.l.b16 %v427
      %v449 = vpack.c.b16 %v448, %v447
      %v451 = vshrl.u32 %v449, 16
      %v453 = vrot.slane %v451, 1
      %v454 = vshll.u32 %v449, 16
      %v456 = vrot.slane %v454, 2
      %v457 = vor.u32 %v453, %v456
      %v475 = vunpack.c.l.b16 %v429
      %v476 = vunpack.c.l.b16 %v430
      %v477 = vunpack.c.l.b16 %v431
      %v478 = vunpack.c.l.b16 %v432
      %v479 = vunpack.c.l.b16 %v433
      %v480 = vunpack.c.l.b16 %v434
      %v481 = vunpack.c.l.b16 %v435
      %v482 = vunpack.c.l.b16 %v436
      %v483 = vunpack.c.l.b16 %v437
      %v484 = vunpack.c.l.b16 %v438
      %v485 = vunpack.c.l.b16 %v439
      %v486 = vunpack.c.l.b16 %v440
      %v487 = vunpack.c.l.b16 %v441
      %v488 = vunpack.c.l.b16 %v442
      %v489 = vunpack.c.l.b16 %v443
      %v490 = vunpack.c.l.b16 %v444
      %v491 = vpack.c.b16 %v476, %v475
      %v492 = vpack.c.b16 %v478, %v477
      %v493 = vpack.c.b16 %v480, %v479
      %v494 = vpack.c.b16 %v482, %v481
      %v495 = vpack.c.b16 %v484, %v483
      %v496 = vpack.c.b16 %v486, %v485
      %v497 = vpack.c.b16 %v488, %v487
      %v498 = vpack.c.b16 %v490, %v489
      %507 = vmatprep.subr.bf16.mxu0 0
      %508 = vmatpush1.bf16.msra.mxu0 %v498
      %509 = vmatprep.subr.bf16.mxu0 0
      %510 = vmatpush1.bf16.msra.mxu0 %v497
      %511 = vmatprep.subr.bf16.mxu0 0
      %512 = vmatpush1.bf16.msra.mxu0 %v496
      %513 = vmatprep.subr.bf16.mxu0 0
      %514 = vmatpush1.bf16.msra.mxu0 %v495
      %515 = vmatprep.subr.bf16.mxu0 0
      %516 = vmatpush1.bf16.msra.mxu0 %v494
      %517 = vmatprep.subr.bf16.mxu0 0
      %518 = vmatpush1.bf16.msra.mxu0 %v493
      %519 = vmatprep.subr.bf16.mxu0 0
      %520 = vmatpush1.bf16.msra.mxu0 %v492
      %521 = vmatprep.subr.bf16.mxu0 0
      %522 = vmatpush1.bf16.msra.mxu0 %v491
      %523 = vmatprep.subr.bf16.mxu0 0
      %524 = vmatpush2.bf16.msra.mxu0 0
      %525 = vmatprep.subr.bf16.mxu0 0
      %526 = vmatpush2.bf16.msra.mxu0 0
      %527 = vmatprep.subr.bf16.mxu0 0
      %528 = vmatpush2.bf16.msra.mxu0 0
      %529 = vmatprep.subr.bf16.mxu0 0
      %530 = vmatpush2.bf16.msra.mxu0 0
      %531 = vmatprep.subr.bf16.mxu0 0
      %532 = vmatpush2.bf16.msra.mxu0 0
      %533 = vmatprep.subr.bf16.mxu0 0
      %534 = vmatpush2.bf16.msra.mxu0 0
      %535 = vmatprep.subr.bf16.mxu0 0
      %536 = vmatpush2.bf16.msra.mxu0 0
      %537 = vmatprep.subr.bf16.mxu0 0
      %538 = vmatpush2.bf16.msra.mxu0 0
      %539 = vmatprep.mubr.bf16.mxu0 0
      %540 = vmatmul.mubr.bf16.gmra.mxu0 %v457
      %v541 = vpop.f32.mrf.mxu0
      %v542 = vadd.f32 0.0, %v541
      %v543 = vpop.f32.mrf.mxu0
      %v544 = vpop.f32.mrf.mxu0
      %v545 = vpop.f32.mrf.mxu0
      %546 = vdwg.mxu0
      %v547 = vadd.f32 %v421, %v542
      %v548 = vld [vmem:[%s195] sm:$0xc]
      %s549 = scalar_lea.vmem %s1, 192
      %v550 = vld [vmem:[%s549] sm:$0xf]
      %v551 = vld [vmem:[%s549 + $0x4] sm:$0xf]
      %v552 = vld [vmem:[%s549 + $0x8] sm:$0xf]
      %v553 = vld [vmem:[%s549 + $0xc] sm:$0xf]
      %v554 = vld [vmem:[%s549 + $0x10] sm:$0xf]
      %v555 = vld [vmem:[%s549 + $0x14] sm:$0xf]
      %v556 = vld [vmem:[%s549 + $0x18] sm:$0xf]
      %v557 = vld [vmem:[%s549 + $0x1c] sm:$0xf]
      %v558 = vld [vmem:[%s549 + $0x20] sm:$0xf]
      %v559 = vld [vmem:[%s549 + $0x24] sm:$0xf]
      %v560 = vld [vmem:[%s549 + $0x28] sm:$0xf]
      %v561 = vld [vmem:[%s549 + $0x2c] sm:$0xf]
      %v562 = vld [vmem:[%s549 + $0x30] sm:$0xf]
      %v563 = vld [vmem:[%s549 + $0x34] sm:$0xf]
      %v564 = vld [vmem:[%s549 + $0x38] sm:$0xf]
      %v565 = vld [vmem:[%s549 + $0x3c] sm:$0xf]
      %v567 = vunpack.c.l.b16 %v548
      %v568 = vpack.c.b16 %v448, %v567
      %v569 = vrot.slane %v568, 2
      %v587 = vunpack.c.l.b16 %v550
      %v588 = vunpack.c.l.b16 %v551
      %v589 = vunpack.c.l.b16 %v552
      %v590 = vunpack.c.l.b16 %v553
      %v591 = vunpack.c.l.b16 %v554
      %v592 = vunpack.c.l.b16 %v555
      %v593 = vunpack.c.l.b16 %v556
      %v594 = vunpack.c.l.b16 %v557
      %v595 = vunpack.c.l.b16 %v558
      %v596 = vunpack.c.l.b16 %v559
      %v597 = vunpack.c.l.b16 %v560
      %v598 = vunpack.c.l.b16 %v561
      %v599 = vunpack.c.l.b16 %v562
      %v600 = vunpack.c.l.b16 %v563
      %v601 = vunpack.c.l.b16 %v564
      %v602 = vunpack.c.l.b16 %v565
      %v603 = vpack.c.b16 %v588, %v587
      %v604 = vpack.c.b16 %v590, %v589
      %v605 = vpack.c.b16 %v592, %v591
      %v606 = vpack.c.b16 %v594, %v593
      %v607 = vpack.c.b16 %v596, %v595
      %v608 = vpack.c.b16 %v598, %v597
      %v609 = vpack.c.b16 %v600, %v599
      %v610 = vpack.c.b16 %v602, %v601
      %619 = vmatprep.subr.bf16.mxu0 0
      %620 = vmatpush1.bf16.msra.mxu0 %v610
      %621 = vmatprep.subr.bf16.mxu0 0
      %622 = vmatpush1.bf16.msra.mxu0 %v609
      %623 = vmatprep.subr.bf16.mxu0 0
      %624 = vmatpush1.bf16.msra.mxu0 %v608
      %625 = vmatprep.subr.bf16.mxu0 0
      %626 = vmatpush1.bf16.msra.mxu0 %v607
      %627 = vmatprep.subr.bf16.mxu0 0
      %628 = vmatpush1.bf16.msra.mxu0 %v606
      %629 = vmatprep.subr.bf16.mxu0 0
      %630 = vmatpush1.bf16.msra.mxu0 %v605
      %631 = vmatprep.subr.bf16.mxu0 0
      %632 = vmatpush1.bf16.msra.mxu0 %v604
      %633 = vmatprep.subr.bf16.mxu0 0
      %634 = vmatpush1.bf16.msra.mxu0 %v603
      %635 = vmatprep.subr.bf16.mxu0 0
      %636 = vmatpush2.bf16.msra.mxu0 0
      %637 = vmatprep.subr.bf16.mxu0 0
      %638 = vmatpush2.bf16.msra.mxu0 0
      %639 = vmatprep.subr.bf16.mxu0 0
      %640 = vmatpush2.bf16.msra.mxu0 0
      %641 = vmatprep.subr.bf16.mxu0 0
      %642 = vmatpush2.bf16.msra.mxu0 0
      %643 = vmatprep.subr.bf16.mxu0 0
      %644 = vmatpush2.bf16.msra.mxu0 0
      %645 = vmatprep.subr.bf16.mxu0 0
      %646 = vmatpush2.bf16.msra.mxu0 0
      %647 = vmatprep.subr.bf16.mxu0 0
      %648 = vmatpush2.bf16.msra.mxu0 0
      %649 = vmatprep.subr.bf16.mxu0 0
      %650 = vmatpush2.bf16.msra.mxu0 0
      %651 = vmatprep.mubr.bf16.mxu0 0
      %652 = vmatmul.mubr.bf16.gmra.mxu0 %v569
      %v653 = vpop.f32.mrf.mxu0
      %v654 = vadd.f32 0.0, %v653
      %v655 = vpop.f32.mrf.mxu0
      %v656 = vpop.f32.mrf.mxu0
      %v657 = vpop.f32.mrf.mxu0
      %658 = vdwg.mxu0
      %v659 = vadd.f32 %v547, %v654
      %v660 = vld [vmem:[%s2] sm:$0x1]
      %v662 = vlaneseq
      %v663 = vshrl.u32 %v662, 7
      %v664 = vsub.s32 0, %v663
      %v665 = vrot.slane %v660, %v664
      %v667 = vadd.f32 %v659, %v665
      %vm668 = vcmp.gt.f32.partialorder %v667, 0.0
      %v669 = vmul.f32 %v667, 0.2
      %v670 = vsel %vm668, %v667, %v669
      %v671 = vpack.c.bf16 %v670, %v670
      %672 = vst [vmem:[%s202] sm:$0x7] %v671
      %p673 = scmp.lt.s32.totalorder %s18, 1
      %s674 = scalar_select %p673, %s18, 1
      %p675 = scmp.lt.s32.totalorder %s19, 0
      %s676 = scalar_select %p675, %s19, 0
      %s677 = sadd.s32 %s676, %s674
      %s678 = smul.addr %s677, 4
      %s679 = scalar_lea.vmem %s3, %s678
      // Predicated region
      $region33: #{fc_discriminator_forward.8} parent=31 // pred_check
        %p680 = pneg %p116
      $region34: #{fc_discriminator_forward.8} parent=31 // pred_check_branch
        %682 = sbr.rel (%p680) target = $region36
      $region35: #{fc_discriminator_forward.8} parent=31 // pred_region
        _
      $region36: #{fc_discriminator_forward.8} parent=31 // pred_fallthru
        _
    $region32: #{fc_discriminator_forward.8} parent=5 // pred_fallthru
      _
    %p683 = scmp.le.s32.totalorder 2, %s9
    // Predicated region
    $region37: #{fc_discriminator_forward.8} parent=5 // pred_check
      %p684 = pneg %p683
    $region38: #{fc_discriminator_forward.8} parent=5 // pred_check_branch
      %686 = sbr.rel (%p684) target = $region40
    $region39: #{fc_discriminator_forward.8} parent=5 // pred_region
      %s687 = ssub.s32 %s9, 2
      // Predicated region
      $region41: #{fc_discriminator_forward.8} parent=39 // pred_check
        %p688 = pneg %p122
      $region42: #{fc_discriminator_forward.8} parent=39 // pred_check_branch
        %690 = sbr.rel (%p688) target = $region44
      $region43: #{fc_discriminator_forward.8} parent=39 // pred_region
        %p691 = scmp.lt.s32.totalorder %s20, 1
        %s692 = scalar_select %p691, %s20, 1
        %p693 = scmp.lt.s32.totalorder %s21, 0
        %s694 = scalar_select %p693, %s21, 0
        %s695 = sadd.s32 %s694, %s692
        %s696 = smul.addr %s695, 4
        %s697 = scalar_lea.vmem %s3, %s696
      $region44: #{fc_discriminator_forward.8} parent=39 // pred_fallthru
        _
    $region40: #{fc_discriminator_forward.8} parent=5 // pred_fallthru
      _
  $region6: #{fc_discriminator_forward.8} parent=0 // loop_footer
    %s13 = sadd.s32 1, %s9
  $region7: #{fc_discriminator_forward.8} parent=0 // loop_footer_branch
    %8 = sbr.rel target = $region3
  $region8: #{fc_discriminator_forward.8} parent=0 // loop_exit
    _

// kernel: fc_discriminator_forward.9
$region0: #{fc_discriminator_forward.9}
  #allocation0 [shape = 'u32[]', space=smem, size = 0x4, offset = 0x4, fixed_abs, tag = 'smem constant byte address 0x4 - core index']
  #allocation1 [shape = 'u32[144,128]{1,0:T(1,128)}', space=vmem, size = 0x12000, scoped, tag = 'internal scratch']
  %s0 = inlined_call_operand.vmem [shape: bf16[2,1,5,256], index: 0, kind: input, shape index: {}]
  %s1 = inlined_call_operand.vmem [shape: bf16[4,256,128], index: 1, kind: input, shape index: {}]
  %s2 = inlined_call_operand.vmem [shape: f32[1,128], index: 2, kind: input, shape index: {}]
  %s3 = inlined_call_operand.vmem [shape: f32[2,1,2,128], index: 3, kind: output, shape index: {}]
  %s4 = sld [smem:[#allocation0]]
  $region45: #{fc_discriminator_forward.9} parent=0
    _
  %s6 = ssub.s32 1, %s4
  %s7 = scalar_select 0, %s6, %s4
  loop: start=0, step=1, limit=4
  $region2: #{fc_discriminator_forward.9} parent=0 // loop_pre_header
    _
  $region3: #{fc_discriminator_forward.9} parent=0 // loop_header
    %s9 = sphi 0, %s13
    %p10 = scmp.ge.s32.totalorder %s9, 4
    %s16 = sphi 0, %s28
    %s17 = sphi 0, %s24
    %s18 = sphi 0, %s16
    %s19 = sphi 0, %s17
    %s20 = sphi 0, %s18
    %s21 = sphi 0, %s19
    %s33 = sphi 0, %s35
    %s36 = sphi 0, %s33
    %s37 = sphi 0, %s36
    %s53 = sphi 0, %s37
    %s57 = sphi 0, %s57
    %s59 = sphi 0, %s57
    %s60 = sphi 0, %s59
    %s74 = sphi 0, %s60
    %s78 = sphi 0, %s78
    %s80 = sphi 0, %s78
    %s81 = sphi 0, %s80
    %s95 = sphi 0, %s81
    %s103 = sphi 0, %s105
    %s106 = sphi 0, %s103
    %s107 = sphi 0, %s106
    %s123 = sphi 0, %s107
  $region4: #{fc_discriminator_forward.9} parent=0 // loop_header_branch
    %12 = sbr.rel (%p10) target = $region8
  $region5: #{fc_discriminator_forward.9} parent=0 // loop_body
    %s14 = ssub.s32 %s9, 1
    %s15 = ssub.s32 %s9, 2
    %s22 = sadd.s32 1, %s17
    %p23 = scmp.ge.s32.totalorder %s22, 1
    %s24 = scalar_select %p23, 0, %s22
    %s25 = sadd.s32 1, %s16
    %s26 = scalar_select %p23, %s25, %s16
    %p27 = scmp.ge.s32.totalorder %s26, 2
    %s28 = scalar_select %p27, 0, %s26
    %s29 = ssub.s32 %s16, %s28
    %s30 = ssub.s32 %s17, %s24
    %s31 = sor.u32 %s29, %s30
    %p32 = scmp.eq.s32.totalorder %s31, 0
    %s34 = sadd.s32 %s33, 1
    %s35 = scalar_select %p32, %s33, %s34
    %p38 = pneg %p32
    %p39 = scmp.eq.s32.totalorder %s9, 1
    %p40 = por %p38, %p39
    %p41 = scmp.ne.s32.totalorder %s33, %s36
    %p42 = scmp.eq.s32.totalorder %s9, 0
    %p43 = por %p41, %p42
    %p44 = scmp.ne.s32.totalorder %s33, %s36
    %p45 = scmp.eq.s32.totalorder %s14, 1
    %p46 = por %p44, %p45
    %p47 = scmp.ne.s32.totalorder %s36, %s37
    %p48 = scmp.eq.s32.totalorder %s14, 0
    %p49 = por %p47, %p48
    %p50 = scmp.ne.s32.totalorder %s36, %s37
    %p51 = scmp.eq.s32.totalorder %s15, 1
    %p52 = por %p50, %p51
    %p54 = scmp.ne.s32.totalorder %s37, %s53
    %p55 = scmp.eq.s32.totalorder %s15, 0
    %p56 = por %p54, %p55
    %s58 = sadd.s32 %s57, 1
    %p61 = scmp.eq.s32.totalorder %s9, 1
    %p62 = scmp.ne.s32.totalorder %s57, %s59
    %p63 = scmp.eq.s32.totalorder %s9, 0
    %p64 = por %p62, %p63
    %p65 = scmp.ne.s32.totalorder %s57, %s59
    %p66 = scmp.eq.s32.totalorder %s14, 1
    %p67 = por %p65, %p66
    %p68 = scmp.ne.s32.totalorder %s59, %s60
    %p69 = scmp.eq.s32.totalorder %s14, 0
    %p70 = por %p68, %p69
    %p71 = scmp.ne.s32.totalorder %s59, %s60
    %p72 = scmp.eq.s32.totalorder %s15, 1
    %p73 = por %p71, %p72
    %p75 = scmp.ne.s32.totalorder %s60, %s74
    %p76 = scmp.eq.s32.totalorder %s15, 0
    %p77 = por %p75, %p76
    %s79 = sadd.s32 %s78, 1
    %p82 = scmp.eq.s32.totalorder %s9, 1
    %p83 = scmp.ne.s32.totalorder %s78, %s80
    %p84 = scmp.eq.s32.totalorder %s9, 0
    %p85 = por %p83, %p84
    %p86 = scmp.ne.s32.totalorder %s78, %s80
    %p87 = scmp.eq.s32.totalorder %s14, 1
    %p88 = por %p86, %p87
    %p89 = scmp.ne.s32.totalorder %s80, %s81
    %p90 = scmp.eq.s32.totalorder %s14, 0
    %p91 = por %p89, %p90
    %p92 = scmp.ne.s32.totalorder %s80, %s81
    %p93 = scmp.eq.s32.totalorder %s15, 1
    %p94 = por %p92, %p93
    %p96 = scmp.ne.s32.totalorder %s81, %s95
    %p97 = scmp.eq.s32.totalorder %s15, 0
    %p98 = por %p96, %p97
    %s99 = ssub.s32 %s16, %s28
    %s100 = ssub.s32 %s17, %s24
    %s101 = sor.u32 %s99, %s100
    %p102 = scmp.eq.s32.totalorder %s101, 0
    %s104 = sadd.s32 %s103, 1
    %s105 = scalar_select %p102, %s103, %s104
    %p108 = pneg %p102
    %p109 = scmp.eq.s32.totalorder %s9, 1
    %p110 = por %p108, %p109
    %p111 = scmp.ne.s32.totalorder %s103, %s106
    %p112 = scmp.eq.s32.totalorder %s9, 0
    %p113 = por %p111, %p112
    %p114 = scmp.ne.s32.totalorder %s103, %s106
    %p115 = scmp.eq.s32.totalorder %s14, 1
    %p116 = por %p114, %p115
    %p117 = scmp.ne.s32.totalorder %s106, %s107
    %p118 = scmp.eq.s32.totalorder %s14, 0
    %p119 = por %p117, %p118
    %p120 = scmp.ne.s32.totalorder %s106, %s107
    %p121 = scmp.eq.s32.totalorder %s15, 1
    %p122 = por %p120, %p121
    %p124 = scmp.ne.s32.totalorder %s107, %s123
    %p125 = scmp.eq.s32.totalorder %s15, 0
    %p126 = por %p124, %p125
    %p127 = scmp.le.s32.totalorder 1, %s9
    %p128 = scmp.lt.s32.totalorder %s9, 3
    %p129 = pnand %p127, %p128
    %p130 = pneg %p129
    // Predicated region
    $region9: #{fc_discriminator_forward.9} parent=5 // pred_check
      _
    $region10: #{fc_discriminator_forward.9} parent=5 // pred_check_branch
      %132 = sbr.rel (%p129) target = $region12
    $region11: #{fc_discriminator_forward.9} parent=5 // pred_region
      %s133 = ssub.s32 %s9, 1
      // Predicated region
      $region13: #{fc_discriminator_forward.9} parent=11 // pred_check
        %p134 = pneg %p70
      $region14: #{fc_discriminator_forward.9} parent=11 // pred_check_branch
        %136 = sbr.rel (%p134) target = $region16
      $region15: #{fc_discriminator_forward.9} parent=11 // pred_region
        _
      $region16: #{fc_discriminator_forward.9} parent=11 // pred_fallthru
        _
      // Predicated region
      $region17: #{fc_discriminator_forward.9} parent=11 // pred_check
        %p137 = pneg %p91
      $region18: #{fc_discriminator_forward.9} parent=11 // pred_check_branch
        %139 = sbr.rel (%p137) target = $region20
      $region19: #{fc_discriminator_forward.9} parent=11 // pred_region
        _
      $region20: #{fc_discriminator_forward.9} parent=11 // pred_fallthru
        _
    $region12: #{fc_discriminator_forward.9} parent=5 // pred_fallthru
      _
    %p140 = scmp.lt.s32.totalorder %s9, 2
    // Predicated region
    $region21: #{fc_discriminator_forward.9} parent=5 // pred_check
      %p141 = pneg %p140
    $region22: #{fc_discriminator_forward.9} parent=5 // pred_check_branch
      %143 = sbr.rel (%p141) target = $region24
    $region23: #{fc_discriminator_forward.9} parent=5 // pred_region
      // Predicated region
      $region25: #{fc_discriminator_forward.9} parent=23 // pred_check
        %p144 = pneg %p43
      $region26: #{fc_discriminator_forward.9} parent=23 // pred_check_branch
        %146 = sbr.rel (%p144) target = $region28
      $region27: #{fc_discriminator_forward.9} parent=23 // pred_region
        %p147 = scmp.lt.s32.totalorder %s16, 1
        %s148 = scalar_select %p147, %s16, 1
        %p149 = scmp.lt.s32.totalorder %s17, 0
        %s150 = scalar_select %p149, %s17, 0
        %s151 = smul.addr %s150, 2
        %s152 = smul.addr %s148, 2
        %s153 = sadd.s32 %s151, %s152
        %s154 = smul.addr %s153, 4
        %s155 = scalar_lea.vmem %s0, %s154
      $region28: #{fc_discriminator_forward.9} parent=23 // pred_fallthru
        _
    $region24: #{fc_discriminator_forward.9} parent=5 // pred_fallthru
      _
    %p156 = scmp.le.s32.totalorder 1, %s9
    %p157 = scmp.lt.s32.totalorder %s9, 3
    %p158 = pnand %p156, %p157
    %p159 = pneg %p158
    // Predicated region
    $region29: #{fc_discriminator_forward.9} parent=5 // pred_check
      _
    $region30: #{fc_discriminator_forward.9} parent=5 // pred_check_branch
      %161 = sbr.rel (%p158) target = $region32
    $region31: #{fc_discriminator_forward.9} parent=5 // pred_region
      %s162 = ssub.s32 %s9, 1
      %p163 = scmp.lt.s32.totalorder %s18, 1
      %s164 = scalar_select %p163, %s18, 1
      %p165 = scmp.lt.s32.totalorder %s19, 0
      %s166 = scalar_select %p165, %s19, 0
      %s167 = smul.addr %s166, 2
      %s168 = smul.addr %s164, 2
      %s169 = sadd.s32 %s167, %s168
      %s170 = smul.addr %s169, 4
      %s171 = scalar_lea.vmem %s0, %s170
      %p172 = pneg %p49
      %p173 = pneg %p46
      %p174 = pneg %p70
      %p175 = pneg %p67
      %p176 = pneg %p91
      %p177 = pneg %p88
      %p178 = pneg %p119
      %p179 = pneg %p116
      %p180 = scmp.lt.s32.totalorder %s18, 1
      %s181 = scalar_select %p180, %s18, 1
      %p182 = scmp.lt.s32.totalorder %s19, 0
      %s183 = scalar_select %p182, %s19, 0
      %s184 = sadd.s32 %s183, %s181
      %s185 = smul.addr %s184, 2
      %s186 = scalar_lea.vmem %s3, %s185
      %p187 = scmp.lt.s32.totalorder %s18, 1
      %s188 = scalar_select %p187, %s18, 1
      %p189 = scmp.lt.s32.totalorder %s19, 0
      %s190 = scalar_select %p189, %s19, 0
      %s191 = smul.addr %s190, 2
      %s192 = smul.addr %s188, 2
      %s193 = sadd.s32 %s191, %s192
      %s194 = smul.addr %s193, 4
      %s195 = scalar_lea.vmem %s0, %s194
      %p196 = scmp.lt.s32.totalorder %s18, 1
      %s197 = scalar_select %p196, %s18, 1
      %p198 = scmp.lt.s32.totalorder %s19, 0
      %s199 = scalar_select %p198, %s19, 0
      %s200 = sadd.s32 %s199, %s197
      %s201 = smul.addr %s200, 2
      %s202 = scalar_lea.vmem %s3, %s201
      %v204 = vld [vmem:[%s195] sm:$0x11]
      %v205 = vld [vmem:[%s1] sm:$0xf]
      %v206 = vld [vmem:[%s1 + $0x4] sm:$0xf]
      %v207 = vld [vmem:[%s1 + $0x8] sm:$0xf]
      %v208 = vld [vmem:[%s1 + $0xc] sm:$0xf]
      %v209 = vld [vmem:[%s1 + $0x10] sm:$0xf]
      %v210 = vld [vmem:[%s1 + $0x14] sm:$0xf]
      %v211 = vld [vmem:[%s1 + $0x18] sm:$0xf]
      %v212 = vld [vmem:[%s1 + $0x1c] sm:$0xf]
      %v213 = vld [vmem:[%s1 + $0x20] sm:$0xf]
      %v214 = vld [vmem:[%s1 + $0x24] sm:$0xf]
      %v215 = vld [vmem:[%s1 + $0x28] sm:$0xf]
      %v216 = vld [vmem:[%s1 + $0x2c] sm:$0xf]
      %v217 = vld [vmem:[%s1 + $0x30] sm:$0xf]
      %v218 = vld [vmem:[%s1 + $0x34] sm:$0xf]
      %v219 = vld [vmem:[%s1 + $0x38] sm:$0xf]
      %v220 = vld [vmem:[%s1 + $0x3c] sm:$0xf]
      %v221 = vld [vmem:[%s1 + $0x40] sm:$0xf]
      %v222 = vld [vmem:[%s1 + $0x44] sm:$0xf]
      %v223 = vld [vmem:[%s1 + $0x48] sm:$0xf]
      %v224 = vld [vmem:[%s1 + $0x4c] sm:$0xf]
      %v225 = vld [vmem:[%s1 + $0x50] sm:$0xf]
      %v226 = vld [vmem:[%s1 + $0x54] sm:$0xf]
      %v227 = vld [vmem:[%s1 + $0x58] sm:$0xf]
      %v228 = vld [vmem:[%s1 + $0x5c] sm:$0xf]
      %v229 = vld [vmem:[%s1 + $0x60] sm:$0xf]
      %v230 = vld [vmem:[%s1 + $0x64] sm:$0xf]
      %v231 = vld [vmem:[%s1 + $0x68] sm:$0xf]
      %v232 = vld [vmem:[%s1 + $0x6c] sm:$0xf]
      %v233 = vld [vmem:[%s1 + $0x70] sm:$0xf]
      %v234 = vld [vmem:[%s1 + $0x74] sm:$0xf]
      %v235 = vld [vmem:[%s1 + $0x78] sm:$0xf]
      %v236 = vld [vmem:[%s1 + $0x7c] sm:$0xf]
      %v237 = vld [vmem:[%s195] sm:$0x33]
      %s238 = scalar_lea.vmem %s1, 128
      %v239 = vld [vmem:[%s238] sm:$0xf]
      %v240 = vld [vmem:[%s238 + $0x4] sm:$0xf]
      %v241 = vld [vmem:[%s238 + $0x8] sm:$0xf]
      %v242 = vld [vmem:[%s238 + $0xc] sm:$0xf]
      %v243 = vld [vmem:[%s238 + $0x10] sm:$0xf]
      %v244 = vld [vmem:[%s238 + $0x14] sm:$0xf]
      %v245 = vld [vmem:[%s238 + $0x18] sm:$0xf]
      %v246 = vld [vmem:[%s238 + $0x1c] sm:$0xf]
      %v247 = vld [vmem:[%s238 + $0x20] sm:$0xf]
      %v248 = vld [vmem:[%s238 + $0x24] sm:$0xf]
      %v249 = vld [vmem:[%s238 + $0x28] sm:$0xf]
      %v250 = vld [vmem:[%s238 + $0x2c] sm:$0xf]
      %v251 = vld [vmem:[%s238 + $0x30] sm:$0xf]
      %v252 = vld [vmem:[%s238 + $0x34] sm:$0xf]
      %v253 = vld [vmem:[%s238 + $0x38] sm:$0xf]
      %v254 = vld [vmem:[%s238 + $0x3c] sm:$0xf]
      %v255 = vld [vmem:[%s238 + $0x40] sm:$0xf]
      %v256 = vld [vmem:[%s238 + $0x44] sm:$0xf]
      %v257 = vld [vmem:[%s238 + $0x48] sm:$0xf]
      %v258 = vld [vmem:[%s238 + $0x4c] sm:$0xf]
      %v259 = vld [vmem:[%s238 + $0x50] sm:$0xf]
      %v260 = vld [vmem:[%s238 + $0x54] sm:$0xf]
      %v261 = vld [vmem:[%s238 + $0x58] sm:$0xf]
      %v262 = vld [vmem:[%s238 + $0x5c] sm:$0xf]
      %v263 = vld [vmem:[%s238 + $0x60] sm:$0xf]
      %v264 = vld [vmem:[%s238 + $0x64] sm:$0xf]
      %v265 = vld [vmem:[%s238 + $0x68] sm:$0xf]
      %v266 = vld [vmem:[%s238 + $0x6c] sm:$0xf]
      %v267 = vld [vmem:[%s238 + $0x70] sm:$0xf]
      %v268 = vld [vmem:[%s238 + $0x74] sm:$0xf]
      %v269 = vld [vmem:[%s238 + $0x78] sm:$0xf]
      %v270 = vld [vmem:[%s238 + $0x7c] sm:$0xf]
      %v272 = vunpack.c.l.b16 %v237
      %v273 = vunpack.c.h.b16 %v237
      %v274 = vpack.c.b16 %v272, %v272
      %v275 = vpack.c.b16 %v273, %v273
      %v277 = vshrl.u32 %v274, 16
      %v279 = vshll.u32 %v274, 16
      %v281 = vrot.slane %v279, 1
      %v282 = vor.u32 %v277, %v281
      %v284 = vshrl.u32 %v275, 16
      %v286 = vshll.u32 %v275, 16
      %v288 = vrot.slane %v286, 1
      %v289 = vor.u32 %v284, %v288
      %v324 = vunpack.c.l.b16 %v239
      %v325 = vunpack.c.l.b16 %v240
      %v326 = vunpack.c.l.b16 %v241
      %v327 = vunpack.c.l.b16 %v242
      %v328 = vunpack.c.l.b16 %v243
      %v329 = vunpack.c.l.b16 %v244
      %v330 = vunpack.c.l.b16 %v245
      %v331 = vunpack.c.l.b16 %v246
      %v332 = vunpack.c.l.b16 %v247
      %v333 = vunpack.c.l.b16 %v248
      %v334 = vunpack.c.l.b16 %v249
      %v335 = vunpack.c.l.b16 %v250
      %v336 = vunpack.c.l.b16 %v251
      %v337 = vunpack.c.l.b16 %v252
      %v338 = vunpack.c.l.b16 %v253
      %v339 = vunpack.c.l.b16 %v254
      %v340 = vunpack.c.l.b16 %v255
      %v341 = vunpack.c.l.b16 %v256
      %v342 = vunpack.c.l.b16 %v257
      %v343 = vunpack.c.l.b16 %v258
      %v344 = vunpack.c.l.b16 %v259
      %v345 = vunpack.c.l.b16 %v260
      %v346 = vunpack.c.l.b16 %v261
      %v347 = vunpack.c.l.b16 %v262
      %v348 = vunpack.c.l.b16 %v263
      %v349 = vunpack.c.l.b16 %v264
      %v350 = vunpack.c.l.b16 %v265
      %v351 = vunpack.c.l.b16 %v266
      %v352 = vunpack.c.l.b16 %v267
      %v353 = vunpack.c.l.b16 %v268
      %v354 = vunpack.c.l.b16 %v269
      %v355 = vunpack.c.l.b16 %v270
      %v356 = vpack.c.b16 %v325, %v324
      %v357 = vpack.c.b16 %v327, %v326
      %v358 = vpack.c.b16 %v329, %v328
      %v359 = vpack.c.b16 %v331, %v330
      %v360 = vpack.c.b16 %v333, %v332
      %v361 = vpack.c.b16 %v335, %v334
      %v362 = vpack.c.b16 %v337, %v336
      %v363 = vpack.c.b16 %v339, %v338
      %v364 = vpack.c.b16 %v341, %v340
      %v365 = vpack.c.b16 %v343, %v342
      %v366 = vpack.c.b16 %v345, %v344
      %v367 = vpack.c.b16 %v347, %v346
      %v368 = vpack.c.b16 %v349, %v348
      %v369 = vpack.c.b16 %v351, %v350
      %v370 = vpack.c.b16 %v353, %v352
      %v371 = vpack.c.b16 %v355, %v354
      %388 = vmatprep.subr.bf16.mxu0 0
      %389 = vmatpush1.bf16.msra.mxu0 %v363
      %390 = vmatprep.subr.bf16.mxu0 0
      %391 = vmatpush1.bf16.msra.mxu0 %v362
      %392 = vmatprep.subr.bf16.mxu0 0
      %393 = vmatpush1.bf16.msra.mxu0 %v361
      %394 = vmatprep.subr.bf16.mxu0 0
      %395 = vmatpush1.bf16.msra.mxu0 %v360
      %396 = vmatprep.subr.bf16.mxu0 0
      %397 = vmatpush1.bf16.msra.mxu0 %v359
      %398 = vmatprep.subr.bf16.mxu0 0
      %399 = vmatpush1.bf16.msra.mxu0 %v358
      %400 = vmatprep.subr.bf16.mxu0 0
      %401 = vmatpush1.bf16.msra.mxu0 %v357
      %402 = vmatprep.subr.bf16.mxu0 0
      %403 = vmatpush1.bf16.msra.mxu0 %v356
      %404 = vmatprep.subr.bf16.mxu0 0
      %405 = vmatpush2.bf16.msra.mxu0 %v371
      %406 = vmatprep.subr.bf16.mxu0 0
      %407 = vmatpush2.bf16.msra.mxu0 %v370
      %408 = vmatprep.subr.bf16.mxu0 0
      %409 = vmatpush2.bf16.msra.mxu0 %v369
      %410 = vmatprep.subr.bf16.mxu0 0
      %411 = vmatpush2.bf16.msra.mxu0 %v368
      %412 = vmatprep.subr.bf16.mxu0 0
      %413 = vmatpush2.bf16.msra.mxu0 %v367
      %414 = vmatprep.subr.bf16.mxu0 0
      %415 = vmatpush2.bf16.msra.mxu0 %v366
      %416 = vmatprep.subr.bf16.mxu0 0
      %417 = vmatpush2.bf16.msra.mxu0 %v365
      %418 = vmatprep.subr.bf16.mxu0 0
      %419 = vmatpush2.bf16.msra.mxu0 %v364
      %420 = vmatprep.mubr.bf16.mxu0 %v289
      %421 = vmatmul.mubr.bf16.gmra.mxu0 %v282
      %v422 = vpop.f32.mrf.mxu0
      %v423 = vadd.f32 0.0, %v422
      %v424 = vpop.f32.mrf.mxu0
      %v425 = vpop.f32.mrf.mxu0
      %v426 = vpop.f32.mrf.mxu0
      %427 = vdwg.mxu0
      %v429 = vunpack.c.l.b16 %v204
      %v430 = vunpack.c.h.b16 %v204
      %v431 = vpack.c.b16 %v429, %v429
      %v432 = vpack.c.b16 %v430, %v430
      %v467 = vunpack.c.l.b16 %v205
      %v468 = vunpack.c.l.b16 %v206
      %v469 = vunpack.c.l.b16 %v207
      %v470 = vunpack.c.l.b16 %v208
      %v471 = vunpack.c.l.b16 %v209
      %v472 = vunpack.c.l.b16 %v210
      %v473 = vunpack.c.l.b16 %v211
      %v474 = vunpack.c.l.b16 %v212
      %v475 = vunpack.c.l.b16 %v213
      %v476 = vunpack.c.l.b16 %v214
      %v477 = vunpack.c.l.b16 %v215
      %v478 = vunpack.c.l.b16 %v216
      %v479 = vunpack.c.l.b16 %v217
      %v480 = vunpack.c.l.b16 %v218
      %v481 = vunpack.c.l.b16 %v219
      %v482 = vunpack.c.l.b16 %v220
      %v483 = vunpack.c.l.b16 %v221
      %v484 = vunpack.c.l.b16 %v222
      %v485 = vunpack.c.l.b16 %v223
      %v486 = vunpack.c.l.b16 %v224
      %v487 = vunpack.c.l.b16 %v225
      %v488 = vunpack.c.l.b16 %v226
      %v489 = vunpack.c.l.b16 %v227
      %v490 = vunpack.c.l.b16 %v228
      %v491 = vunpack.c.l.b16 %v229
      %v492 = vunpack.c.l.b16 %v230
      %v493 = vunpack.c.l.b16 %v231
      %v494 = vunpack.c.l.b16 %v232
      %v495 = vunpack.c.l.b16 %v233
      %v496 = vunpack.c.l.b16 %v234
      %v497 = vunpack.c.l.b16 %v235
      %v498 = vunpack.c.l.b16 %v236
      %v499 = vpack.c.b16 %v468, %v467
      %v500 = vpack.c.b16 %v470, %v469
      %v501 = vpack.c.b16 %v472, %v471
      %v502 = vpack.c.b16 %v474, %v473
      %v503 = vpack.c.b16 %v476, %v475
      %v504 = vpack.c.b16 %v478, %v477
      %v505 = vpack.c.b16 %v480, %v479
      %v506 = vpack.c.b16 %v482, %v481
      %v507 = vpack.c.b16 %v484, %v483
      %v508 = vpack.c.b16 %v486, %v485
      %v509 = vpack.c.b16 %v488, %v487
      %v510 = vpack.c.b16 %v490, %v489
      %v511 = vpack.c.b16 %v492, %v491
      %v512 = vpack.c.b16 %v494, %v493
      %v513 = vpack.c.b16 %v496, %v495
      %v514 = vpack.c.b16 %v498, %v497
      %531 = vmatprep.subr.bf16.mxu0 0
      %532 = vmatpush1.bf16.msra.mxu0 %v506
      %533 = vmatprep.subr.bf16.mxu0 0
      %534 = vmatpush1.bf16.msra.mxu0 %v505
      %535 = vmatprep.subr.bf16.mxu0 0
      %536 = vmatpush1.bf16.msra.mxu0 %v504
      %537 = vmatprep.subr.bf16.mxu0 0
      %538 = vmatpush1.bf16.msra.mxu0 %v503
      %539 = vmatprep.subr.bf16.mxu0 0
      %540 = vmatpush1.bf16.msra.mxu0 %v502
      %541 = vmatprep.subr.bf16.mxu0 0
      %542 = vmatpush1.bf16.msra.mxu0 %v501
      %543 = vmatprep.subr.bf16.mxu0 0
      %544 = vmatpush1.bf16.msra.mxu0 %v500
      %545 = vmatprep.subr.bf16.mxu0 0
      %546 = vmatpush1.bf16.msra.mxu0 %v499
      %547 = vmatprep.subr.bf16.mxu0 0
      %548 = vmatpush2.bf16.msra.mxu0 %v514
      %549 = vmatprep.subr.bf16.mxu0 0
      %550 = vmatpush2.bf16.msra.mxu0 %v513
      %551 = vmatprep.subr.bf16.mxu0 0
      %552 = vmatpush2.bf16.msra.mxu0 %v512
      %553 = vmatprep.subr.bf16.mxu0 0
      %554 = vmatpush2.bf16.msra.mxu0 %v511
      %555 = vmatprep.subr.bf16.mxu0 0
      %556 = vmatpush2.bf16.msra.mxu0 %v510
      %557 = vmatprep.subr.bf16.mxu0 0
      %558 = vmatpush2.bf16.msra.mxu0 %v509
      %559 = vmatprep.subr.bf16.mxu0 0
      %560 = vmatpush2.bf16.msra.mxu0 %v508
      %561 = vmatprep.subr.bf16.mxu0 0
      %562 = vmatpush2.bf16.msra.mxu0 %v507
      %563 = vmatprep.mubr.bf16.mxu0 %v432
      %564 = vmatmul.mubr.bf16.gmra.mxu0 %v431
      %v565 = vpop.f32.mrf.mxu0
      %v566 = vadd.f32 %v423, %v565
      %v567 = vpop.f32.mrf.mxu0
      %v568 = vpop.f32.mrf.mxu0
      %v569 = vpop.f32.mrf.mxu0
      %570 = vdwg.mxu0
      %v571 = vld [vmem:[%s195] sm:$0x22]
      %s572 = scalar_lea.vmem %s1, 256
      %v573 = vld [vmem:[%s572] sm:$0xf]
      %v574 = vld [vmem:[%s572 + $0x4] sm:$0xf]
      %v575 = vld [vmem:[%s572 + $0x8] sm:$0xf]
      %v576 = vld [vmem:[%s572 + $0xc] sm:$0xf]
      %v577 = vld [vmem:[%s572 + $0x10] sm:$0xf]
      %v578 = vld [vmem:[%s572 + $0x14] sm:$0xf]
      %v579 = vld [vmem:[%s572 + $0x18] sm:$0xf]
      %v580 = vld [vmem:[%s572 + $0x1c] sm:$0xf]
      %v581 = vld [vmem:[%s572 + $0x20] sm:$0xf]
      %v582 = vld [vmem:[%s572 + $0x24] sm:$0xf]
      %v583 = vld [vmem:[%s572 + $0x28] sm:$0xf]
      %v584 = vld [vmem:[%s572 + $0x2c] sm:$0xf]
      %v585 = vld [vmem:[%s572 + $0x30] sm:$0xf]
      %v586 = vld [vmem:[%s572 + $0x34] sm:$0xf]
      %v587 = vld [vmem:[%s572 + $0x38] sm:$0xf]
      %v588 = vld [vmem:[%s572 + $0x3c] sm:$0xf]
      %v589 = vld [vmem:[%s572 + $0x40] sm:$0xf]
      %v590 = vld [vmem:[%s572 + $0x44] sm:$0xf]
      %v591 = vld [vmem:[%s572 + $0x48] sm:$0xf]
      %v592 = vld [vmem:[%s572 + $0x4c] sm:$0xf]
      %v593 = vld [vmem:[%s572 + $0x50] sm:$0xf]
      %v594 = vld [vmem:[%s572 + $0x54] sm:$0xf]
      %v595 = vld [vmem:[%s572 + $0x58] sm:$0xf]
      %v596 = vld [vmem:[%s572 + $0x5c] sm:$0xf]
      %v597 = vld [vmem:[%s572 + $0x60] sm:$0xf]
      %v598 = vld [vmem:[%s572 + $0x64] sm:$0xf]
      %v599 = vld [vmem:[%s572 + $0x68] sm:$0xf]
      %v600 = vld [vmem:[%s572 + $0x6c] sm:$0xf]
      %v601 = vld [vmem:[%s572 + $0x70] sm:$0xf]
      %v602 = vld [vmem:[%s572 + $0x74] sm:$0xf]
      %v603 = vld [vmem:[%s572 + $0x78] sm:$0xf]
      %v604 = vld [vmem:[%s572 + $0x7c] sm:$0xf]
      %v606 = vunpack.c.l.b16 %v571
      %v607 = vunpack.c.h.b16 %v571
      %v608 = vpack.c.b16 %v606, %v606
      %v609 = vpack.c.b16 %v607, %v607
      %v610 = vrot.slane %v608, 1
      %v611 = vrot.slane %v609, 1
      %v646 = vunpack.c.l.b16 %v573
      %v647 = vunpack.c.l.b16 %v574
      %v648 = vunpack.c.l.b16 %v575
      %v649 = vunpack.c.l.b16 %v576
      %v650 = vunpack.c.l.b16 %v577
      %v651 = vunpack.c.l.b16 %v578
      %v652 = vunpack.c.l.b16 %v579
      %v653 = vunpack.c.l.b16 %v580
      %v654 = vunpack.c.l.b16 %v581
      %v655 = vunpack.c.l.b16 %v582
      %v656 = vunpack.c.l.b16 %v583
      %v657 = vunpack.c.l.b16 %v584
      %v658 = vunpack.c.l.b16 %v585
      %v659 = vunpack.c.l.b16 %v586
      %v660 = vunpack.c.l.b16 %v587
      %v661 = vunpack.c.l.b16 %v588
      %v662 = vunpack.c.l.b16 %v589
      %v663 = vunpack.c.l.b16 %v590
      %v664 = vunpack.c.l.b16 %v591
      %v665 = vunpack.c.l.b16 %v592
      %v666 = vunpack.c.l.b16 %v593
      %v667 = vunpack.c.l.b16 %v594
      %v668 = vunpack.c.l.b16 %v595
      %v669 = vunpack.c.l.b16 %v596
      %v670 = vunpack.c.l.b16 %v597
      %v671 = vunpack.c.l.b16 %v598
      %v672 = vunpack.c.l.b16 %v599
      %v673 = vunpack.c.l.b16 %v600
      %v674 = vunpack.c.l.b16 %v601
      %v675 = vunpack.c.l.b16 %v602
      %v676 = vunpack.c.l.b16 %v603
      %v677 = vunpack.c.l.b16 %v604
      %v678 = vpack.c.b16 %v647, %v646
      %v679 = vpack.c.b16 %v649, %v648
      %v680 = vpack.c.b16 %v651, %v650
      %v681 = vpack.c.b16 %v653, %v652
      %v682 = vpack.c.b16 %v655, %v654
      %v683 = vpack.c.b16 %v657, %v656
      %v684 = vpack.c.b16 %v659, %v658
      %v685 = vpack.c.b16 %v661, %v660
      %v686 = vpack.c.b16 %v663, %v662
      %v687 = vpack.c.b16 %v665, %v664
      %v688 = vpack.c.b16 %v667, %v666
      %v689 = vpack.c.b16 %v669, %v668
      %v690 = vpack.c.b16 %v671, %v670
      %v691 = vpack.c.b16 %v673, %v672
      %v692 = vpack.c.b16 %v675, %v674
      %v693 = vpack.c.b16 %v677, %v676
      %710 = vmatprep.subr.bf16.mxu0 0
      %711 = vmatpush1.bf16.msra.mxu0 %v685
      %712 = vmatprep.subr.bf16.mxu0 0
      %713 = vmatpush1.bf16.msra.mxu0 %v684
      %714 = vmatprep.subr.bf16.mxu0 0
      %715 = vmatpush1.bf16.msra.mxu0 %v683
      %716 = vmatprep.subr.bf16.mxu0 0
      %717 = vmatpush1.bf16.msra.mxu0 %v682
      %718 = vmatprep.subr.bf16.mxu0 0
      %719 = vmatpush1.bf16.msra.mxu0 %v681
      %720 = vmatprep.subr.bf16.mxu0 0
      %721 = vmatpush1.bf16.msra.mxu0 %v680
      %722 = vmatprep.subr.bf16.mxu0 0
      %723 = vmatpush1.bf16.msra.mxu0 %v679
      %724 = vmatprep.subr.bf16.mxu0 0
      %725 = vmatpush1.bf16.msra.mxu0 %v678
      %726 = vmatprep.subr.bf16.mxu0 0
      %727 = vmatpush2.bf16.msra.mxu0 %v693
      %728 = vmatprep.subr.bf16.mxu0 0
      %729 = vmatpush2.bf16.msra.mxu0 %v692
      %730 = vmatprep.subr.bf16.mxu0 0
      %731 = vmatpush2.bf16.msra.mxu0 %v691
      %732 = vmatprep.subr.bf16.mxu0 0
      %733 = vmatpush2.bf16.msra.mxu0 %v690
      %734 = vmatprep.subr.bf16.mxu0 0
      %735 = vmatpush2.bf16.msra.mxu0 %v689
      %736 = vmatprep.subr.bf16.mxu0 0
      %737 = vmatpush2.bf16.msra.mxu0 %v688
      %738 = vmatprep.subr.bf16.mxu0 0
      %739 = vmatpush2.bf16.msra.mxu0 %v687
      %740 = vmatprep.subr.bf16.mxu0 0
      %741 = vmatpush2.bf16.msra.mxu0 %v686
      %742 = vmatprep.mubr.bf16.mxu0 %v611
      %743 = vmatmul.mubr.bf16.gmra.mxu0 %v610
      %v744 = vpop.f32.mrf.mxu0
      %v745 = vadd.f32 0.0, %v744
      %v746 = vpop.f32.mrf.mxu0
      %v747 = vpop.f32.mrf.mxu0
      %v748 = vpop.f32.mrf.mxu0
      %749 = vdwg.mxu0
      %v750 = vadd.f32 %v566, %v745
      %v751 = vld [vmem:[%s195] sm:$0x66]
      %s752 = scalar_lea.vmem %s1, 384
      %v753 = vld [vmem:[%s752] sm:$0xf]
      %v754 = vld [vmem:[%s752 + $0x4] sm:$0xf]
      %v755 = vld [vmem:[%s752 + $0x8] sm:$0xf]
      %v756 = vld [vmem:[%s752 + $0xc] sm:$0xf]
      %v757 = vld [vmem:[%s752 + $0x10] sm:$0xf]
      %v758 = vld [vmem:[%s752 + $0x14] sm:$0xf]
      %v759 = vld [vmem:[%s752 + $0x18] sm:$0xf]
      %v760 = vld [vmem:[%s752 + $0x1c] sm:$0xf]
      %v761 = vld [vmem:[%s752 + $0x20] sm:$0xf]
      %v762 = vld [vmem:[%s752 + $0x24] sm:$0xf]
      %v763 = vld [vmem:[%s752 + $0x28] sm:$0xf]
      %v764 = vld [vmem:[%s752 + $0x2c] sm:$0xf]
      %v765 = vld [vmem:[%s752 + $0x30] sm:$0xf]
      %v766 = vld [vmem:[%s752 + $0x34] sm:$0xf]
      %v767 = vld [vmem:[%s752 + $0x38] sm:$0xf]
      %v768 = vld [vmem:[%s752 + $0x3c] sm:$0xf]
      %v769 = vld [vmem:[%s752 + $0x40] sm:$0xf]
      %v770 = vld [vmem:[%s752 + $0x44] sm:$0xf]
      %v771 = vld [vmem:[%s752 + $0x48] sm:$0xf]
      %v772 = vld [vmem:[%s752 + $0x4c] sm:$0xf]
      %v773 = vld [vmem:[%s752 + $0x50] sm:$0xf]
      %v774 = vld [vmem:[%s752 + $0x54] sm:$0xf]
      %v775 = vld [vmem:[%s752 + $0x58] sm:$0xf]
      %v776 = vld [vmem:[%s752 + $0x5c] sm:$0xf]
      %v777 = vld [vmem:[%s752 + $0x60] sm:$0xf]
      %v778 = vld [vmem:[%s752 + $0x64] sm:$0xf]
      %v779 = vld [vmem:[%s752 + $0x68] sm:$0xf]
      %v780 = vld [vmem:[%s752 + $0x6c] sm:$0xf]
      %v781 = vld [vmem:[%s752 + $0x70] sm:$0xf]
      %v782 = vld [vmem:[%s752 + $0x74] sm:$0xf]
      %v783 = vld [vmem:[%s752 + $0x78] sm:$0xf]
      %v784 = vld [vmem:[%s752 + $0x7c] sm:$0xf]
      %v786 = vunpack.c.l.b16 %v751
      %v787 = vunpack.c.h.b16 %v751
      %v788 = vpack.c.b16 %v786, %v786
      %v789 = vpack.c.b16 %v787, %v787
      %v791 = vshrl.u32 %v788, 16
      %v793 = vrot.slane %v791, 1
      %v794 = vshll.u32 %v788, 16
      %v796 = vrot.slane %v794, 2
      %v797 = vor.u32 %v793, %v796
      %v799 = vshrl.u32 %v789, 16
      %v801 = vrot.slane %v799, 1
      %v802 = vshll.u32 %v789, 16
      %v804 = vrot.slane %v802, 2
      %v805 = vor.u32 %v801, %v804
      %v840 = vunpack.c.l.b16 %v753
      %v841 = vunpack.c.l.b16 %v754
      %v842 = vunpack.c.l.b16 %v755
      %v843 = vunpack.c.l.b16 %v756
      %v844 = vunpack.c.l.b16 %v757
      %v845 = vunpack.c.l.b16 %v758
      %v846 = vunpack.c.l.b16 %v759
      %v847 = vunpack.c.l.b16 %v760
      %v848 = vunpack.c.l.b16 %v761
      %v849 = vunpack.c.l.b16 %v762
      %v850 = vunpack.c.l.b16 %v763
      %v851 = vunpack.c.l.b16 %v764
      %v852 = vunpack.c.l.b16 %v765
      %v853 = vunpack.c.l.b16 %v766
      %v854 = vunpack.c.l.b16 %v767
      %v855 = vunpack.c.l.b16 %v768
      %v856 = vunpack.c.l.b16 %v769
      %v857 = vunpack.c.l.b16 %v770
      %v858 = vunpack.c.l.b16 %v771
      %v859 = vunpack.c.l.b16 %v772
      %v860 = vunpack.c.l.b16 %v773
      %v861 = vunpack.c.l.b16 %v774
      %v862 = vunpack.c.l.b16 %v775
      %v863 = vunpack.c.l.b16 %v776
      %v864 = vunpack.c.l.b16 %v777
      %v865 = vunpack.c.l.b16 %v778
      %v866 = vunpack.c.l.b16 %v779
      %v867 = vunpack.c.l.b16 %v780
      %v868 = vunpack.c.l.b16 %v781
      %v869 = vunpack.c.l.b16 %v782
      %v870 = vunpack.c.l.b16 %v783
      %v871 = vunpack.c.l.b16 %v784
      %v872 = vpack.c.b16 %v841, %v840
      %v873 = vpack.c.b16 %v843, %v842
      %v874 = vpack.c.b16 %v845, %v844
      %v875 = vpack.c.b16 %v847, %v846
      %v876 = vpack.c.b16 %v849, %v848
      %v877 = vpack.c.b16 %v851, %v850
      %v878 = vpack.c.b16 %v853, %v852
      %v879 = vpack.c.b16 %v855, %v854
      %v880 = vpack.c.b16 %v857, %v856
      %v881 = vpack.c.b16 %v859, %v858
      %v882 = vpack.c.b16 %v861, %v860
      %v883 = vpack.c.b16 %v863, %v862
      %v884 = vpack.c.b16 %v865, %v864
      %v885 = vpack.c.b16 %v867, %v866
      %v886 = vpack.c.b16 %v869, %v868
      %v887 = vpack.c.b16 %v871, %v870
      %904 = vmatprep.subr.bf16.mxu0 0
      %905 = vmatpush1.bf16.msra.mxu0 %v879
      %906 = vmatprep.subr.bf16.mxu0 0
      %907 = vmatpush1.bf16.msra.mxu0 %v878
      %908 = vmatprep.subr.bf16.mxu0 0
      %909 = vmatpush1.bf16.msra.mxu0 %v877
      %910 = vmatprep.subr.bf16.mxu0 0
      %911 = vmatpush1.bf16.msra.mxu0 %v876
      %912 = vmatprep.subr.bf16.mxu0 0
      %913 = vmatpush1.bf16.msra.mxu0 %v875
      %914 = vmatprep.subr.bf16.mxu0 0
      %915 = vmatpush1.bf16.msra.mxu0 %v874
      %916 = vmatprep.subr.bf16.mxu0 0
      %917 = vmatpush1.bf16.msra.mxu0 %v873
      %918 = vmatprep.subr.bf16.mxu0 0
      %919 = vmatpush1.bf16.msra.mxu0 %v872
      %920 = vmatprep.subr.bf16.mxu0 0
      %921 = vmatpush2.bf16.msra.mxu0 %v887
      %922 = vmatprep.subr.bf16.mxu0 0
      %923 = vmatpush2.bf16.msra.mxu0 %v886
      %924 = vmatprep.subr.bf16.mxu0 0
      %925 = vmatpush2.bf16.msra.mxu0 %v885
      %926 = vmatprep.subr.bf16.mxu0 0
      %927 = vmatpush2.bf16.msra.mxu0 %v884
      %928 = vmatprep.subr.bf16.mxu0 0
      %929 = vmatpush2.bf16.msra.mxu0 %v883
      %930 = vmatprep.subr.bf16.mxu0 0
      %931 = vmatpush2.bf16.msra.mxu0 %v882
      %932 = vmatprep.subr.bf16.mxu0 0
      %933 = vmatpush2.bf16.msra.mxu0 %v881
      %934 = vmatprep.subr.bf16.mxu0 0
      %935 = vmatpush2.bf16.msra.mxu0 %v880
      %936 = vmatprep.mubr.bf16.mxu0 %v805
      %937 = vmatmul.mubr.bf16.gmra.mxu0 %v797
      %v938 = vpop.f32.mrf.mxu0
      %v939 = vadd.f32 0.0, %v938
      %v940 = vpop.f32.mrf.mxu0
      %v941 = vpop.f32.mrf.mxu0
      %v942 = vpop.f32.mrf.mxu0
      %943 = vdwg.mxu0
      %v944 = vadd.f32 %v750, %v939
      %v945 = vld [vmem:[%s2] sm:$0x1]
      %v947 = vlaneseq
      %v948 = vshrl.u32 %v947, 7
      %v949 = vsub.s32 0, %v948
      %v950 = vrot.slane %v945, %v949
      %v952 = vadd.f32 %v944, %v950
      %953 = vst [vmem:[%s202] sm:$0x3] %v952
      %p954 = scmp.lt.s32.totalorder %s18, 1
      %s955 = scalar_select %p954, %s18, 1
      %p956 = scmp.lt.s32.totalorder %s19, 0
      %s957 = scalar_select %p956, %s19, 0
      %s958 = sadd.s32 %s957, %s955
      %s959 = smul.addr %s958, 2
      %s960 = scalar_lea.vmem %s3, %s959
      // Predicated region
      $region33: #{fc_discriminator_forward.9} parent=31 // pred_check
        %p961 = pneg %p116
      $region34: #{fc_discriminator_forward.9} parent=31 // pred_check_branch
        %963 = sbr.rel (%p961) target = $region36
      $region35: #{fc_discriminator_forward.9} parent=31 // pred_region
        _
      $region36: #{fc_discriminator_forward.9} parent=31 // pred_fallthru
        _
    $region32: #{fc_discriminator_forward.9} parent=5 // pred_fallthru
      _
    %p964 = scmp.le.s32.totalorder 2, %s9
    // Predicated region
    $region37: #{fc_discriminator_forward.9} parent=5 // pred_check
      %p965 = pneg %p964
    $region38: #{fc_discriminator_forward.9} parent=5 // pred_check_branch
      %967 = sbr.rel (%p965) target = $region40
    $region39: #{fc_discriminator_forward.9} parent=5 // pred_region
      %s968 = ssub.s32 %s9, 2
      // Predicated region
      $region41: #{fc_discriminator_forward.9} parent=39 // pred_check
        %p969 = pneg %p122
      $region42: #{fc_discriminator_forward.9} parent=39 // pred_check_branch
        %971 = sbr.rel (%p969) target = $region44
      $region43: #{fc_discriminator_forward.9} parent=39 // pred_region
        %p972 = scmp.lt.s32.totalorder %s20, 1
        %s973 = scalar_select %p972, %s20, 1
        %p974 = scmp.lt.s32.totalorder %s21, 0
        %s975 = scalar_select %p974, %s21, 0
        %s976 = sadd.s32 %s975, %s973
        %s977 = smul.addr %s976, 2
        %s978 = scalar_lea.vmem %s3, %s977
      $region44: #{fc_discriminator_forward.9} parent=39 // pred_fallthru
        _
    $region40: #{fc_discriminator_forward.9} parent=5 // pred_fallthru
      _
  $region6: #{fc_discriminator_forward.9} parent=0 // loop_footer
    %s13 = sadd.s32 1, %s9
  $region7: #{fc_discriminator_forward.9} parent=0 // loop_footer_branch
    %8 = sbr.rel target = $region3
  $region8: #{fc_discriminator_forward.9} parent=0 // loop_exit
    _

</llo_original>
